<compile_context>
chip_gen: v7x
topology: tpu7x:2x2x1
jax: 0.10.0
libtpu: 0.0.40
codegen_flags: <defaults>
</compile_context>

<pallas_src>
import functools

import jax
import jax.numpy as jnp
from jax.experimental import pallas as pl
from jax.experimental.pallas import tpu as pltpu

BN_EPS = 1e-5
_PER_TAP_MIN_C = 32          # channel count above which per-tap MXU accumulation is used


# ---------------------------------------------------------------------------
# in-kernel helpers
# ---------------------------------------------------------------------------
def _zero_halo(pad_ref):
    """Zero only the 1-pixel halo ring of the persistent VMEM scratch.

    The interior is fully overwritten every branch, so re-zeroing the whole
    buffer each grid step is wasted store work.  Doing the (cheap) ring every
    step stays correct under megacore grid sharding (no program_id==0 guard)."""
    tn, hp, wp, c = pad_ref.shape
    dt = pad_ref.dtype
    pad_ref[:, 0:1, :, :] = jnp.zeros((tn, 1, wp, c), dt)
    pad_ref[:, hp - 1:hp, :, :] = jnp.zeros((tn, 1, wp, c), dt)
    pad_ref[:, :, 0:1, :] = jnp.zeros((tn, hp, 1, c), dt)
    pad_ref[:, :, wp - 1:wp, :] = jnp.zeros((tn, hp, 1, c), dt)


def _conv3x3(pad_ref, w, out_h, out_w, stride):
    """3x3 'same' conv reading a 1-px zero-halo'd activation held in VMEM scratch.

    pad_ref : (TN, Hin+2, Win+2, C) scratch (bf16 for stride 1, f32 for stride 2).
    w       : (9*C, Cout) bf16 value, rows ordered (kh, kw, ci), BN scale pre-folded.
    Returns   (TN, out_h, out_w, Cout) float32 (MXU accumulation).
    """
    tn, hp, wp, c = pad_ref.shape
    cout = w.shape[-1]
    m = tn * out_h * out_w

    if stride == 1:
        def tap(kh, kw):
            t = pad_ref[:, kh:kh + out_h, kw:kw + out_w, :]
            return t if t.dtype == jnp.bfloat16 else t.astype(jnp.bfloat16)
    else:  # stride == 2: hoist the stride out of the 9-tap loop -> 4 parity slabs
        slabs = {}
        for ph in range(2):
            for pw in range(2):
                nh = out_h + (1 if ph == 0 else 0)
                nw = out_w + (1 if pw == 0 else 0)
                s = pad_ref[:, pl.ds(ph, nh, stride=stride),
                            pl.ds(pw, nw, stride=stride), :]
                slabs[(ph, pw)] = s.astype(jnp.bfloat16)

        def tap(kh, kw):
            s = slabs[(kh % 2, kw % 2)]
            dh, dw = kh // 2, kw // 2
            return s[:, dh:dh + out_h, dw:dw + out_w, :]

    if c >= _PER_TAP_MIN_C:
        # realistic widths: 9 accumulating MXU matmuls, no im2col concat copies
        acc = None
        for kh in range(3):
            for kw in range(3):
                t2 = tap(kh, kw).reshape(m, c)
                wk = w[(kh * 3 + kw) * c:(kh * 3 + kw + 1) * c, :]
                d = jnp.dot(t2, wk, preferred_element_type=jnp.float32)
                acc = d if acc is None else acc + d
        y = acc
    else:
        # tiny widths: pack the 9 bf16 taps along lanes -> one wide-K matmul
        patch = jnp.concatenate([tap(kh, kw) for kh in range(3) for kw in range(3)],
                                axis=-1)
        y = jnp.dot(patch.reshape(m, 9 * c), w, preferred_element_type=jnp.float32)
    return y.reshape(tn, out_h, out_w, cout)


# ---------------------------------------------------------------------------
# fused unit kernel
# ---------------------------------------------------------------------------
def _shake_unit_kernel(x_ref, bn0s_ref, bn0b_ref, w1_ref, bn1b_ref, w2_ref,
                       obias_ref, *rest, stride, has_shortcut, out_h, out_w):
    i = 0
    wsc_ref = xsub_ref = None
    if has_shortcut:
        wsc_ref = rest[i]; i += 1
        if stride != 1:
            xsub_ref = rest[i]; i += 1
    o_ref, pad1_ref, pad2_ref = rest[i], rest[i + 1], rest[i + 2]

    tn, h, w, cin = x_ref.shape
    cout = o_ref.shape[-1]

    x_bf = x_ref[...]                          # bf16 tile: loaded from HBM once, reused
    x = x_bf.astype(jnp.float32)

    _zero_halo(pad1_ref)
    _zero_halo(pad2_ref)

    # ---- shortcut / residual.  All per-channel output biases (0.5*bn2_bias of both
    # branches + shortcut-BN bias) were folded into out_bias on the host. ------------
    if has_shortcut:
        xs = x_bf if stride == 1 else xsub_ref[...]       # bf16
        h0 = jnp.dot(xs.reshape(tn * out_h * out_w, cin), wsc_ref[...],
                     preferred_element_type=jnp.float32)
        h0 = h0.reshape(tn, out_h, out_w, cout)
    else:
        h0 = x                                            # identity (cin==cout, stride==1)
    acc = h0 + obias_ref[...]

    # ---- the two branches; eval-mode ShakeShake => acc += 0.5 * BN2(branch).
    # bn1/bn2 scales and the 0.5 factor are folded into w1/w2; only biases remain.
    for br in range(2):
        a = jnp.maximum(x * bn0s_ref[br] + bn0b_ref[br], 0.0)        # BN0 + ReLU (f32)
        pad1_ref[:, 1:h + 1, 1:w + 1, :] = a.astype(pad1_ref.dtype)
        c1 = _conv3x3(pad1_ref, w1_ref[br], out_h, out_w, stride)
        b = jnp.maximum(c1 + bn1b_ref[br], 0.0)                      # BN1 bias + ReLU
        pad2_ref[:, 1:out_h + 1, 1:out_w + 1, :] = b.astype(pad2_ref.dtype)
        acc = acc + _conv3x3(pad2_ref, w2_ref[br], out_h, out_w, 1)  # 0.5*BN2 folded

    o_ref[...] = acc.astype(o_ref.dtype)       # single output store, no RMW passes


# ---------------------------------------------------------------------------
# pallas_call wrapper
# ---------------------------------------------------------------------------
def _pick_tn(n, h, w, cin, out_h, out_w, cout, stride, budget=36 << 20):
    """Largest batch tile that divides n, keeps >=2 grid steps (v7x 2-TC sharding)
    and fits a conservative VMEM budget (v7x has only 64 MiB physical)."""
    pad1_b = (h + 2) * (w + 2) * cin * (4 if stride != 1 else 2)
    pad2_b = (out_h + 2) * (out_w + 2) * cout * 2
    io_b = 2 * (h * w * cin * 2 + out_h * out_w * cout * 2)          # dbl-buffered bf16 tiles
    live_b = 4 * (h * w * cin + out_h * out_w * (9 * cin + 3 * cout))  # f32 temps (rough)
    per_img = pad1_b + pad2_b + io_b + live_b
    tn = 1
    for cand in range(1, n + 1):
        if n % cand:
            continue
        if n >= 2 and n // cand < 2:     # keep the grid shardable across 2 TensorCores
            continue
        if cand * per_img > budget:
            continue
        tn = cand
    return tn


def shake_unit_pallas(x_nhwc, p, *, stride, equal_io):
    assert stride in (1, 2)
    x = x_nhwc.astype(jnp.bfloat16)
    n, h, w, cin = x.shape
    cout = p["w1"].shape[-1]
    out_h = (h - 1) // stride + 1
    out_w = (w - 1) // stride + 1
    has_shortcut = not equal_io
    if equal_io:
        assert cin == cout and stride == 1
    assert ("short_w" in p) == has_shortcut

    tn = _pick_tn(n, h, w, cin, out_h, out_w, cout, stride)
    grid = (n // tn,)

    def resident(arr):                   # weights / BN params: same block every step
        return pl.BlockSpec(arr.shape, lambda i, nd=arr.ndim: (0,) * nd)

    param_arrays = [p["bn0_scale"], p["bn0_bias"], p["w1"], p["bn1_bias"],
                    p["w2"], p["out_bias"]]
    if has_shortcut:
        param_arrays.append(p["short_w"])

    in_specs = [pl.BlockSpec((tn, h, w, cin), lambda i: (i, 0, 0, 0))]
    in_specs += [resident(a) for a in param_arrays]
    operands = [x] + param_arrays

    if has_shortcut and stride != 1:
        # tiny host-side subsample for the projection shortcut: avoids strided
        # bf16 loads on the packed sublane dim inside the kernel.
        xsub = x[:, ::stride, ::stride, :]
        in_specs.append(pl.BlockSpec((tn, out_h, out_w, cin), lambda i: (i, 0, 0, 0)))
        operands.append(xsub)

    pad1_dtype = jnp.bfloat16 if stride == 1 else jnp.float32

    kernel = functools.partial(_shake_unit_kernel, stride=stride,
                               has_shortcut=has_shortcut, out_h=out_h, out_w=out_w)

    return pl.pallas_call(
        kernel,
        grid=grid,
        in_specs=in_specs,
        out_specs=pl.BlockSpec((tn, out_h, out_w, cout), lambda i: (i, 0, 0, 0)),
        out_shape=jax.ShapeDtypeStruct((n, out_h, out_w, cout), jnp.bfloat16),
        scratch_shapes=[pltpu.VMEM((tn, h + 2, w + 2, cin), pad1_dtype),
                        pltpu.VMEM((tn, out_h + 2, out_w + 2, cout), jnp.bfloat16)],
        compiler_params=pltpu.CompilerParams(
            dimension_semantics=("parallel",),        # megacore / 2-TC sharding
            vmem_limit_bytes=48 * 1024 * 1024),       # safe on v5e/v6e and v7x (64 MiB)
    )(*operands)


@functools.partial(jax.jit, static_argnames=("stride", "equal_io"))
def shake_basic_unit_forward_nhwc(x_nhwc, params, *, stride, equal_io):
    """NHWC / bf16 entry point: chain units with this to avoid per-unit transposes."""
    if equal_io and stride != 1:
        raise ValueError("identity shortcut requires stride == 1")
    return shake_unit_pallas(x_nhwc, params, stride=stride, equal_io=equal_io)


@functools.partial(jax.jit, static_argnames=("stride", "equal_io"))
def shake_basic_unit_forward(x_nchw, params, *, stride, equal_io):
    """PyTorch-layout (NCHW) wrapper around the NHWC kernel."""
    if equal_io and stride != 1:
        raise ValueError("identity shortcut requires stride == 1")
    x = jnp.transpose(x_nchw, (0, 2, 3, 1))
    y = shake_unit_pallas(x, params, stride=stride, equal_io=equal_io)
    return jnp.transpose(y, (0, 3, 1, 2))


# ---------------------------------------------------------------------------
# Parameter construction (eval-mode BN folded; BN scales folded into weights)
# ---------------------------------------------------------------------------
def _fold_bn(gamma, beta, mean, var):
    scale = gamma / jnp.sqrt(var + BN_EPS)
    return scale, beta - mean * scale


def _rand_bn(key, c):
    k1, k2, k3, k4 = jax.random.split(key, 4)
    gamma = 1.0 + 0.1 * jax.random.normal(k1, (c,), jnp.float32)
    beta = 0.1 * jax.random.normal(k2, (c,), jnp.float32)
    mean = 0.1 * jax.random.normal(k3, (c,), jnp.float32)
    var = 1.0 + 0.5 * jax.random.uniform(k4, (c,), jnp.float32)
    return _fold_bn(gamma, beta, mean, var)


def _rand_conv3x3(key, cin, cout):
    std = (2.0 / (9 * cin)) ** 0.5
    return std * jax.random.normal(key, (3, 3, cin, cout), jnp.float32)


def _fold_for_kernel(raw, cin, cout):
    br = raw["branches"]

    def pack_bn(vals, c):
        return jnp.stack(vals).reshape(2, 1, 1, 1, c)

    # rows ordered (kh, kw, ci) to match the kernel's tap packing; bf16 MXU operands.
    w1 = jnp.stack([(b["w1"].reshape(9 * cin, cout) * b["s1"][None, :]) for b in br]
                   ).astype(jnp.bfloat16)
    w2 = jnp.stack([(b["w2"].reshape(9 * cout, cout) * (0.5 * b["s2"])[None, :]) for b in br]
                   ).astype(jnp.bfloat16)
    out_bias = 0.5 * (br[0]["b2"] + br[1]["b2"])

    p = dict(
        bn0_scale=pack_bn([b["s0"] for b in br], cin),
        bn0_bias=pack_bn([b["b0"] for b in br], cin),
        w1=w1,
        bn1_bias=pack_bn([b["b1"] for b in br], cout),
        w2=w2,
    )
    if "wsc" in raw:
        p["short_w"] = (raw["wsc"] * raw["ss"][None, :]).astype(jnp.bfloat16)
        out_bias = out_bias + raw["sb"]
    p["out_bias"] = out_bias.reshape(1, 1, 1, cout)
    return p


def make_shake_unit_params(key, cin, cout):
    """Returns (raw_params_for_reference, folded_params_for_kernel)."""
    kb1, kb2, ksc = jax.random.split(key, 3)

    def branch(k):
        ks = jax.random.split(k, 5)
        s0, b0 = _rand_bn(ks[0], cin)
        w1 = _rand_conv3x3(ks[1], cin, cout)
        s1, b1 = _rand_bn(ks[2], cout)
        w2 = _rand_conv3x3(ks[3], cout, cout)
        s2, b2 = _rand_bn(ks[4], cout)
        return dict(s0=s0, b0=b0, w1=w1, s1=s1, b1=b1, w2=w2, s2=s2, b2=b2)

    raw = dict(branches=[branch(kb1), branch(kb2)])
    if cin != cout:
        kw_, kb_ = jax.random.split(ksc)
        raw["wsc"] = ((2.0 / cin) ** 0.5) * jax.random.normal(kw_, (cin, cout), jnp.float32)
        raw["ss"], raw["sb"] = _rand_bn(kb_, cout)
    return raw, _fold_for_kernel(raw, cin, cout)


# ---------------------------------------------------------------------------
# Pure-JAX (XLA conv) reference of the same eval-mode math, NHWC / f32
# ---------------------------------------------------------------------------
def _ref_unit(x_nhwc, raw, *, stride, equal_io):
    def conv3x3(x, w, s):
        return jax.lax.conv_general_dilated(
            x, w, window_strides=(s, s), padding=((1, 1), (1, 1)),
            dimension_numbers=("NHWC", "HWIO", "NHWC"))

    outs = []
    for b in raw["branches"]:
        a = jnp.maximum(x_nhwc * b["s0"] + b["b0"], 0.0)
        c1 = conv3x3(a, b["w1"], stride)
        act = jnp.maximum(c1 * b["s1"] + b["b1"], 0.0)
        c2 = conv3x3(act, b["w2"], 1)
        outs.append(c2 * b["s2"] + b["b2"])
    if equal_io:
        h0 = x_nhwc
    else:
        xs = x_nhwc[:, ::stride, ::stride, :]
        h0 = jnp.einsum("nhwc,cd->nhwd", xs, raw["wsc"]) * raw["ss"] + raw["sb"]
    return 0.5 * (outs[0] + outs[1]) + h0


def _check(y, x_in, raw, *, stride, equal_io):
    r = _ref_unit(x_in.astype(jnp.bfloat16).astype(jnp.float32), raw,
                  stride=stride, equal_io=equal_io)
    y32 = y.astype(jnp.float32)
    err = float(jnp.max(jnp.abs(y32 - r)))
    scale = 1.0 + float(jnp.max(jnp.abs(r)))
    assert err < 0.05 * scale, (err, scale)      # bf16 weights + bf16 activations
    assert bool(jnp.all(jnp.isfinite(y32)))


# ---------------------------------------------------------------------------
if __name__ == "__main__":
    key = jax.random.PRNGKey(0)
    kx, k1, k2, k3, k4 = jax.random.split(key, 5)

    # PyTorch-spec shapes: x = (N, C, H, W) = (2, 4, 16, 16); dropout unused by forward.
    N, C_IN, H, W = 2, 4, 16, 16
    C_OUT, STRIDE = 8, 2

    x_nchw = jax.random.normal(kx, (N, C_IN, H, W), jnp.float32)
    x_nhwc = jnp.transpose(x_nchw, (0, 2, 3, 1))

    # unit 1: projection shortcut (cin != cout), stride 2  -> narrow-channel conv path
    raw1, p1 = make_shake_unit_params(k1, C_IN, C_OUT)
    y1 = shake_basic_unit_forward_nhwc(x_nhwc, p1, stride=STRIDE, equal_io=False)
    # unit 2: identity shortcut, stride 1, chained in NHWC/bf16 (no transposes between units)
    raw2, p2 = make_shake_unit_params(k2, C_OUT, C_OUT)
    y2 = shake_basic_unit_forward_nhwc(y1, p2, stride=1, equal_io=True)
    jax.block_until_ready(y2)
    assert y1.shape == (N, H // STRIDE, W // STRIDE, C_OUT), y1.shape
    assert y2.shape == y1.shape, y2.shape

    # PyTorch-layout (NCHW) wrapper smoke test
    y1_nchw = shake_basic_unit_forward(x_nchw, p1, stride=STRIDE, equal_io=False)
    jax.block_until_ready(y1_nchw)
    assert y1_nchw.shape == (N, C_OUT, H // STRIDE, W // STRIDE), y1_nchw.shape

    # wider units exercise the per-tap accumulating-matmul conv path and both strides
    xw = jax.random.normal(k3, (2, 8, 8, 32), jnp.float32)
    raw3, p3 = make_shake_unit_params(k4, 32, 64)
    y3 = shake_basic_unit_forward_nhwc(xw, p3, stride=1, equal_io=False)
    y4 = shake_basic_unit_forward_nhwc(xw, p3, stride=2, equal_io=False)
    jax.block_until_ready((y3, y4))
    assert y3.shape == (2, 8, 8, 64) and y4.shape == (2, 4, 4, 64)

    # numerical checks vs the pure-JAX reference
    _check(y1, x_nhwc, raw1, stride=STRIDE, equal_io=False)
    _check(y2, y1, raw2, stride=1, equal_io=True)
    _check(jnp.transpose(y1_nchw, (0, 2, 3, 1)), x_nhwc, raw1, stride=STRIDE, equal_io=False)
    _check(y3, xw, raw3, stride=1, equal_io=False)
    _check(y4, xw, raw3, stride=2, equal_io=False)

    print("KERNEL_OK")
</pallas_src>

<mosaic_0001>
module attributes {stable_mosaic.version = 11 : i64} {
  func.func @_shake_unit_kernel(%arg0: i32, %arg1: memref<1x16x16x4xbf16, #tpu.memory_space<vmem>>, %arg2: memref<2x1x1x1x4xf32, #tpu.memory_space<vmem>>, %arg3: memref<2x1x1x1x4xf32, #tpu.memory_space<vmem>>, %arg4: memref<2x36x8xbf16, #tpu.memory_space<vmem>>, %arg5: memref<2x1x1x1x8xf32, #tpu.memory_space<vmem>>, %arg6: memref<2x72x8xbf16, #tpu.memory_space<vmem>>, %arg7: memref<1x1x1x8xf32, #tpu.memory_space<vmem>>, %arg8: memref<4x8xbf16, #tpu.memory_space<vmem>>, %arg9: memref<1x8x8x4xbf16, #tpu.memory_space<vmem>>, %arg10: memref<1x8x8x8xbf16, #tpu.memory_space<vmem>>, %arg11: memref<1x18x18x4xf32, #tpu.memory_space<vmem>>, %arg12: memref<1x10x10x8xbf16, #tpu.memory_space<vmem>>) attributes {dimension_semantics = [#tpu.dimension_semantics<parallel>], iteration_bounds = array<i64: 2>, scalar_prefetch = 0 : i64, scratch_operands = 2 : i64, tpu.core_type = #tpu.core_type<tc>, window_params = [{transform_indices = @transform_0, window_bounds = array<i64: 1, 16, 16, 4>}, {pipeline_mode = #tpu.pipeline_mode<synchronous>, transform_indices = @transform_1, window_bounds = array<i64: 2, 1, 1, 1, 4>}, {pipeline_mode = #tpu.pipeline_mode<synchronous>, transform_indices = @transform_2, window_bounds = array<i64: 2, 1, 1, 1, 4>}, {pipeline_mode = #tpu.pipeline_mode<synchronous>, transform_indices = @transform_3, window_bounds = array<i64: 2, 36, 8>}, {pipeline_mode = #tpu.pipeline_mode<synchronous>, transform_indices = @transform_4, window_bounds = array<i64: 2, 1, 1, 1, 8>}, {pipeline_mode = #tpu.pipeline_mode<synchronous>, transform_indices = @transform_5, window_bounds = array<i64: 2, 72, 8>}, {pipeline_mode = #tpu.pipeline_mode<synchronous>, transform_indices = @transform_6, window_bounds = array<i64: 1, 1, 1, 8>}, {pipeline_mode = #tpu.pipeline_mode<synchronous>, transform_indices = @transform_7, window_bounds = array<i64: 4, 8>}, {transform_indices = @transform_8, window_bounds = array<i64: 1, 8, 8, 4>}, {transform_indices = @transform_9, window_bounds = array<i64: 1, 8, 8, 8>}]} {
    %c0 = arith.constant 0 : index
    %c0_0 = arith.constant 0 : index
    %c0_1 = arith.constant 0 : index
    %c0_2 = arith.constant 0 : index
    %0 = vector.load %arg1[%c0, %c0_0, %c0_1, %c0_2] : memref<1x16x16x4xbf16, #tpu.memory_space<vmem>>, vector<1x16x16x4xbf16>
    %1 = arith.extf %0 : vector<1x16x16x4xbf16> to vector<1x16x16x4xf32>
    %cst = arith.constant 0.000000e+00 : f32
    %2 = vector.broadcast %cst : f32 to vector<1x1x18x4xf32>
    %c0_3 = arith.constant 0 : index
    %c0_4 = arith.constant 0 : index
    %c0_5 = arith.constant 0 : index
    %c0_6 = arith.constant 0 : index
    %3 = vector.load %arg11[%c0_3, %c0_4, %c0_5, %c0_6] : memref<1x18x18x4xf32, #tpu.memory_space<vmem>>, vector<1x1x18x4xf32>
    tpu.vector_store %arg11[%c0_3, %c0_4, %c0_5, %c0_6], %2 {strides = array<i32>} : memref<1x18x18x4xf32, #tpu.memory_space<vmem>>, vector<1x1x18x4xf32>,
    %cst_7 = arith.constant 0.000000e+00 : f32
    %4 = vector.broadcast %cst_7 : f32 to vector<1x1x18x4xf32>
    %c0_8 = arith.constant 0 : index
    %c17 = arith.constant 17 : index
    %c0_9 = arith.constant 0 : index
    %c0_10 = arith.constant 0 : index
    %5 = vector.load %arg11[%c0_8, %c17, %c0_9, %c0_10] : memref<1x18x18x4xf32, #tpu.memory_space<vmem>>, vector<1x1x18x4xf32>
    tpu.vector_store %arg11[%c0_8, %c17, %c0_9, %c0_10], %4 {strides = array<i32>} : memref<1x18x18x4xf32, #tpu.memory_space<vmem>>, vector<1x1x18x4xf32>,
    %cst_11 = arith.constant 0.000000e+00 : f32
    %6 = vector.broadcast %cst_11 : f32 to vector<1x18x1x4xf32>
    %c0_12 = arith.constant 0 : index
    %c0_13 = arith.constant 0 : index
    %c0_14 = arith.constant 0 : index
    %c0_15 = arith.constant 0 : index
    %7 = vector.load %arg11[%c0_12, %c0_13, %c0_14, %c0_15] : memref<1x18x18x4xf32, #tpu.memory_space<vmem>>, vector<1x18x1x4xf32>
    tpu.vector_store %arg11[%c0_12, %c0_13, %c0_14, %c0_15], %6 {strides = array<i32>} : memref<1x18x18x4xf32, #tpu.memory_space<vmem>>, vector<1x18x1x4xf32>,
    %cst_16 = arith.constant 0.000000e+00 : f32
    %8 = vector.broadcast %cst_16 : f32 to vector<1x18x1x4xf32>
    %c0_17 = arith.constant 0 : index
    %c0_18 = arith.constant 0 : index
    %c17_19 = arith.constant 17 : index
    %c0_20 = arith.constant 0 : index
    %9 = vector.load %arg11[%c0_17, %c0_18, %c17_19, %c0_20] : memref<1x18x18x4xf32, #tpu.memory_space<vmem>>, vector<1x18x1x4xf32>
    tpu.vector_store %arg11[%c0_17, %c0_18, %c17_19, %c0_20], %8 {strides = array<i32>} : memref<1x18x18x4xf32, #tpu.memory_space<vmem>>, vector<1x18x1x4xf32>,
    %cst_21 = arith.constant 0.000000e+00 : bf16
    %10 = vector.broadcast %cst_21 : bf16 to vector<1x1x10x8xbf16>
    %c0_22 = arith.constant 0 : index
    %c0_23 = arith.constant 0 : index
    %c0_24 = arith.constant 0 : index
    %c0_25 = arith.constant 0 : index
    %11 = vector.load %arg12[%c0_22, %c0_23, %c0_24, %c0_25] : memref<1x10x10x8xbf16, #tpu.memory_space<vmem>>, vector<1x1x10x8xbf16>
    tpu.vector_store %arg12[%c0_22, %c0_23, %c0_24, %c0_25], %10 {strides = array<i32>} : memref<1x10x10x8xbf16, #tpu.memory_space<vmem>>, vector<1x1x10x8xbf16>,
    %cst_26 = arith.constant 0.000000e+00 : bf16
    %12 = vector.broadcast %cst_26 : bf16 to vector<1x1x10x8xbf16>
    %c0_27 = arith.constant 0 : index
    %c9 = arith.constant 9 : index
    %c0_28 = arith.constant 0 : index
    %c0_29 = arith.constant 0 : index
    %13 = vector.load %arg12[%c0_27, %c9, %c0_28, %c0_29] : memref<1x10x10x8xbf16, #tpu.memory_space<vmem>>, vector<1x1x10x8xbf16>
    tpu.vector_store %arg12[%c0_27, %c9, %c0_28, %c0_29], %12 {strides = array<i32>} : memref<1x10x10x8xbf16, #tpu.memory_space<vmem>>, vector<1x1x10x8xbf16>,
    %cst_30 = arith.constant 0.000000e+00 : bf16
    %14 = vector.broadcast %cst_30 : bf16 to vector<1x10x1x8xbf16>
    %c0_31 = arith.constant 0 : index
    %c0_32 = arith.constant 0 : index
    %c0_33 = arith.constant 0 : index
    %c0_34 = arith.constant 0 : index
    %15 = vector.load %arg12[%c0_31, %c0_32, %c0_33, %c0_34] : memref<1x10x10x8xbf16, #tpu.memory_space<vmem>>, vector<1x10x1x8xbf16>
    tpu.vector_store %arg12[%c0_31, %c0_32, %c0_33, %c0_34], %14 {strides = array<i32>} : memref<1x10x10x8xbf16, #tpu.memory_space<vmem>>, vector<1x10x1x8xbf16>,
    %cst_35 = arith.constant 0.000000e+00 : bf16
    %16 = vector.broadcast %cst_35 : bf16 to vector<1x10x1x8xbf16>
    %c0_36 = arith.constant 0 : index
    %c0_37 = arith.constant 0 : index
    %c9_38 = arith.constant 9 : index
    %c0_39 = arith.constant 0 : index
    %17 = vector.load %arg12[%c0_36, %c0_37, %c9_38, %c0_39] : memref<1x10x10x8xbf16, #tpu.memory_space<vmem>>, vector<1x10x1x8xbf16>
    tpu.vector_store %arg12[%c0_36, %c0_37, %c9_38, %c0_39], %16 {strides = array<i32>} : memref<1x10x10x8xbf16, #tpu.memory_space<vmem>>, vector<1x10x1x8xbf16>,
    %c0_40 = arith.constant 0 : index
    %c0_41 = arith.constant 0 : index
    %c0_42 = arith.constant 0 : index
    %c0_43 = arith.constant 0 : index
    %18 = vector.load %arg9[%c0_40, %c0_41, %c0_42, %c0_43] : memref<1x8x8x4xbf16, #tpu.memory_space<vmem>>, vector<1x8x8x4xbf16>
    %19 = vector.shape_cast %18 : vector<1x8x8x4xbf16> to vector<64x4xbf16>
    %c0_44 = arith.constant 0 : index
    %c0_45 = arith.constant 0 : index
    %20 = vector.load %arg8[%c0_44, %c0_45] : memref<4x8xbf16, #tpu.memory_space<vmem>>, vector<4x8xbf16>
    %cst_46 = arith.constant dense<0.000000e+00> : vector<64x8xf32>
    %21 = tpu.matmul %19, %20, %cst_46 {dimension_numbers = #tpu.dot_dimension_numbers<[1], [0], [0], [1], [0, 0, 1, 1], [], []>} : vector<64x4xbf16>, vector<4x8xbf16>, vector<64x8xf32> -> vector<64x8xf32>
    %22 = vector.shape_cast %21 : vector<64x8xf32> to vector<1x8x8x8xf32>
    %c0_47 = arith.constant 0 : index
    %c0_48 = arith.constant 0 : index
    %c0_49 = arith.constant 0 : index
    %c0_50 = arith.constant 0 : index
    %23 = vector.load %arg7[%c0_47, %c0_48, %c0_49, %c0_50] : memref<1x1x1x8xf32, #tpu.memory_space<vmem>>, vector<1x1x1x8xf32>
    %24 = vector.broadcast %23 : vector<1x1x1x8xf32> to vector<1x8x8x8xf32>
    %25 = arith.addf %22, %24 : vector<1x8x8x8xf32>
    %c0_51 = arith.constant 0 : index
    %c0_52 = arith.constant 0 : index
    %c0_53 = arith.constant 0 : index
    %c0_54 = arith.constant 0 : index
    %c0_55 = arith.constant 0 : index
    %26 = vector.load %arg2[%c0_51, %c0_52, %c0_53, %c0_54, %c0_55] : memref<2x1x1x1x4xf32, #tpu.memory_space<vmem>>, vector<1x1x1x1x4xf32>
    %27 = vector.shape_cast %26 : vector<1x1x1x1x4xf32> to vector<1x1x1x4xf32>
    %28 = vector.broadcast %27 : vector<1x1x1x4xf32> to vector<1x16x16x4xf32>
    %29 = arith.mulf %1, %28 : vector<1x16x16x4xf32>
    %c0_56 = arith.constant 0 : index
    %c0_57 = arith.constant 0 : index
    %c0_58 = arith.constant 0 : index
    %c0_59 = arith.constant 0 : index
    %c0_60 = arith.constant 0 : index
    %30 = vector.load %arg3[%c0_56, %c0_57, %c0_58, %c0_59, %c0_60] : memref<2x1x1x1x4xf32, #tpu.memory_space<vmem>>, vector<1x1x1x1x4xf32>
    %31 = vector.shape_cast %30 : vector<1x1x1x1x4xf32> to vector<1x1x1x4xf32>
    %32 = vector.broadcast %31 : vector<1x1x1x4xf32> to vector<1x16x16x4xf32>
    %33 = arith.addf %29, %32 : vector<1x16x16x4xf32>
    %cst_61 = arith.constant 0.000000e+00 : f32
    %34 = vector.broadcast %cst_61 : f32 to vector<1x16x16x4xf32>
    %35 = arith.maximumf %33, %34 : vector<1x16x16x4xf32>
    %c0_62 = arith.constant 0 : index
    %c1 = arith.constant 1 : index
    %c1_63 = arith.constant 1 : index
    %c0_64 = arith.constant 0 : index
    %36 = vector.load %arg11[%c0_62, %c1, %c1_63, %c0_64] : memref<1x18x18x4xf32, #tpu.memory_space<vmem>>, vector<1x16x16x4xf32>
    tpu.vector_store %arg11[%c0_62, %c1, %c1_63, %c0_64], %35 {strides = array<i32>} : memref<1x18x18x4xf32, #tpu.memory_space<vmem>>, vector<1x16x16x4xf32>,
    %c0_65 = arith.constant 0 : index
    %c0_66 = arith.constant 0 : index
    %c0_67 = arith.constant 0 : index
    %37 = vector.load %arg4[%c0_65, %c0_66, %c0_67] : memref<2x36x8xbf16, #tpu.memory_space<vmem>>, vector<1x36x8xbf16>
    %38 = vector.shape_cast %37 : vector<1x36x8xbf16> to vector<36x8xbf16>
    %c0_68 = arith.constant 0 : index
    %c0_69 = arith.constant 0 : index
    %c0_70 = arith.constant 0 : index
    %c0_71 = arith.constant 0 : index
    %39 = tpu.strided_load %arg11[%c0_68, %c0_69, %c0_70, %c0_71] {strides = array<i32: 1, 2, 2, 1>} : memref<1x18x18x4xf32, #tpu.memory_space<vmem>>, vector<1x9x9x4xf32>
    %40 = arith.truncf %39 : vector<1x9x9x4xf32> to vector<1x9x9x4xbf16>
    %c0_72 = arith.constant 0 : index
    %c0_73 = arith.constant 0 : index
    %c1_74 = arith.constant 1 : index
    %c0_75 = arith.constant 0 : index
    %41 = tpu.strided_load %arg11[%c0_72, %c0_73, %c1_74, %c0_75] {strides = array<i32: 1, 2, 2, 1>} : memref<1x18x18x4xf32, #tpu.memory_space<vmem>>, vector<1x9x8x4xf32>
    %42 = arith.truncf %41 : vector<1x9x8x4xf32> to vector<1x9x8x4xbf16>
    %c0_76 = arith.constant 0 : index
    %c1_77 = arith.constant 1 : index
    %c0_78 = arith.constant 0 : index
    %c0_79 = arith.constant 0 : index
    %43 = tpu.strided_load %arg11[%c0_76, %c1_77, %c0_78, %c0_79] {strides = array<i32: 1, 2, 2, 1>} : memref<1x18x18x4xf32, #tpu.memory_space<vmem>>, vector<1x8x9x4xf32>
    %44 = arith.truncf %43 : vector<1x8x9x4xf32> to vector<1x8x9x4xbf16>
    %c0_80 = arith.constant 0 : index
    %c1_81 = arith.constant 1 : index
    %c1_82 = arith.constant 1 : index
    %c0_83 = arith.constant 0 : index
    %45 = tpu.strided_load %arg11[%c0_80, %c1_81, %c1_82, %c0_83] {strides = array<i32: 1, 2, 2, 1>} : memref<1x18x18x4xf32, #tpu.memory_space<vmem>>, vector<1x8x8x4xf32>
    %46 = arith.truncf %45 : vector<1x8x8x4xf32> to vector<1x8x8x4xbf16>
    %47 = vector.extract_strided_slice %40 {offsets = [0, 0, 0, 0], sizes = [1, 8, 8, 4], strides = [1, 1, 1, 1]} : vector<1x9x9x4xbf16> to vector<1x8x8x4xbf16>
    %48 = vector.extract_strided_slice %42 {offsets = [0, 0, 0, 0], sizes = [1, 8, 8, 4], strides = [1, 1, 1, 1]} : vector<1x9x8x4xbf16> to vector<1x8x8x4xbf16>
    %49 = vector.extract_strided_slice %40 {offsets = [0, 0, 1, 0], sizes = [1, 8, 8, 4], strides = [1, 1, 1, 1]} : vector<1x9x9x4xbf16> to vector<1x8x8x4xbf16>
    %50 = vector.extract_strided_slice %44 {offsets = [0, 0, 0, 0], sizes = [1, 8, 8, 4], strides = [1, 1, 1, 1]} : vector<1x8x9x4xbf16> to vector<1x8x8x4xbf16>
    %51 = vector.extract_strided_slice %44 {offsets = [0, 0, 1, 0], sizes = [1, 8, 8, 4], strides = [1, 1, 1, 1]} : vector<1x8x9x4xbf16> to vector<1x8x8x4xbf16>
    %52 = vector.extract_strided_slice %40 {offsets = [0, 1, 0, 0], sizes = [1, 8, 8, 4], strides = [1, 1, 1, 1]} : vector<1x9x9x4xbf16> to vector<1x8x8x4xbf16>
    %53 = vector.extract_strided_slice %42 {offsets = [0, 1, 0, 0], sizes = [1, 8, 8, 4], strides = [1, 1, 1, 1]} : vector<1x9x8x4xbf16> to vector<1x8x8x4xbf16>
    %54 = vector.extract_strided_slice %40 {offsets = [0, 1, 1, 0], sizes = [1, 8, 8, 4], strides = [1, 1, 1, 1]} : vector<1x9x9x4xbf16> to vector<1x8x8x4xbf16>
    %55 = tpu.concatenate %47, %48, %49, %50, %46, %51, %52, %53, %54 in 3 : vector<1x8x8x4xbf16>, vector<1x8x8x4xbf16>, vector<1x8x8x4xbf16>, vector<1x8x8x4xbf16>, vector<1x8x8x4xbf16>, vector<1x8x8x4xbf16>, vector<1x8x8x4xbf16>, vector<1x8x8x4xbf16>, vector<1x8x8x4xbf16> -> vector<1x8x8x36xbf16>
    %56 = vector.shape_cast %55 : vector<1x8x8x36xbf16> to vector<64x36xbf16>
    %cst_84 = arith.constant dense<0.000000e+00> : vector<64x8xf32>
    %57 = tpu.matmul %56, %38, %cst_84 {dimension_numbers = #tpu.dot_dimension_numbers<[1], [0], [0], [1], [0, 0, 1, 1], [], []>} : vector<64x36xbf16>, vector<36x8xbf16>, vector<64x8xf32> -> vector<64x8xf32>
    %58 = vector.shape_cast %57 : vector<64x8xf32> to vector<1x8x8x8xf32>
    %c0_85 = arith.constant 0 : index
    %c0_86 = arith.constant 0 : index
    %c0_87 = arith.constant 0 : index
    %c0_88 = arith.constant 0 : index
    %c0_89 = arith.constant 0 : index
    %59 = vector.load %arg5[%c0_85, %c0_86, %c0_87, %c0_88, %c0_89] : memref<2x1x1x1x8xf32, #tpu.memory_space<vmem>>, vector<1x1x1x1x8xf32>
    %60 = vector.shape_cast %59 : vector<1x1x1x1x8xf32> to vector<1x1x1x8xf32>
    %61 = vector.broadcast %60 : vector<1x1x1x8xf32> to vector<1x8x8x8xf32>
    %62 = arith.addf %58, %61 : vector<1x8x8x8xf32>
    %cst_90 = arith.constant 0.000000e+00 : f32
    %63 = vector.broadcast %cst_90 : f32 to vector<1x8x8x8xf32>
    %64 = arith.maximumf %62, %63 : vector<1x8x8x8xf32>
    %65 = arith.truncf %64 : vector<1x8x8x8xf32> to vector<1x8x8x8xbf16>
    %c0_91 = arith.constant 0 : index
    %c1_92 = arith.constant 1 : index
    %c1_93 = arith.constant 1 : index
    %c0_94 = arith.constant 0 : index
    %66 = vector.load %arg12[%c0_91, %c1_92, %c1_93, %c0_94] : memref<1x10x10x8xbf16, #tpu.memory_space<vmem>>, vector<1x8x8x8xbf16>
    tpu.vector_store %arg12[%c0_91, %c1_92, %c1_93, %c0_94], %65 {strides = array<i32>} : memref<1x10x10x8xbf16, #tpu.memory_space<vmem>>, vector<1x8x8x8xbf16>,
    %c0_95 = arith.constant 0 : index
    %c0_96 = arith.constant 0 : index
    %c0_97 = arith.constant 0 : index
    %67 = vector.load %arg6[%c0_95, %c0_96, %c0_97] : memref<2x72x8xbf16, #tpu.memory_space<vmem>>, vector<1x72x8xbf16>
    %68 = vector.shape_cast %67 : vector<1x72x8xbf16> to vector<72x8xbf16>
    %c0_98 = arith.constant 0 : index
    %c0_99 = arith.constant 0 : index
    %c0_100 = arith.constant 0 : index
    %c0_101 = arith.constant 0 : index
    %69 = vector.load %arg12[%c0_98, %c0_99, %c0_100, %c0_101] : memref<1x10x10x8xbf16, #tpu.memory_space<vmem>>, vector<1x8x8x8xbf16>
    %c0_102 = arith.constant 0 : index
    %c0_103 = arith.constant 0 : index
    %c1_104 = arith.constant 1 : index
    %c0_105 = arith.constant 0 : index
    %70 = vector.load %arg12[%c0_102, %c0_103, %c1_104, %c0_105] : memref<1x10x10x8xbf16, #tpu.memory_space<vmem>>, vector<1x8x8x8xbf16>
    %c0_106 = arith.constant 0 : index
    %c0_107 = arith.constant 0 : index
    %c2 = arith.constant 2 : index
    %c0_108 = arith.constant 0 : index
    %71 = vector.load %arg12[%c0_106, %c0_107, %c2, %c0_108] : memref<1x10x10x8xbf16, #tpu.memory_space<vmem>>, vector<1x8x8x8xbf16>
    %c0_109 = arith.constant 0 : index
    %c1_110 = arith.constant 1 : index
    %c0_111 = arith.constant 0 : index
    %c0_112 = arith.constant 0 : index
    %72 = vector.load %arg12[%c0_109, %c1_110, %c0_111, %c0_112] : memref<1x10x10x8xbf16, #tpu.memory_space<vmem>>, vector<1x8x8x8xbf16>
    %c0_113 = arith.constant 0 : index
    %c1_114 = arith.constant 1 : index
    %c1_115 = arith.constant 1 : index
    %c0_116 = arith.constant 0 : index
    %73 = vector.load %arg12[%c0_113, %c1_114, %c1_115, %c0_116] : memref<1x10x10x8xbf16, #tpu.memory_space<vmem>>, vector<1x8x8x8xbf16>
    %c0_117 = arith.constant 0 : index
    %c1_118 = arith.constant 1 : index
    %c2_119 = arith.constant 2 : index
    %c0_120 = arith.constant 0 : index
    %74 = vector.load %arg12[%c0_117, %c1_118, %c2_119, %c0_120] : memref<1x10x10x8xbf16, #tpu.memory_space<vmem>>, vector<1x8x8x8xbf16>
    %c0_121 = arith.constant 0 : index
    %c2_122 = arith.constant 2 : index
    %c0_123 = arith.constant 0 : index
    %c0_124 = arith.constant 0 : index
    %75 = vector.load %arg12[%c0_121, %c2_122, %c0_123, %c0_124] : memref<1x10x10x8xbf16, #tpu.memory_space<vmem>>, vector<1x8x8x8xbf16>
    %c0_125 = arith.constant 0 : index
    %c2_126 = arith.constant 2 : index
    %c1_127 = arith.constant 1 : index
    %c0_128 = arith.constant 0 : index
    %76 = vector.load %arg12[%c0_125, %c2_126, %c1_127, %c0_128] : memref<1x10x10x8xbf16, #tpu.memory_space<vmem>>, vector<1x8x8x8xbf16>
    %c0_129 = arith.constant 0 : index
    %c2_130 = arith.constant 2 : index
    %c2_131 = arith.constant 2 : index
    %c0_132 = arith.constant 0 : index
    %77 = vector.load %arg12[%c0_129, %c2_130, %c2_131, %c0_132] : memref<1x10x10x8xbf16, #tpu.memory_space<vmem>>, vector<1x8x8x8xbf16>
    %78 = tpu.concatenate %69, %70, %71, %72, %73, %74, %75, %76, %77 in 3 : vector<1x8x8x8xbf16>, vector<1x8x8x8xbf16>, vector<1x8x8x8xbf16>, vector<1x8x8x8xbf16>, vector<1x8x8x8xbf16>, vector<1x8x8x8xbf16>, vector<1x8x8x8xbf16>, vector<1x8x8x8xbf16>, vector<1x8x8x8xbf16> -> vector<1x8x8x72xbf16>
    %79 = vector.shape_cast %78 : vector<1x8x8x72xbf16> to vector<64x72xbf16>
    %cst_133 = arith.constant dense<0.000000e+00> : vector<64x8xf32>
    %80 = tpu.matmul %79, %68, %cst_133 {dimension_numbers = #tpu.dot_dimension_numbers<[1], [0], [0], [1], [0, 0, 1, 1], [], []>} : vector<64x72xbf16>, vector<72x8xbf16>, vector<64x8xf32> -> vector<64x8xf32>
    %81 = vector.shape_cast %80 : vector<64x8xf32> to vector<1x8x8x8xf32>
    %82 = arith.addf %25, %81 : vector<1x8x8x8xf32>
    %c1_134 = arith.constant 1 : index
    %c0_135 = arith.constant 0 : index
    %c0_136 = arith.constant 0 : index
    %c0_137 = arith.constant 0 : index
    %c0_138 = arith.constant 0 : index
    %83 = vector.load %arg2[%c1_134, %c0_135, %c0_136, %c0_137, %c0_138] : memref<2x1x1x1x4xf32, #tpu.memory_space<vmem>>, vector<1x1x1x1x4xf32>
    %84 = vector.shape_cast %83 : vector<1x1x1x1x4xf32> to vector<1x1x1x4xf32>
    %85 = vector.broadcast %84 : vector<1x1x1x4xf32> to vector<1x16x16x4xf32>
    %86 = arith.mulf %1, %85 : vector<1x16x16x4xf32>
    %c1_139 = arith.constant 1 : index
    %c0_140 = arith.constant 0 : index
    %c0_141 = arith.constant 0 : index
    %c0_142 = arith.constant 0 : index
    %c0_143 = arith.constant 0 : index
    %87 = vector.load %arg3[%c1_139, %c0_140, %c0_141, %c0_142, %c0_143] : memref<2x1x1x1x4xf32, #tpu.memory_space<vmem>>, vector<1x1x1x1x4xf32>
    %88 = vector.shape_cast %87 : vector<1x1x1x1x4xf32> to vector<1x1x1x4xf32>
    %89 = vector.broadcast %88 : vector<1x1x1x4xf32> to vector<1x16x16x4xf32>
    %90 = arith.addf %86, %89 : vector<1x16x16x4xf32>
    %cst_144 = arith.constant 0.000000e+00 : f32
    %91 = vector.broadcast %cst_144 : f32 to vector<1x16x16x4xf32>
    %92 = arith.maximumf %90, %91 : vector<1x16x16x4xf32>
    %c0_145 = arith.constant 0 : index
    %c1_146 = arith.constant 1 : index
    %c1_147 = arith.constant 1 : index
    %c0_148 = arith.constant 0 : index
    %93 = vector.load %arg11[%c0_145, %c1_146, %c1_147, %c0_148] : memref<1x18x18x4xf32, #tpu.memory_space<vmem>>, vector<1x16x16x4xf32>
    tpu.vector_store %arg11[%c0_145, %c1_146, %c1_147, %c0_148], %92 {strides = array<i32>} : memref<1x18x18x4xf32, #tpu.memory_space<vmem>>, vector<1x16x16x4xf32>,
    %c1_149 = arith.constant 1 : index
    %c0_150 = arith.constant 0 : index
    %c0_151 = arith.constant 0 : index
    %94 = vector.load %arg4[%c1_149, %c0_150, %c0_151] : memref<2x36x8xbf16, #tpu.memory_space<vmem>>, vector<1x36x8xbf16>
    %95 = vector.shape_cast %94 : vector<1x36x8xbf16> to vector<36x8xbf16>
    %c0_152 = arith.constant 0 : index
    %c0_153 = arith.constant 0 : index
    %c0_154 = arith.constant 0 : index
    %c0_155 = arith.constant 0 : index
    %96 = tpu.strided_load %arg11[%c0_152, %c0_153, %c0_154, %c0_155] {strides = array<i32: 1, 2, 2, 1>} : memref<1x18x18x4xf32, #tpu.memory_space<vmem>>, vector<1x9x9x4xf32>
    %97 = arith.truncf %96 : vector<1x9x9x4xf32> to vector<1x9x9x4xbf16>
    %c0_156 = arith.constant 0 : index
    %c0_157 = arith.constant 0 : index
    %c1_158 = arith.constant 1 : index
    %c0_159 = arith.constant 0 : index
    %98 = tpu.strided_load %arg11[%c0_156, %c0_157, %c1_158, %c0_159] {strides = array<i32: 1, 2, 2, 1>} : memref<1x18x18x4xf32, #tpu.memory_space<vmem>>, vector<1x9x8x4xf32>
    %99 = arith.truncf %98 : vector<1x9x8x4xf32> to vector<1x9x8x4xbf16>
    %c0_160 = arith.constant 0 : index
    %c1_161 = arith.constant 1 : index
    %c0_162 = arith.constant 0 : index
    %c0_163 = arith.constant 0 : index
    %100 = tpu.strided_load %arg11[%c0_160, %c1_161, %c0_162, %c0_163] {strides = array<i32: 1, 2, 2, 1>} : memref<1x18x18x4xf32, #tpu.memory_space<vmem>>, vector<1x8x9x4xf32>
    %101 = arith.truncf %100 : vector<1x8x9x4xf32> to vector<1x8x9x4xbf16>
    %c0_164 = arith.constant 0 : index
    %c1_165 = arith.constant 1 : index
    %c1_166 = arith.constant 1 : index
    %c0_167 = arith.constant 0 : index
    %102 = tpu.strided_load %arg11[%c0_164, %c1_165, %c1_166, %c0_167] {strides = array<i32: 1, 2, 2, 1>} : memref<1x18x18x4xf32, #tpu.memory_space<vmem>>, vector<1x8x8x4xf32>
    %103 = arith.truncf %102 : vector<1x8x8x4xf32> to vector<1x8x8x4xbf16>
    %104 = vector.extract_strided_slice %97 {offsets = [0, 0, 0, 0], sizes = [1, 8, 8, 4], strides = [1, 1, 1, 1]} : vector<1x9x9x4xbf16> to vector<1x8x8x4xbf16>
    %105 = vector.extract_strided_slice %99 {offsets = [0, 0, 0, 0], sizes = [1, 8, 8, 4], strides = [1, 1, 1, 1]} : vector<1x9x8x4xbf16> to vector<1x8x8x4xbf16>
    %106 = vector.extract_strided_slice %97 {offsets = [0, 0, 1, 0], sizes = [1, 8, 8, 4], strides = [1, 1, 1, 1]} : vector<1x9x9x4xbf16> to vector<1x8x8x4xbf16>
    %107 = vector.extract_strided_slice %101 {offsets = [0, 0, 0, 0], sizes = [1, 8, 8, 4], strides = [1, 1, 1, 1]} : vector<1x8x9x4xbf16> to vector<1x8x8x4xbf16>
    %108 = vector.extract_strided_slice %101 {offsets = [0, 0, 1, 0], sizes = [1, 8, 8, 4], strides = [1, 1, 1, 1]} : vector<1x8x9x4xbf16> to vector<1x8x8x4xbf16>
    %109 = vector.extract_strided_slice %97 {offsets = [0, 1, 0, 0], sizes = [1, 8, 8, 4], strides = [1, 1, 1, 1]} : vector<1x9x9x4xbf16> to vector<1x8x8x4xbf16>
    %110 = vector.extract_strided_slice %99 {offsets = [0, 1, 0, 0], sizes = [1, 8, 8, 4], strides = [1, 1, 1, 1]} : vector<1x9x8x4xbf16> to vector<1x8x8x4xbf16>
    %111 = vector.extract_strided_slice %97 {offsets = [0, 1, 1, 0], sizes = [1, 8, 8, 4], strides = [1, 1, 1, 1]} : vector<1x9x9x4xbf16> to vector<1x8x8x4xbf16>
    %112 = tpu.concatenate %104, %105, %106, %107, %103, %108, %109, %110, %111 in 3 : vector<1x8x8x4xbf16>, vector<1x8x8x4xbf16>, vector<1x8x8x4xbf16>, vector<1x8x8x4xbf16>, vector<1x8x8x4xbf16>, vector<1x8x8x4xbf16>, vector<1x8x8x4xbf16>, vector<1x8x8x4xbf16>, vector<1x8x8x4xbf16> -> vector<1x8x8x36xbf16>
    %113 = vector.shape_cast %112 : vector<1x8x8x36xbf16> to vector<64x36xbf16>
    %cst_168 = arith.constant dense<0.000000e+00> : vector<64x8xf32>
    %114 = tpu.matmul %113, %95, %cst_168 {dimension_numbers = #tpu.dot_dimension_numbers<[1], [0], [0], [1], [0, 0, 1, 1], [], []>} : vector<64x36xbf16>, vector<36x8xbf16>, vector<64x8xf32> -> vector<64x8xf32>
    %115 = vector.shape_cast %114 : vector<64x8xf32> to vector<1x8x8x8xf32>
    %c1_169 = arith.constant 1 : index
    %c0_170 = arith.constant 0 : index
    %c0_171 = arith.constant 0 : index
    %c0_172 = arith.constant 0 : index
    %c0_173 = arith.constant 0 : index
    %116 = vector.load %arg5[%c1_169, %c0_170, %c0_171, %c0_172, %c0_173] : memref<2x1x1x1x8xf32, #tpu.memory_space<vmem>>, vector<1x1x1x1x8xf32>
    %117 = vector.shape_cast %116 : vector<1x1x1x1x8xf32> to vector<1x1x1x8xf32>
    %118 = vector.broadcast %117 : vector<1x1x1x8xf32> to vector<1x8x8x8xf32>
    %119 = arith.addf %115, %118 : vector<1x8x8x8xf32>
    %cst_174 = arith.constant 0.000000e+00 : f32
    %120 = vector.broadcast %cst_174 : f32 to vector<1x8x8x8xf32>
    %121 = arith.maximumf %119, %120 : vector<1x8x8x8xf32>
    %122 = arith.truncf %121 : vector<1x8x8x8xf32> to vector<1x8x8x8xbf16>
    %c0_175 = arith.constant 0 : index
    %c1_176 = arith.constant 1 : index
    %c1_177 = arith.constant 1 : index
    %c0_178 = arith.constant 0 : index
    %123 = vector.load %arg12[%c0_175, %c1_176, %c1_177, %c0_178] : memref<1x10x10x8xbf16, #tpu.memory_space<vmem>>, vector<1x8x8x8xbf16>
    tpu.vector_store %arg12[%c0_175, %c1_176, %c1_177, %c0_178], %122 {strides = array<i32>} : memref<1x10x10x8xbf16, #tpu.memory_space<vmem>>, vector<1x8x8x8xbf16>,
    %c1_179 = arith.constant 1 : index
    %c0_180 = arith.constant 0 : index
    %c0_181 = arith.constant 0 : index
    %124 = vector.load %arg6[%c1_179, %c0_180, %c0_181] : memref<2x72x8xbf16, #tpu.memory_space<vmem>>, vector<1x72x8xbf16>
    %125 = vector.shape_cast %124 : vector<1x72x8xbf16> to vector<72x8xbf16>
    %c0_182 = arith.constant 0 : index
    %c0_183 = arith.constant 0 : index
    %c0_184 = arith.constant 0 : index
    %c0_185 = arith.constant 0 : index
    %126 = vector.load %arg12[%c0_182, %c0_183, %c0_184, %c0_185] : memref<1x10x10x8xbf16, #tpu.memory_space<vmem>>, vector<1x8x8x8xbf16>
    %c0_186 = arith.constant 0 : index
    %c0_187 = arith.constant 0 : index
    %c1_188 = arith.constant 1 : index
    %c0_189 = arith.constant 0 : index
    %127 = vector.load %arg12[%c0_186, %c0_187, %c1_188, %c0_189] : memref<1x10x10x8xbf16, #tpu.memory_space<vmem>>, vector<1x8x8x8xbf16>
    %c0_190 = arith.constant 0 : index
    %c0_191 = arith.constant 0 : index
    %c2_192 = arith.constant 2 : index
    %c0_193 = arith.constant 0 : index
    %128 = vector.load %arg12[%c0_190, %c0_191, %c2_192, %c0_193] : memref<1x10x10x8xbf16, #tpu.memory_space<vmem>>, vector<1x8x8x8xbf16>
    %c0_194 = arith.constant 0 : index
    %c1_195 = arith.constant 1 : index
    %c0_196 = arith.constant 0 : index
    %c0_197 = arith.constant 0 : index
    %129 = vector.load %arg12[%c0_194, %c1_195, %c0_196, %c0_197] : memref<1x10x10x8xbf16, #tpu.memory_space<vmem>>, vector<1x8x8x8xbf16>
    %c0_198 = arith.constant 0 : index
    %c1_199 = arith.constant 1 : index
    %c1_200 = arith.constant 1 : index
    %c0_201 = arith.constant 0 : index
    %130 = vector.load %arg12[%c0_198, %c1_199, %c1_200, %c0_201] : memref<1x10x10x8xbf16, #tpu.memory_space<vmem>>, vector<1x8x8x8xbf16>
    %c0_202 = arith.constant 0 : index
    %c1_203 = arith.constant 1 : index
    %c2_204 = arith.constant 2 : index
    %c0_205 = arith.constant 0 : index
    %131 = vector.load %arg12[%c0_202, %c1_203, %c2_204, %c0_205] : memref<1x10x10x8xbf16, #tpu.memory_space<vmem>>, vector<1x8x8x8xbf16>
    %c0_206 = arith.constant 0 : index
    %c2_207 = arith.constant 2 : index
    %c0_208 = arith.constant 0 : index
    %c0_209 = arith.constant 0 : index
    %132 = vector.load %arg12[%c0_206, %c2_207, %c0_208, %c0_209] : memref<1x10x10x8xbf16, #tpu.memory_space<vmem>>, vector<1x8x8x8xbf16>
    %c0_210 = arith.constant 0 : index
    %c2_211 = arith.constant 2 : index
    %c1_212 = arith.constant 1 : index
    %c0_213 = arith.constant 0 : index
    %133 = vector.load %arg12[%c0_210, %c2_211, %c1_212, %c0_213] : memref<1x10x10x8xbf16, #tpu.memory_space<vmem>>, vector<1x8x8x8xbf16>
    %c0_214 = arith.constant 0 : index
    %c2_215 = arith.constant 2 : index
    %c2_216 = arith.constant 2 : index
    %c0_217 = arith.constant 0 : index
    %134 = vector.load %arg12[%c0_214, %c2_215, %c2_216, %c0_217] : memref<1x10x10x8xbf16, #tpu.memory_space<vmem>>, vector<1x8x8x8xbf16>
    %135 = tpu.concatenate %126, %127, %128, %129, %130, %131, %132, %133, %134 in 3 : vector<1x8x8x8xbf16>, vector<1x8x8x8xbf16>, vector<1x8x8x8xbf16>, vector<1x8x8x8xbf16>, vector<1x8x8x8xbf16>, vector<1x8x8x8xbf16>, vector<1x8x8x8xbf16>, vector<1x8x8x8xbf16>, vector<1x8x8x8xbf16> -> vector<1x8x8x72xbf16>
    %136 = vector.shape_cast %135 : vector<1x8x8x72xbf16> to vector<64x72xbf16>
    %cst_218 = arith.constant dense<0.000000e+00> : vector<64x8xf32>
    %137 = tpu.matmul %136, %125, %cst_218 {dimension_numbers = #tpu.dot_dimension_numbers<[1], [0], [0], [1], [0, 0, 1, 1], [], []>} : vector<64x72xbf16>, vector<72x8xbf16>, vector<64x8xf32> -> vector<64x8xf32>
    %138 = vector.shape_cast %137 : vector<64x8xf32> to vector<1x8x8x8xf32>
    %139 = arith.addf %82, %138 : vector<1x8x8x8xf32>
    %140 = arith.truncf %139 : vector<1x8x8x8xf32> to vector<1x8x8x8xbf16>
    %c0_219 = arith.constant 0 : index
    %c0_220 = arith.constant 0 : index
    %c0_221 = arith.constant 0 : index
    %c0_222 = arith.constant 0 : index
    %141 = vector.load %arg10[%c0_219, %c0_220, %c0_221, %c0_222] : memref<1x8x8x8xbf16, #tpu.memory_space<vmem>>, vector<1x8x8x8xbf16>
    tpu.vector_store %arg10[%c0_219, %c0_220, %c0_221, %c0_222], %140 {strides = array<i32>} : memref<1x8x8x8xbf16, #tpu.memory_space<vmem>>, vector<1x8x8x8xbf16>,
    return
  }
  func.func @transform_0(%arg0: i32) -> (i32, i32, i32, i32) {
    %c0_i32 = arith.constant 0 : i32
    %c0_i32_0 = arith.constant 0 : i32
    %c0_i32_1 = arith.constant 0 : i32
    %c0_i32_2 = arith.constant 0 : i32
    return %arg0, %c0_i32, %c0_i32_0, %c0_i32_1 : i32, i32, i32, i32
  }
  func.func @transform_1(%arg0: i32) -> (i32, i32, i32, i32, i32) {
    %c0_i32 = arith.constant 0 : i32
    %c0_i32_0 = arith.constant 0 : i32
    %c0_i32_1 = arith.constant 0 : i32
    %c0_i32_2 = arith.constant 0 : i32
    %c0_i32_3 = arith.constant 0 : i32
    %c0_i32_4 = arith.constant 0 : i32
    return %c0_i32, %c0_i32_0, %c0_i32_1, %c0_i32_2, %c0_i32_3 : i32, i32, i32, i32, i32
  }
  func.func @transform_2(%arg0: i32) -> (i32, i32, i32, i32, i32) {
    %c0_i32 = arith.constant 0 : i32
    %c0_i32_0 = arith.constant 0 : i32
    %c0_i32_1 = arith.constant 0 : i32
    %c0_i32_2 = arith.constant 0 : i32
    %c0_i32_3 = arith.constant 0 : i32
    %c0_i32_4 = arith.constant 0 : i32
    return %c0_i32, %c0_i32_0, %c0_i32_1, %c0_i32_2, %c0_i32_3 : i32, i32, i32, i32, i32
  }
  func.func @transform_3(%arg0: i32) -> (i32, i32, i32) {
    %c0_i32 = arith.constant 0 : i32
    %c0_i32_0 = arith.constant 0 : i32
    %c0_i32_1 = arith.constant 0 : i32
    %c0_i32_2 = arith.constant 0 : i32
    return %c0_i32, %c0_i32_0, %c0_i32_1 : i32, i32, i32
  }
  func.func @transform_4(%arg0: i32) -> (i32, i32, i32, i32, i32) {
    %c0_i32 = arith.constant 0 : i32
    %c0_i32_0 = arith.constant 0 : i32
    %c0_i32_1 = arith.constant 0 : i32
    %c0_i32_2 = arith.constant 0 : i32
    %c0_i32_3 = arith.constant 0 : i32
    %c0_i32_4 = arith.constant 0 : i32
    return %c0_i32, %c0_i32_0, %c0_i32_1, %c0_i32_2, %c0_i32_3 : i32, i32, i32, i32, i32
  }
  func.func @transform_5(%arg0: i32) -> (i32, i32, i32) {
    %c0_i32 = arith.constant 0 : i32
    %c0_i32_0 = arith.constant 0 : i32
    %c0_i32_1 = arith.constant 0 : i32
    %c0_i32_2 = arith.constant 0 : i32
    return %c0_i32, %c0_i32_0, %c0_i32_1 : i32, i32, i32
  }
  func.func @transform_6(%arg0: i32) -> (i32, i32, i32, i32) {
    %c0_i32 = arith.constant 0 : i32
    %c0_i32_0 = arith.constant 0 : i32
    %c0_i32_1 = arith.constant 0 : i32
    %c0_i32_2 = arith.constant 0 : i32
    %c0_i32_3 = arith.constant 0 : i32
    return %c0_i32, %c0_i32_0, %c0_i32_1, %c0_i32_2 : i32, i32, i32, i32
  }
  func.func @transform_7(%arg0: i32) -> (i32, i32) {
    %c0_i32 = arith.constant 0 : i32
    %c0_i32_0 = arith.constant 0 : i32
    %c0_i32_1 = arith.constant 0 : i32
    return %c0_i32, %c0_i32_0 : i32, i32
  }
  func.func @transform_8(%arg0: i32) -> (i32, i32, i32, i32) {
    %c0_i32 = arith.constant 0 : i32
    %c0_i32_0 = arith.constant 0 : i32
    %c0_i32_1 = arith.constant 0 : i32
    %c0_i32_2 = arith.constant 0 : i32
    return %arg0, %c0_i32, %c0_i32_0, %c0_i32_1 : i32, i32, i32, i32
  }
  func.func @transform_9(%arg0: i32) -> (i32, i32, i32, i32) {
    %c0_i32 = arith.constant 0 : i32
    %c0_i32_0 = arith.constant 0 : i32
    %c0_i32_1 = arith.constant 0 : i32
    %c0_i32_2 = arith.constant 0 : i32
    return %arg0, %c0_i32, %c0_i32_0, %c0_i32_1 : i32, i32, i32, i32
  }
}

</mosaic_0001>

<llo_original>
// kernel: shake_basic_unit_forward_nhwc.1
$region0: #{shake_basic_unit_forward_nhwc.1}
  #allocation0 [shape = 'u32[]', space=smem, size = 0x4, offset = 0x4, fixed_abs, tag = 'smem constant byte address 0x4 - core index']
  #allocation1 [shape = 'u32[144,128]{1,0:T(1,128)}', space=vmem, size = 0x12000, scoped, tag = 'internal scratch']
  #allocation2 [shape = 'f32[1,18,18,4]{3,2,1,0:T(8,128)}', space=vmem, size = 0x36000, scoped, tag = 'scratch operand']
  #allocation3 [shape = 'bf16[1,10,10,8]{3,2,1,0:T(8,128)(2,1)}', space=vmem, size = 0xa000, scoped, tag = 'scratch operand']
  %s0 = inlined_call_operand.vmem [shape: bf16[2,16,16,4], index: 0, kind: input, shape index: {}]
  %s1 = inlined_call_operand.vmem [shape: f32[2,1,1,1,4], index: 1, kind: input, shape index: {}]
  %s2 = inlined_call_operand.vmem [shape: f32[2,1,1,1,4], index: 2, kind: input, shape index: {}]
  %s3 = inlined_call_operand.vmem [shape: bf16[2,36,8], index: 3, kind: input, shape index: {}]
  %s4 = inlined_call_operand.vmem [shape: f32[2,1,1,1,8], index: 4, kind: input, shape index: {}]
  %s5 = inlined_call_operand.vmem [shape: bf16[2,72,8], index: 5, kind: input, shape index: {}]
  %s6 = inlined_call_operand.vmem [shape: f32[1,1,1,8], index: 6, kind: input, shape index: {}]
  %s7 = inlined_call_operand.vmem [shape: bf16[4,8], index: 7, kind: input, shape index: {}]
  %s8 = inlined_call_operand.vmem [shape: bf16[2,8,8,4], index: 8, kind: input, shape index: {}]
  %s9 = inlined_call_operand.hbm [shape: bf16[2,8,8,8], index: 9, kind: output, shape index: {}]
  %s10 = sld [smem:[#allocation0]]
  $region69: #{shake_basic_unit_forward_nhwc.1} parent=0
    _
  %s12 = ssub.s32 1, %s10
  %s13 = scalar_select 0, %s12, %s10
  $region1: #{shake_basic_unit_forward_nhwc.1} parent=0
    #allocation4 [shape = 'u8[32768]{0}', space=vmem, size = 0x8000, scoped, tag = 'output window, operand 0']
    #allocation5 [shape = 's32[2]{0}', space=sflag, size = 0x8, scoped, tag = 'scoped memory for shake_basic_unit_forward_nhwc.1']
    %14 = vsyncpa [#allocation5], 0
    %s15 = scalar_lea.sflag [#allocation5], 1
    %16 = vsyncpa %s15, 0
    loop: start=0, step=1, limit=4
    $region2: #{shake_basic_unit_forward_nhwc.1} parent=1 // loop_pre_header
      _
    $region3: #{shake_basic_unit_forward_nhwc.1} parent=1 // loop_header
      %s18 = sphi 0, %s22
      %p19 = scmp.ge.s32.totalorder %s18, 4
      %s28 = sphi 0, %s30
      %s31 = sphi 0, %s28
      %s32 = sphi 0, %s31
      %s48 = sphi 0, %s32
      %s52 = sphi 0, %s52
      %s54 = sphi 0, %s52
      %s55 = sphi 0, %s54
      %s69 = sphi 0, %s55
      %s73 = sphi 0, %s73
      %s75 = sphi 0, %s73
      %s76 = sphi 0, %s75
      %s90 = sphi 0, %s76
      %s94 = sphi 0, %s94
      %s96 = sphi 0, %s94
      %s97 = sphi 0, %s96
      %s111 = sphi 0, %s97
      %s115 = sphi 0, %s115
      %s117 = sphi 0, %s115
      %s118 = sphi 0, %s117
      %s132 = sphi 0, %s118
      %s136 = sphi 0, %s136
      %s138 = sphi 0, %s136
      %s139 = sphi 0, %s138
      %s153 = sphi 0, %s139
      %s157 = sphi 0, %s157
      %s159 = sphi 0, %s157
      %s160 = sphi 0, %s159
      %s174 = sphi 0, %s160
      %s178 = sphi 0, %s178
      %s180 = sphi 0, %s178
      %s181 = sphi 0, %s180
      %s195 = sphi 0, %s181
      %s201 = sphi 0, %s203
      %s204 = sphi 0, %s201
      %s205 = sphi 0, %s204
      %s221 = sphi 0, %s205
      %s227 = sphi 0, %s229
      %s230 = sphi 0, %s227
      %s231 = sphi 0, %s230
      %s247 = sphi 0, %s231
    $region4: #{shake_basic_unit_forward_nhwc.1} parent=1 // loop_header_branch
      %21 = sbr.rel (%p19) target = $region8
    $region5: #{shake_basic_unit_forward_nhwc.1} parent=1 // loop_body
      %s23 = ssub.s32 %s18, 1
      %s24 = ssub.s32 %s18, 2
      %s25 = sadd.s32 %s18, 1
      %s26 = ssub.s32 %s18, %s25
      %p27 = scmp.eq.s32.totalorder %s26, 0
      %s29 = sadd.s32 %s28, 1
      %s30 = scalar_select %p27, %s28, %s29
      %p33 = pneg %p27
      %p34 = scmp.eq.s32.totalorder %s18, 1
      %p35 = por %p33, %p34
      %p36 = scmp.ne.s32.totalorder %s28, %s31
      %p37 = scmp.eq.s32.totalorder %s18, 0
      %p38 = por %p36, %p37
      %p39 = scmp.ne.s32.totalorder %s28, %s31
      %p40 = scmp.eq.s32.totalorder %s23, 1
      %p41 = por %p39, %p40
      %p42 = scmp.ne.s32.totalorder %s31, %s32
      %p43 = scmp.eq.s32.totalorder %s23, 0
      %p44 = por %p42, %p43
      %p45 = scmp.ne.s32.totalorder %s31, %s32
      %p46 = scmp.eq.s32.totalorder %s24, 1
      %p47 = por %p45, %p46
      %p49 = scmp.ne.s32.totalorder %s32, %s48
      %p50 = scmp.eq.s32.totalorder %s24, 0
      %p51 = por %p49, %p50
      %s53 = sadd.s32 %s52, 1
      %p56 = scmp.eq.s32.totalorder %s18, 1
      %p57 = scmp.ne.s32.totalorder %s52, %s54
      %p58 = scmp.eq.s32.totalorder %s18, 0
      %p59 = por %p57, %p58
      %p60 = scmp.ne.s32.totalorder %s52, %s54
      %p61 = scmp.eq.s32.totalorder %s23, 1
      %p62 = por %p60, %p61
      %p63 = scmp.ne.s32.totalorder %s54, %s55
      %p64 = scmp.eq.s32.totalorder %s23, 0
      %p65 = por %p63, %p64
      %p66 = scmp.ne.s32.totalorder %s54, %s55
      %p67 = scmp.eq.s32.totalorder %s24, 1
      %p68 = por %p66, %p67
      %p70 = scmp.ne.s32.totalorder %s55, %s69
      %p71 = scmp.eq.s32.totalorder %s24, 0
      %p72 = por %p70, %p71
      %s74 = sadd.s32 %s73, 1
      %p77 = scmp.eq.s32.totalorder %s18, 1
      %p78 = scmp.ne.s32.totalorder %s73, %s75
      %p79 = scmp.eq.s32.totalorder %s18, 0
      %p80 = por %p78, %p79
      %p81 = scmp.ne.s32.totalorder %s73, %s75
      %p82 = scmp.eq.s32.totalorder %s23, 1
      %p83 = por %p81, %p82
      %p84 = scmp.ne.s32.totalorder %s75, %s76
      %p85 = scmp.eq.s32.totalorder %s23, 0
      %p86 = por %p84, %p85
      %p87 = scmp.ne.s32.totalorder %s75, %s76
      %p88 = scmp.eq.s32.totalorder %s24, 1
      %p89 = por %p87, %p88
      %p91 = scmp.ne.s32.totalorder %s76, %s90
      %p92 = scmp.eq.s32.totalorder %s24, 0
      %p93 = por %p91, %p92
      %s95 = sadd.s32 %s94, 1
      %p98 = scmp.eq.s32.totalorder %s18, 1
      %p99 = scmp.ne.s32.totalorder %s94, %s96
      %p100 = scmp.eq.s32.totalorder %s18, 0
      %p101 = por %p99, %p100
      %p102 = scmp.ne.s32.totalorder %s94, %s96
      %p103 = scmp.eq.s32.totalorder %s23, 1
      %p104 = por %p102, %p103
      %p105 = scmp.ne.s32.totalorder %s96, %s97
      %p106 = scmp.eq.s32.totalorder %s23, 0
      %p107 = por %p105, %p106
      %p108 = scmp.ne.s32.totalorder %s96, %s97
      %p109 = scmp.eq.s32.totalorder %s24, 1
      %p110 = por %p108, %p109
      %p112 = scmp.ne.s32.totalorder %s97, %s111
      %p113 = scmp.eq.s32.totalorder %s24, 0
      %p114 = por %p112, %p113
      %s116 = sadd.s32 %s115, 1
      %p119 = scmp.eq.s32.totalorder %s18, 1
      %p120 = scmp.ne.s32.totalorder %s115, %s117
      %p121 = scmp.eq.s32.totalorder %s18, 0
      %p122 = por %p120, %p121
      %p123 = scmp.ne.s32.totalorder %s115, %s117
      %p124 = scmp.eq.s32.totalorder %s23, 1
      %p125 = por %p123, %p124
      %p126 = scmp.ne.s32.totalorder %s117, %s118
      %p127 = scmp.eq.s32.totalorder %s23, 0
      %p128 = por %p126, %p127
      %p129 = scmp.ne.s32.totalorder %s117, %s118
      %p130 = scmp.eq.s32.totalorder %s24, 1
      %p131 = por %p129, %p130
      %p133 = scmp.ne.s32.totalorder %s118, %s132
      %p134 = scmp.eq.s32.totalorder %s24, 0
      %p135 = por %p133, %p134
      %s137 = sadd.s32 %s136, 1
      %p140 = scmp.eq.s32.totalorder %s18, 1
      %p141 = scmp.ne.s32.totalorder %s136, %s138
      %p142 = scmp.eq.s32.totalorder %s18, 0
      %p143 = por %p141, %p142
      %p144 = scmp.ne.s32.totalorder %s136, %s138
      %p145 = scmp.eq.s32.totalorder %s23, 1
      %p146 = por %p144, %p145
      %p147 = scmp.ne.s32.totalorder %s138, %s139
      %p148 = scmp.eq.s32.totalorder %s23, 0
      %p149 = por %p147, %p148
      %p150 = scmp.ne.s32.totalorder %s138, %s139
      %p151 = scmp.eq.s32.totalorder %s24, 1
      %p152 = por %p150, %p151
      %p154 = scmp.ne.s32.totalorder %s139, %s153
      %p155 = scmp.eq.s32.totalorder %s24, 0
      %p156 = por %p154, %p155
      %s158 = sadd.s32 %s157, 1
      %p161 = scmp.eq.s32.totalorder %s18, 1
      %p162 = scmp.ne.s32.totalorder %s157, %s159
      %p163 = scmp.eq.s32.totalorder %s18, 0
      %p164 = por %p162, %p163
      %p165 = scmp.ne.s32.totalorder %s157, %s159
      %p166 = scmp.eq.s32.totalorder %s23, 1
      %p167 = por %p165, %p166
      %p168 = scmp.ne.s32.totalorder %s159, %s160
      %p169 = scmp.eq.s32.totalorder %s23, 0
      %p170 = por %p168, %p169
      %p171 = scmp.ne.s32.totalorder %s159, %s160
      %p172 = scmp.eq.s32.totalorder %s24, 1
      %p173 = por %p171, %p172
      %p175 = scmp.ne.s32.totalorder %s160, %s174
      %p176 = scmp.eq.s32.totalorder %s24, 0
      %p177 = por %p175, %p176
      %s179 = sadd.s32 %s178, 1
      %p182 = scmp.eq.s32.totalorder %s18, 1
      %p183 = scmp.ne.s32.totalorder %s178, %s180
      %p184 = scmp.eq.s32.totalorder %s18, 0
      %p185 = por %p183, %p184
      %p186 = scmp.ne.s32.totalorder %s178, %s180
      %p187 = scmp.eq.s32.totalorder %s23, 1
      %p188 = por %p186, %p187
      %p189 = scmp.ne.s32.totalorder %s180, %s181
      %p190 = scmp.eq.s32.totalorder %s23, 0
      %p191 = por %p189, %p190
      %p192 = scmp.ne.s32.totalorder %s180, %s181
      %p193 = scmp.eq.s32.totalorder %s24, 1
      %p194 = por %p192, %p193
      %p196 = scmp.ne.s32.totalorder %s181, %s195
      %p197 = scmp.eq.s32.totalorder %s24, 0
      %p198 = por %p196, %p197
      %s199 = ssub.s32 %s18, %s25
      %p200 = scmp.eq.s32.totalorder %s199, 0
      %s202 = sadd.s32 %s201, 1
      %s203 = scalar_select %p200, %s201, %s202
      %p206 = pneg %p200
      %p207 = scmp.eq.s32.totalorder %s18, 1
      %p208 = por %p206, %p207
      %p209 = scmp.ne.s32.totalorder %s201, %s204
      %p210 = scmp.eq.s32.totalorder %s18, 0
      %p211 = por %p209, %p210
      %p212 = scmp.ne.s32.totalorder %s201, %s204
      %p213 = scmp.eq.s32.totalorder %s23, 1
      %p214 = por %p212, %p213
      %p215 = scmp.ne.s32.totalorder %s204, %s205
      %p216 = scmp.eq.s32.totalorder %s23, 0
      %p217 = por %p215, %p216
      %p218 = scmp.ne.s32.totalorder %s204, %s205
      %p219 = scmp.eq.s32.totalorder %s24, 1
      %p220 = por %p218, %p219
      %p222 = scmp.ne.s32.totalorder %s205, %s221
      %p223 = scmp.eq.s32.totalorder %s24, 0
      %p224 = por %p222, %p223
      %s225 = ssub.s32 %s18, %s25
      %p226 = scmp.eq.s32.totalorder %s225, 0
      %s228 = sadd.s32 %s227, 1
      %s229 = scalar_select %p226, %s227, %s228
      %p232 = pneg %p226
      %p233 = scmp.eq.s32.totalorder %s18, 1
      %p234 = por %p232, %p233
      %p235 = scmp.ne.s32.totalorder %s227, %s230
      %p236 = scmp.eq.s32.totalorder %s18, 0
      %p237 = por %p235, %p236
      %p238 = scmp.ne.s32.totalorder %s227, %s230
      %p239 = scmp.eq.s32.totalorder %s23, 1
      %p240 = por %p238, %p239
      %p241 = scmp.ne.s32.totalorder %s230, %s231
      %p242 = scmp.eq.s32.totalorder %s23, 0
      %p243 = por %p241, %p242
      %p244 = scmp.ne.s32.totalorder %s230, %s231
      %p245 = scmp.eq.s32.totalorder %s24, 1
      %p246 = por %p244, %p245
      %p248 = scmp.ne.s32.totalorder %s231, %s247
      %p249 = scmp.eq.s32.totalorder %s24, 0
      %p250 = por %p248, %p249
      %p251 = scmp.le.s32.totalorder 1, %s18
      %p252 = scmp.lt.s32.totalorder %s18, 3
      %p253 = pnand %p251, %p252
      %p254 = pneg %p253
      // Predicated region
      $region9: #{shake_basic_unit_forward_nhwc.1} parent=5 // pred_check
        _
      $region10: #{shake_basic_unit_forward_nhwc.1} parent=5 // pred_check_branch
        %256 = sbr.rel (%p253) target = $region12
      $region11: #{shake_basic_unit_forward_nhwc.1} parent=5 // pred_region
        %s257 = ssub.s32 %s18, 1
        // Predicated region
        $region13: #{shake_basic_unit_forward_nhwc.1} parent=11 // pred_check
          %p258 = pneg %p65
        $region14: #{shake_basic_unit_forward_nhwc.1} parent=11 // pred_check_branch
          %260 = sbr.rel (%p258) target = $region16
        $region15: #{shake_basic_unit_forward_nhwc.1} parent=11 // pred_region
          _
        $region16: #{shake_basic_unit_forward_nhwc.1} parent=11 // pred_fallthru
          _
        // Predicated region
        $region17: #{shake_basic_unit_forward_nhwc.1} parent=11 // pred_check
          %p261 = pneg %p86
        $region18: #{shake_basic_unit_forward_nhwc.1} parent=11 // pred_check_branch
          %263 = sbr.rel (%p261) target = $region20
        $region19: #{shake_basic_unit_forward_nhwc.1} parent=11 // pred_region
          _
        $region20: #{shake_basic_unit_forward_nhwc.1} parent=11 // pred_fallthru
          _
        // Predicated region
        $region21: #{shake_basic_unit_forward_nhwc.1} parent=11 // pred_check
          %p264 = pneg %p107
        $region22: #{shake_basic_unit_forward_nhwc.1} parent=11 // pred_check_branch
          %266 = sbr.rel (%p264) target = $region24
        $region23: #{shake_basic_unit_forward_nhwc.1} parent=11 // pred_region
          _
        $region24: #{shake_basic_unit_forward_nhwc.1} parent=11 // pred_fallthru
          _
        // Predicated region
        $region25: #{shake_basic_unit_forward_nhwc.1} parent=11 // pred_check
          %p267 = pneg %p128
        $region26: #{shake_basic_unit_forward_nhwc.1} parent=11 // pred_check_branch
          %269 = sbr.rel (%p267) target = $region28
        $region27: #{shake_basic_unit_forward_nhwc.1} parent=11 // pred_region
          _
        $region28: #{shake_basic_unit_forward_nhwc.1} parent=11 // pred_fallthru
          _
        // Predicated region
        $region29: #{shake_basic_unit_forward_nhwc.1} parent=11 // pred_check
          %p270 = pneg %p149
        $region30: #{shake_basic_unit_forward_nhwc.1} parent=11 // pred_check_branch
          %272 = sbr.rel (%p270) target = $region32
        $region31: #{shake_basic_unit_forward_nhwc.1} parent=11 // pred_region
          _
        $region32: #{shake_basic_unit_forward_nhwc.1} parent=11 // pred_fallthru
          _
        // Predicated region
        $region33: #{shake_basic_unit_forward_nhwc.1} parent=11 // pred_check
          %p273 = pneg %p170
        $region34: #{shake_basic_unit_forward_nhwc.1} parent=11 // pred_check_branch
          %275 = sbr.rel (%p273) target = $region36
        $region35: #{shake_basic_unit_forward_nhwc.1} parent=11 // pred_region
          _
        $region36: #{shake_basic_unit_forward_nhwc.1} parent=11 // pred_fallthru
          _
        // Predicated region
        $region37: #{shake_basic_unit_forward_nhwc.1} parent=11 // pred_check
          %p276 = pneg %p191
        $region38: #{shake_basic_unit_forward_nhwc.1} parent=11 // pred_check_branch
          %278 = sbr.rel (%p276) target = $region40
        $region39: #{shake_basic_unit_forward_nhwc.1} parent=11 // pred_region
          _
        $region40: #{shake_basic_unit_forward_nhwc.1} parent=11 // pred_fallthru
          _
      $region12: #{shake_basic_unit_forward_nhwc.1} parent=5 // pred_fallthru
        _
      %p279 = scmp.lt.s32.totalorder %s18, 2
      // Predicated region
      $region41: #{shake_basic_unit_forward_nhwc.1} parent=5 // pred_check
        %p280 = pneg %p279
      $region42: #{shake_basic_unit_forward_nhwc.1} parent=5 // pred_check_branch
        %282 = sbr.rel (%p280) target = $region44
      $region43: #{shake_basic_unit_forward_nhwc.1} parent=5 // pred_region
        // Predicated region
        $region45: #{shake_basic_unit_forward_nhwc.1} parent=43 // pred_check
          %p283 = pneg %p38
        $region46: #{shake_basic_unit_forward_nhwc.1} parent=43 // pred_check_branch
          %285 = sbr.rel (%p283) target = $region48
        $region47: #{shake_basic_unit_forward_nhwc.1} parent=43 // pred_region
          %p286 = scmp.lt.s32.totalorder %s18, 1
          %s287 = scalar_select %p286, %s18, 1
          %s288 = smul.addr %s287, 32
          %s289 = smul.addr %s288, 4
          %s290 = scalar_lea.vmem %s0, %s289
        $region48: #{shake_basic_unit_forward_nhwc.1} parent=43 // pred_fallthru
          _
        // Predicated region
        $region49: #{shake_basic_unit_forward_nhwc.1} parent=43 // pred_check
          %p291 = pneg %p211
        $region50: #{shake_basic_unit_forward_nhwc.1} parent=43 // pred_check_branch
          %293 = sbr.rel (%p291) target = $region52
        $region51: #{shake_basic_unit_forward_nhwc.1} parent=43 // pred_region
          %p294 = scmp.lt.s32.totalorder %s18, 1
          %s295 = scalar_select %p294, %s18, 1
          %s296 = smul.addr %s295, 8
          %s297 = smul.addr %s296, 4
          %s298 = scalar_lea.vmem %s8, %s297
        $region52: #{shake_basic_unit_forward_nhwc.1} parent=43 // pred_fallthru
          _
      $region44: #{shake_basic_unit_forward_nhwc.1} parent=5 // pred_fallthru
        _
      %p299 = scmp.le.s32.totalorder 1, %s18
      %p300 = scmp.lt.s32.totalorder %s18, 3
      %p301 = pnand %p299, %p300
      %p302 = pneg %p301
      // Predicated region
      $region53: #{shake_basic_unit_forward_nhwc.1} parent=5 // pred_check
        _
      $region54: #{shake_basic_unit_forward_nhwc.1} parent=5 // pred_check_branch
        %304 = sbr.rel (%p301) target = $region56
      $region55: #{shake_basic_unit_forward_nhwc.1} parent=5 // pred_region
        %s305 = ssub.s32 %s18, 1
        %p306 = scmp.lt.s32.totalorder %s23, 1
        %s307 = scalar_select %p306, %s23, 1
        %s308 = smul.addr %s307, 32
        %s309 = smul.addr %s308, 4
        %s310 = scalar_lea.vmem %s0, %s309
        %p311 = pneg %p44
        %p312 = pneg %p41
        %p313 = pneg %p65
        %p314 = pneg %p62
        %p315 = pneg %p86
        %p316 = pneg %p83
        %p317 = pneg %p107
        %p318 = pneg %p104
        %p319 = pneg %p128
        %p320 = pneg %p125
        %p321 = pneg %p149
        %p322 = pneg %p146
        %p323 = pneg %p170
        %p324 = pneg %p167
        %p325 = pneg %p191
        %p326 = pneg %p188
        %p327 = scmp.lt.s32.totalorder %s23, 1
        %s328 = scalar_select %p327, %s23, 1
        %s329 = smul.addr %s328, 8
        %s330 = smul.addr %s329, 4
        %s331 = scalar_lea.vmem %s8, %s330
        %p332 = pneg %p217
        %p333 = pneg %p214
        %p334 = pneg %p243
        %p335 = pneg %p240
        %s336 = sand.u32 %s230, 1
        %s337 = scalar_lea.sflag [#allocation5], %s336
        %s338 = sand.u32 %s230, 1
        %s339 = smul.addr %s338, 32
        %s340 = scalar_lea.vmem [#allocation4], %s339
        %p341 = scmp.lt.s32.totalorder %s23, 1
        %s342 = scalar_select %p341, %s23, 1
        %s343 = smul.addr %s342, 32
        %s344 = smul.addr %s343, 4
        %s345 = scalar_lea.vmem %s0, %s344
        %p346 = scmp.lt.s32.totalorder %s23, 1
        %s347 = scalar_select %p346, %s23, 1
        %s348 = smul.addr %s347, 8
        %s349 = smul.addr %s348, 4
        %s350 = scalar_lea.vmem %s8, %s349
        %v352 = vld [vmem:[%s345] sm:$0xf]
        %v353 = vld [vmem:[%s345 + $0x4] sm:$0xf]
        %v354 = vld [vmem:[%s345 + $0x8] sm:$0xf]
        %v355 = vld [vmem:[%s345 + $0xc] sm:$0xf]
        %v356 = vld [vmem:[%s345 + $0x10] sm:$0xf]
        %v357 = vld [vmem:[%s345 + $0x14] sm:$0xf]
        %v358 = vld [vmem:[%s345 + $0x18] sm:$0xf]
        %v359 = vld [vmem:[%s345 + $0x1c] sm:$0xf]
        %v360 = vld [vmem:[%s345 + $0x20] sm:$0xf]
        %v361 = vld [vmem:[%s345 + $0x24] sm:$0xf]
        %v362 = vld [vmem:[%s345 + $0x28] sm:$0xf]
        %v363 = vld [vmem:[%s345 + $0x2c] sm:$0xf]
        %v364 = vld [vmem:[%s345 + $0x30] sm:$0xf]
        %v365 = vld [vmem:[%s345 + $0x34] sm:$0xf]
        %v366 = vld [vmem:[%s345 + $0x38] sm:$0xf]
        %v367 = vld [vmem:[%s345 + $0x3c] sm:$0xf]
        %v368 = vld [vmem:[%s345 + $0x40] sm:$0xf]
        %v369 = vld [vmem:[%s345 + $0x44] sm:$0xf]
        %v370 = vld [vmem:[%s345 + $0x48] sm:$0xf]
        %v371 = vld [vmem:[%s345 + $0x4c] sm:$0xf]
        %v372 = vld [vmem:[%s345 + $0x50] sm:$0xf]
        %v373 = vld [vmem:[%s345 + $0x54] sm:$0xf]
        %v374 = vld [vmem:[%s345 + $0x58] sm:$0xf]
        %v375 = vld [vmem:[%s345 + $0x5c] sm:$0xf]
        %v376 = vld [vmem:[%s345 + $0x60] sm:$0xf]
        %v377 = vld [vmem:[%s345 + $0x64] sm:$0xf]
        %v378 = vld [vmem:[%s345 + $0x68] sm:$0xf]
        %v379 = vld [vmem:[%s345 + $0x6c] sm:$0xf]
        %v380 = vld [vmem:[%s345 + $0x70] sm:$0xf]
        %v381 = vld [vmem:[%s345 + $0x74] sm:$0xf]
        %v382 = vld [vmem:[%s345 + $0x78] sm:$0xf]
        %v383 = vld [vmem:[%s345 + $0x7c] sm:$0xf]
        %v384 = vunpack.c.l.bf16 %v352
        %v385 = vunpack.c.l.bf16 %v353
        %v386 = vunpack.c.l.bf16 %v354
        %v387 = vunpack.c.l.bf16 %v355
        %v388 = vunpack.c.l.bf16 %v356
        %v389 = vunpack.c.l.bf16 %v357
        %v390 = vunpack.c.l.bf16 %v358
        %v391 = vunpack.c.l.bf16 %v359
        %v392 = vunpack.c.l.bf16 %v360
        %v393 = vunpack.c.l.bf16 %v361
        %v394 = vunpack.c.l.bf16 %v362
        %v395 = vunpack.c.l.bf16 %v363
        %v396 = vunpack.c.l.bf16 %v364
        %v397 = vunpack.c.l.bf16 %v365
        %v398 = vunpack.c.l.bf16 %v366
        %v399 = vunpack.c.l.bf16 %v367
        %v400 = vunpack.c.l.bf16 %v368
        %v401 = vunpack.c.l.bf16 %v369
        %v402 = vunpack.c.l.bf16 %v370
        %v403 = vunpack.c.l.bf16 %v371
        %v404 = vunpack.c.l.bf16 %v372
        %v405 = vunpack.c.l.bf16 %v373
        %v406 = vunpack.c.l.bf16 %v374
        %v407 = vunpack.c.l.bf16 %v375
        %v408 = vunpack.c.l.bf16 %v376
        %v409 = vunpack.c.l.bf16 %v377
        %v410 = vunpack.c.l.bf16 %v378
        %v411 = vunpack.c.l.bf16 %v379
        %v412 = vunpack.c.l.bf16 %v380
        %v413 = vunpack.c.l.bf16 %v381
        %v414 = vunpack.c.l.bf16 %v382
        %v415 = vunpack.c.l.bf16 %v383
        %vm416 = vcmask 31744
        %417 = vst.msk [vmem:[#allocation2] sm:$0xff] %vm416, 0.0
        %418 = vst.msk [vmem:[#allocation2 + $0x8] sm:$0xff] %vm416, 0.0
        %vm419 = vcmask 25600
        %420 = vst.msk [vmem:[#allocation2 + $0x10] sm:$0x3] %vm419, 0.0
        %s421 = scalar_lea.vmem [#allocation2], 408
        %422 = vst.msk [vmem:[%s421] sm:$0xff] %vm416, 0.0
        %423 = vst.msk [vmem:[%s421 + $0x8] sm:$0xff] %vm416, 0.0
        %424 = vst.msk [vmem:[%s421 + $0x10] sm:$0x3] %vm419, 0.0
        %vm425 = vcmask 24576
        %426 = vst.msk [vmem:[#allocation2] sm:$0x1] %vm425, 0.0
        %427 = vst.msk [vmem:[#allocation2 + $0x18] sm:$0x1] %vm425, 0.0
        %428 = vst.msk [vmem:[#allocation2 + $0x30] sm:$0x1] %vm425, 0.0
        %429 = vst.msk [vmem:[#allocation2 + $0x48] sm:$0x1] %vm425, 0.0
        %430 = vst.msk [vmem:[#allocation2 + $0x60] sm:$0x1] %vm425, 0.0
        %431 = vst.msk [vmem:[#allocation2 + $0x78] sm:$0x1] %vm425, 0.0
        %432 = vst.msk [vmem:[#allocation2 + $0x90] sm:$0x1] %vm425, 0.0
        %433 = vst.msk [vmem:[#allocation2 + $0xa8] sm:$0x1] %vm425, 0.0
        %434 = vst.msk [vmem:[#allocation2 + $0xc0] sm:$0x1] %vm425, 0.0
        %435 = vst.msk [vmem:[#allocation2 + $0xd8] sm:$0x1] %vm425, 0.0
        %436 = vst.msk [vmem:[#allocation2 + $0xf0] sm:$0x1] %vm425, 0.0
        %437 = vst.msk [vmem:[#allocation2 + $0x108] sm:$0x1] %vm425, 0.0
        %438 = vst.msk [vmem:[#allocation2 + $0x120] sm:$0x1] %vm425, 0.0
        %439 = vst.msk [vmem:[#allocation2 + $0x138] sm:$0x1] %vm425, 0.0
        %440 = vst.msk [vmem:[#allocation2 + $0x150] sm:$0x1] %vm425, 0.0
        %441 = vst.msk [vmem:[#allocation2 + $0x168] sm:$0x1] %vm425, 0.0
        %442 = vst.msk [vmem:[#allocation2 + $0x180] sm:$0x1] %vm425, 0.0
        %443 = vst.msk [vmem:[#allocation2 + $0x198] sm:$0x1] %vm425, 0.0
        %444 = vst.msk [vmem:[#allocation2 + $0x11] sm:$0x1] %vm425, 0.0
        %445 = vst.msk [vmem:[#allocation2 + $0x29] sm:$0x1] %vm425, 0.0
        %446 = vst.msk [vmem:[#allocation2 + $0x41] sm:$0x1] %vm425, 0.0
        %447 = vst.msk [vmem:[#allocation2 + $0x59] sm:$0x1] %vm425, 0.0
        %448 = vst.msk [vmem:[#allocation2 + $0x71] sm:$0x1] %vm425, 0.0
        %449 = vst.msk [vmem:[#allocation2 + $0x89] sm:$0x1] %vm425, 0.0
        %450 = vst.msk [vmem:[#allocation2 + $0xa1] sm:$0x1] %vm425, 0.0
        %451 = vst.msk [vmem:[#allocation2 + $0xb9] sm:$0x1] %vm425, 0.0
        %452 = vst.msk [vmem:[#allocation2 + $0xd1] sm:$0x1] %vm425, 0.0
        %453 = vst.msk [vmem:[#allocation2 + $0xe9] sm:$0x1] %vm425, 0.0
        %454 = vst.msk [vmem:[#allocation2 + $0x101] sm:$0x1] %vm425, 0.0
        %455 = vst.msk [vmem:[#allocation2 + $0x119] sm:$0x1] %vm425, 0.0
        %456 = vst.msk [vmem:[#allocation2 + $0x131] sm:$0x1] %vm425, 0.0
        %457 = vst.msk [vmem:[#allocation2 + $0x149] sm:$0x1] %vm425, 0.0
        %458 = vst.msk [vmem:[#allocation2 + $0x161] sm:$0x1] %vm425, 0.0
        %459 = vst.msk [vmem:[#allocation2 + $0x179] sm:$0x1] %vm425, 0.0
        %460 = vst.msk [vmem:[#allocation2 + $0x191] sm:$0x1] %vm425, 0.0
        %461 = vst.msk [vmem:[#allocation2 + $0x1a9] sm:$0x1] %vm425, 0.0
        %vm462 = vcmask 60416
        %463 = vst.msk [vmem:[#allocation3] sm:$0xf] %vm462, 0
        %vm464 = vcmask 57344
        %465 = vst.msk [vmem:[#allocation3 + $0x4] sm:$0x1] %vm464, 0
        %s466 = scalar_lea.vmem [#allocation3], 72
        %467 = vst.msk [vmem:[%s466] sm:$0xf] %vm462, 0
        %468 = vst.msk [vmem:[%s466 + $0x4] sm:$0x1] %vm464, 0
        %vm469 = vcmask 57344
        %vm470 = vsmask.f32 256
        %vm471 = vmand %vm469, %vm470
        %v472 = vld [vmem:[#allocation3] sm:$0x1]
        %v473 = vsel %vm471, 0, %v472
        %474 = vst [vmem:[#allocation3] sm:$0x1] %v473
        %v475 = vld [vmem:[#allocation3 + $0x8] sm:$0x1]
        %v476 = vsel %vm471, 0, %v475
        %477 = vst [vmem:[#allocation3 + $0x8] sm:$0x1] %v476
        %v478 = vld [vmem:[#allocation3 + $0x10] sm:$0x1]
        %v479 = vsel %vm471, 0, %v478
        %480 = vst [vmem:[#allocation3 + $0x10] sm:$0x1] %v479
        %v481 = vld [vmem:[#allocation3 + $0x18] sm:$0x1]
        %v482 = vsel %vm471, 0, %v481
        %483 = vst [vmem:[#allocation3 + $0x18] sm:$0x1] %v482
        %v484 = vld [vmem:[#allocation3 + $0x20] sm:$0x1]
        %v485 = vsel %vm471, 0, %v484
        %486 = vst [vmem:[#allocation3 + $0x20] sm:$0x1] %v485
        %v487 = vld [vmem:[#allocation3 + $0x28] sm:$0x1]
        %v488 = vsel %vm471, 0, %v487
        %489 = vst [vmem:[#allocation3 + $0x28] sm:$0x1] %v488
        %v490 = vld [vmem:[#allocation3 + $0x30] sm:$0x1]
        %v491 = vsel %vm471, 0, %v490
        %492 = vst [vmem:[#allocation3 + $0x30] sm:$0x1] %v491
        %v493 = vld [vmem:[#allocation3 + $0x38] sm:$0x1]
        %v494 = vsel %vm471, 0, %v493
        %495 = vst [vmem:[#allocation3 + $0x38] sm:$0x1] %v494
        %v496 = vld [vmem:[#allocation3 + $0x40] sm:$0x1]
        %v497 = vsel %vm471, 0, %v496
        %498 = vst [vmem:[#allocation3 + $0x40] sm:$0x1] %v497
        %v499 = vld [vmem:[#allocation3 + $0x48] sm:$0x1]
        %v500 = vsel %vm471, 0, %v499
        %501 = vst [vmem:[#allocation3 + $0x48] sm:$0x1] %v500
        %vm502 = vsmask.f32 7938
        %vm503 = vmand %vm469, %vm502
        %v504 = vld [vmem:[#allocation3 + $0x4] sm:$0x1]
        %v505 = vsel %vm503, 0, %v504
        %506 = vst [vmem:[#allocation3 + $0x4] sm:$0x1] %v505
        %v507 = vld [vmem:[#allocation3 + $0xc] sm:$0x1]
        %v508 = vsel %vm503, 0, %v507
        %509 = vst [vmem:[#allocation3 + $0xc] sm:$0x1] %v508
        %v510 = vld [vmem:[#allocation3 + $0x14] sm:$0x1]
        %v511 = vsel %vm503, 0, %v510
        %512 = vst [vmem:[#allocation3 + $0x14] sm:$0x1] %v511
        %v513 = vld [vmem:[#allocation3 + $0x1c] sm:$0x1]
        %v514 = vsel %vm503, 0, %v513
        %515 = vst [vmem:[#allocation3 + $0x1c] sm:$0x1] %v514
        %v516 = vld [vmem:[#allocation3 + $0x24] sm:$0x1]
        %v517 = vsel %vm503, 0, %v516
        %518 = vst [vmem:[#allocation3 + $0x24] sm:$0x1] %v517
        %v519 = vld [vmem:[#allocation3 + $0x2c] sm:$0x1]
        %v520 = vsel %vm503, 0, %v519
        %521 = vst [vmem:[#allocation3 + $0x2c] sm:$0x1] %v520
        %v522 = vld [vmem:[#allocation3 + $0x34] sm:$0x1]
        %v523 = vsel %vm503, 0, %v522
        %524 = vst [vmem:[#allocation3 + $0x34] sm:$0x1] %v523
        %v525 = vld [vmem:[#allocation3 + $0x3c] sm:$0x1]
        %v526 = vsel %vm503, 0, %v525
        %527 = vst [vmem:[#allocation3 + $0x3c] sm:$0x1] %v526
        %v528 = vld [vmem:[#allocation3 + $0x44] sm:$0x1]
        %v529 = vsel %vm503, 0, %v528
        %530 = vst [vmem:[#allocation3 + $0x44] sm:$0x1] %v529
        %v531 = vld [vmem:[#allocation3 + $0x4c] sm:$0x1]
        %v532 = vsel %vm503, 0, %v531
        %533 = vst [vmem:[#allocation3 + $0x4c] sm:$0x1] %v532
        %v534 = vld [vmem:[%s350] sm:$0xf]
        %v535 = vld [vmem:[%s350 + $0x4] sm:$0xf]
        %v536 = vld [vmem:[%s350 + $0x8] sm:$0xf]
        %v537 = vld [vmem:[%s350 + $0xc] sm:$0xf]
        %v538 = vld [vmem:[%s350 + $0x10] sm:$0xf]
        %v539 = vld [vmem:[%s350 + $0x14] sm:$0xf]
        %v540 = vld [vmem:[%s350 + $0x18] sm:$0xf]
        %v541 = vld [vmem:[%s350 + $0x1c] sm:$0xf]
        %v542 = vld [vmem:[%s7] sm:$0x3]
        %v551 = vunpack.c.l.b16 %v534
        %v552 = vunpack.c.l.b16 %v535
        %v553 = vunpack.c.l.b16 %v536
        %v554 = vunpack.c.l.b16 %v537
        %v555 = vunpack.c.l.b16 %v538
        %v556 = vunpack.c.l.b16 %v539
        %v557 = vunpack.c.l.b16 %v540
        %v558 = vunpack.c.l.b16 %v541
        %v559 = vpack.c.b16 %v552, %v551
        %v560 = vpack.c.b16 %v554, %v553
        %v561 = vpack.c.b16 %v556, %v555
        %v562 = vpack.c.b16 %v558, %v557
        %v564 = vsel %vm416, %v559, 0
        %v567 = vsel %vm416, %v560, 0
        %v570 = vsel %vm416, %v561, 0
        %v573 = vsel %vm416, %v562, 0
        %vm575 = vcmask 1041408
        %v577 = vsel %vm575, %v542, 0
        %579 = vmatprep.subr.bf16.mxu0 0
        %580 = vmatpush1.bf16.msra.mxu0 %v577
        %581 = vmatprep.subr.bf16.mxu0 0
        %582 = vmatpush1.bf16.msra.mxu0 0
        %583 = vmatprep.subr.bf16.mxu0 0
        %584 = vmatpush1.bf16.msra.mxu0 0
        %585 = vmatprep.subr.bf16.mxu0 0
        %586 = vmatpush1.bf16.msra.mxu0 0
        %587 = vmatprep.subr.bf16.mxu0 0
        %588 = vmatpush1.bf16.msra.mxu0 0
        %589 = vmatprep.subr.bf16.mxu0 0
        %590 = vmatpush1.bf16.msra.mxu0 0
        %591 = vmatprep.subr.bf16.mxu0 0
        %592 = vmatpush1.bf16.msra.mxu0 0
        %593 = vmatprep.subr.bf16.mxu0 0
        %594 = vmatpush1.bf16.msra.mxu0 0
        %595 = vmatprep.subr.bf16.mxu0 0
        %596 = vmatpush1.bf16.msra.mxu0 0
        %597 = vmatprep.subr.bf16.mxu0 0
        %598 = vmatpush1.bf16.msra.mxu0 0
        %599 = vmatprep.subr.bf16.mxu0 0
        %600 = vmatpush1.bf16.msra.mxu0 0
        %601 = vmatprep.subr.bf16.mxu0 0
        %602 = vmatpush1.bf16.msra.mxu0 0
        %603 = vmatprep.subr.bf16.mxu0 0
        %604 = vmatpush1.bf16.msra.mxu0 0
        %605 = vmatprep.subr.bf16.mxu0 0
        %606 = vmatpush1.bf16.msra.mxu0 0
        %607 = vmatprep.subr.bf16.mxu0 0
        %608 = vmatpush1.bf16.msra.mxu0 0
        %609 = vmatprep.subr.bf16.mxu0 0
        %610 = vmatpush1.bf16.msra.mxu0 0
        %611 = vmatprep.mubr.bf16.mxu0 0
        %612 = vmatmul.mubr.bf16.gmra.mrb[0].mxu0 %v564
        %v613 = vpop.f32.mrb[0].mxu0
        %v614 = vadd.f32 0.0, %v613
        %v615 = vpop.f32.mrb[0].mxu0
        %v616 = vpop.f32.mrb[0].mxu0
        %v617 = vadd.f32 0.0, %v616
        %v618 = vpop.f32.mrb[0].mxu0
        %619 = vmatprep.mubr.bf16.mxu0 0
        %620 = vmatmul.mubr.bf16.gmra.mrb[0].mxu0 %v567
        %v621 = vpop.f32.mrb[0].mxu0
        %v622 = vadd.f32 0.0, %v621
        %v623 = vpop.f32.mrb[0].mxu0
        %v624 = vpop.f32.mrb[0].mxu0
        %v625 = vadd.f32 0.0, %v624
        %v626 = vpop.f32.mrb[0].mxu0
        %627 = vmatprep.mubr.bf16.mxu0 0
        %628 = vmatmul.mubr.bf16.gmra.mrb[0].mxu0 %v570
        %v629 = vpop.f32.mrb[0].mxu0
        %v630 = vadd.f32 0.0, %v629
        %v631 = vpop.f32.mrb[0].mxu0
        %v632 = vpop.f32.mrb[0].mxu0
        %v633 = vadd.f32 0.0, %v632
        %v634 = vpop.f32.mrb[0].mxu0
        %635 = vmatprep.mubr.bf16.mxu0 0
        %636 = vmatmul.mubr.bf16.gmra.mrb[0].mxu0 %v573
        %v637 = vpop.f32.mrb[0].mxu0
        %v638 = vadd.f32 0.0, %v637
        %v639 = vpop.f32.mrb[0].mxu0
        %v640 = vpop.f32.mrb[0].mxu0
        %v641 = vadd.f32 0.0, %v640
        %v642 = vpop.f32.mrb[0].mxu0
        %643 = vdwg.mxu0
        %v644 = vld [vmem:[%s6] sm:$0x1]
        %v646 = vlaneseq
        %v647 = vshrl.u32 %v646, 7
        %v648 = vsub.s32 0, %v647
        %v649 = vrot.slane %v644, %v648
        %v651 = vadd.f32 %v614, %v649
        %v652 = vadd.f32 %v617, %v649
        %v653 = vadd.f32 %v622, %v649
        %v654 = vadd.f32 %v625, %v649
        %v655 = vadd.f32 %v630, %v649
        %v656 = vadd.f32 %v633, %v649
        %v657 = vadd.f32 %v638, %v649
        %v658 = vadd.f32 %v641, %v649
        %v659 = vld [vmem:[%s1] sm:$0x1]
        %v661 = vlaneseq
        %v662 = vshrl.u32 %v661, 7
        %v663 = vsub.s32 0, %v662
        %v664 = vrot.slane %v659, %v663
        %v666 = vmul.f32 %v384, %v664
        %v667 = vmul.f32 %v385, %v664
        %v668 = vmul.f32 %v386, %v664
        %v669 = vmul.f32 %v387, %v664
        %v670 = vmul.f32 %v388, %v664
        %v671 = vmul.f32 %v389, %v664
        %v672 = vmul.f32 %v390, %v664
        %v673 = vmul.f32 %v391, %v664
        %v674 = vmul.f32 %v392, %v664
        %v675 = vmul.f32 %v393, %v664
        %v676 = vmul.f32 %v394, %v664
        %v677 = vmul.f32 %v395, %v664
        %v678 = vmul.f32 %v396, %v664
        %v679 = vmul.f32 %v397, %v664
        %v680 = vmul.f32 %v398, %v664
        %v681 = vmul.f32 %v399, %v664
        %v682 = vmul.f32 %v400, %v664
        %v683 = vmul.f32 %v401, %v664
        %v684 = vmul.f32 %v402, %v664
        %v685 = vmul.f32 %v403, %v664
        %v686 = vmul.f32 %v404, %v664
        %v687 = vmul.f32 %v405, %v664
        %v688 = vmul.f32 %v406, %v664
        %v689 = vmul.f32 %v407, %v664
        %v690 = vmul.f32 %v408, %v664
        %v691 = vmul.f32 %v409, %v664
        %v692 = vmul.f32 %v410, %v664
        %v693 = vmul.f32 %v411, %v664
        %v694 = vmul.f32 %v412, %v664
        %v695 = vmul.f32 %v413, %v664
        %v696 = vmul.f32 %v414, %v664
        %v697 = vmul.f32 %v415, %v664
        %v698 = vld [vmem:[%s2] sm:$0x1]
        %v700 = vlaneseq
        %v701 = vshrl.u32 %v700, 7
        %v702 = vsub.s32 0, %v701
        %v703 = vrot.slane %v698, %v702
        %v705 = vadd.f32 %v666, %v703
        %v706 = vadd.f32 %v667, %v703
        %v707 = vadd.f32 %v668, %v703
        %v708 = vadd.f32 %v669, %v703
        %v709 = vadd.f32 %v670, %v703
        %v710 = vadd.f32 %v671, %v703
        %v711 = vadd.f32 %v672, %v703
        %v712 = vadd.f32 %v673, %v703
        %v713 = vadd.f32 %v674, %v703
        %v714 = vadd.f32 %v675, %v703
        %v715 = vadd.f32 %v676, %v703
        %v716 = vadd.f32 %v677, %v703
        %v717 = vadd.f32 %v678, %v703
        %v718 = vadd.f32 %v679, %v703
        %v719 = vadd.f32 %v680, %v703
        %v720 = vadd.f32 %v681, %v703
        %v721 = vadd.f32 %v682, %v703
        %v722 = vadd.f32 %v683, %v703
        %v723 = vadd.f32 %v684, %v703
        %v724 = vadd.f32 %v685, %v703
        %v725 = vadd.f32 %v686, %v703
        %v726 = vadd.f32 %v687, %v703
        %v727 = vadd.f32 %v688, %v703
        %v728 = vadd.f32 %v689, %v703
        %v729 = vadd.f32 %v690, %v703
        %v730 = vadd.f32 %v691, %v703
        %v731 = vadd.f32 %v692, %v703
        %v732 = vadd.f32 %v693, %v703
        %v733 = vadd.f32 %v694, %v703
        %v734 = vadd.f32 %v695, %v703
        %v735 = vadd.f32 %v696, %v703
        %v736 = vadd.f32 %v697, %v703
        %v737 = vmax.f32 %v705, 0.0
        %v738 = vmax.f32 %v706, 0.0
        %v739 = vmax.f32 %v707, 0.0
        %v740 = vmax.f32 %v708, 0.0
        %v741 = vmax.f32 %v709, 0.0
        %v742 = vmax.f32 %v710, 0.0
        %v743 = vmax.f32 %v711, 0.0
        %v744 = vmax.f32 %v712, 0.0
        %v745 = vmax.f32 %v713, 0.0
        %v746 = vmax.f32 %v714, 0.0
        %v747 = vmax.f32 %v715, 0.0
        %v748 = vmax.f32 %v716, 0.0
        %v749 = vmax.f32 %v717, 0.0
        %v750 = vmax.f32 %v718, 0.0
        %v751 = vmax.f32 %v719, 0.0
        %v752 = vmax.f32 %v720, 0.0
        %v753 = vmax.f32 %v721, 0.0
        %v754 = vmax.f32 %v722, 0.0
        %v755 = vmax.f32 %v723, 0.0
        %v756 = vmax.f32 %v724, 0.0
        %v757 = vmax.f32 %v725, 0.0
        %v758 = vmax.f32 %v726, 0.0
        %v759 = vmax.f32 %v727, 0.0
        %v760 = vmax.f32 %v728, 0.0
        %v761 = vmax.f32 %v729, 0.0
        %v762 = vmax.f32 %v730, 0.0
        %v763 = vmax.f32 %v731, 0.0
        %v764 = vmax.f32 %v732, 0.0
        %v765 = vmax.f32 %v733, 0.0
        %v766 = vmax.f32 %v734, 0.0
        %v767 = vmax.f32 %v735, 0.0
        %v768 = vmax.f32 %v736, 0.0
        %s769 = scalar_lea.vmem [#allocation2], 24
        %770 = vst.msk [vmem:[%s769 + $0x1] sm:$0xff] %vm416, %v737
        %771 = vst.msk [vmem:[%s769 + $0x9] sm:$0xff] %vm416, %v738
        %772 = vst.msk [vmem:[%s769 + $0x19] sm:$0xff] %vm416, %v739
        %773 = vst.msk [vmem:[%s769 + $0x21] sm:$0xff] %vm416, %v740
        %774 = vst.msk [vmem:[%s769 + $0x31] sm:$0xff] %vm416, %v741
        %775 = vst.msk [vmem:[%s769 + $0x39] sm:$0xff] %vm416, %v742
        %776 = vst.msk [vmem:[%s769 + $0x49] sm:$0xff] %vm416, %v743
        %777 = vst.msk [vmem:[%s769 + $0x51] sm:$0xff] %vm416, %v744
        %778 = vst.msk [vmem:[%s769 + $0x61] sm:$0xff] %vm416, %v745
        %779 = vst.msk [vmem:[%s769 + $0x69] sm:$0xff] %vm416, %v746
        %780 = vst.msk [vmem:[%s769 + $0x79] sm:$0xff] %vm416, %v747
        %781 = vst.msk [vmem:[%s769 + $0x81] sm:$0xff] %vm416, %v748
        %782 = vst.msk [vmem:[%s769 + $0x91] sm:$0xff] %vm416, %v749
        %783 = vst.msk [vmem:[%s769 + $0x99] sm:$0xff] %vm416, %v750
        %784 = vst.msk [vmem:[%s769 + $0xa9] sm:$0xff] %vm416, %v751
        %785 = vst.msk [vmem:[%s769 + $0xb1] sm:$0xff] %vm416, %v752
        %786 = vst.msk [vmem:[%s769 + $0xc1] sm:$0xff] %vm416, %v753
        %787 = vst.msk [vmem:[%s769 + $0xc9] sm:$0xff] %vm416, %v754
        %788 = vst.msk [vmem:[%s769 + $0xd9] sm:$0xff] %vm416, %v755
        %789 = vst.msk [vmem:[%s769 + $0xe1] sm:$0xff] %vm416, %v756
        %790 = vst.msk [vmem:[%s769 + $0xf1] sm:$0xff] %vm416, %v757
        %791 = vst.msk [vmem:[%s769 + $0xf9] sm:$0xff] %vm416, %v758
        %792 = vst.msk [vmem:[%s769 + $0x109] sm:$0xff] %vm416, %v759
        %793 = vst.msk [vmem:[%s769 + $0x111] sm:$0xff] %vm416, %v760
        %794 = vst.msk [vmem:[%s769 + $0x121] sm:$0xff] %vm416, %v761
        %795 = vst.msk [vmem:[%s769 + $0x129] sm:$0xff] %vm416, %v762
        %796 = vst.msk [vmem:[%s769 + $0x139] sm:$0xff] %vm416, %v763
        %797 = vst.msk [vmem:[%s769 + $0x141] sm:$0xff] %vm416, %v764
        %798 = vst.msk [vmem:[%s769 + $0x151] sm:$0xff] %vm416, %v765
        %799 = vst.msk [vmem:[%s769 + $0x159] sm:$0xff] %vm416, %v766
        %800 = vst.msk [vmem:[%s769 + $0x169] sm:$0xff] %vm416, %v767
        %801 = vst.msk [vmem:[%s769 + $0x171] sm:$0xff] %vm416, %v768
        %v802 = vld [vmem:[%s3] sm:$0xf]
        %v803 = vld [vmem:[%s3 + $0x4] sm:$0xf]
        %v804 = vld [vmem:[%s3 + $0x8] sm:$0xf]
        %v805 = vld [vmem:[%s3 + $0xc] sm:$0xf]
        %v806 = vld [vmem:[%s3 + $0x10] sm:$0x3]
        %v807 = vld [vmem:[#allocation2] ss:$2 sm:$0xff]
        %s808 = scalar_lea.vmem [#allocation2], 16
        %v809 = vld [vmem:[%s808] ss:$2 sm:$0x1]
        %s810 = scalar_lea.vmem [#allocation2], 48
        %v811 = vld [vmem:[%s810] ss:$2 sm:$0xff]
        %s812 = scalar_lea.vmem [#allocation2], 64
        %v813 = vld [vmem:[%s812] ss:$2 sm:$0x1]
        %s814 = scalar_lea.vmem [#allocation2], 96
        %v815 = vld [vmem:[%s814] ss:$2 sm:$0xff]
        %s816 = scalar_lea.vmem [#allocation2], 112
        %v817 = vld [vmem:[%s816] ss:$2 sm:$0x1]
        %s818 = scalar_lea.vmem [#allocation2], 144
        %v819 = vld [vmem:[%s818] ss:$2 sm:$0xff]
        %s820 = scalar_lea.vmem [#allocation2], 160
        %v821 = vld [vmem:[%s820] ss:$2 sm:$0x1]
        %s822 = scalar_lea.vmem [#allocation2], 192
        %v823 = vld [vmem:[%s822] ss:$2 sm:$0xff]
        %s824 = scalar_lea.vmem [#allocation2], 208
        %v825 = vld [vmem:[%s824] ss:$2 sm:$0x1]
        %s826 = scalar_lea.vmem [#allocation2], 240
        %v827 = vld [vmem:[%s826] ss:$2 sm:$0xff]
        %s828 = scalar_lea.vmem [#allocation2], 256
        %v829 = vld [vmem:[%s828] ss:$2 sm:$0x1]
        %s830 = scalar_lea.vmem [#allocation2], 288
        %v831 = vld [vmem:[%s830] ss:$2 sm:$0xff]
        %s832 = scalar_lea.vmem [#allocation2], 304
        %v833 = vld [vmem:[%s832] ss:$2 sm:$0x1]
        %s834 = scalar_lea.vmem [#allocation2], 336
        %v835 = vld [vmem:[%s834] ss:$2 sm:$0xff]
        %s836 = scalar_lea.vmem [#allocation2], 352
        %v837 = vld [vmem:[%s836] ss:$2 sm:$0x1]
        %s838 = scalar_lea.vmem [#allocation2], 384
        %v839 = vld [vmem:[%s838] ss:$2 sm:$0xff]
        %s840 = scalar_lea.vmem [#allocation2], 400
        %v841 = vld [vmem:[%s840] ss:$2 sm:$0x1]
        %v842 = vpack.c.bf16 %v809, %v807
        %v843 = vpack.c.bf16 %v813, %v811
        %v844 = vpack.c.bf16 %v817, %v815
        %v845 = vpack.c.bf16 %v821, %v819
        %v846 = vpack.c.bf16 %v825, %v823
        %v847 = vpack.c.bf16 %v829, %v827
        %v848 = vpack.c.bf16 %v833, %v831
        %v849 = vpack.c.bf16 %v837, %v835
        %v850 = vpack.c.bf16 %v841, %v839
        %s851 = scalar_lea.vmem [#allocation2], 1
        %v852 = vld [vmem:[%s851] ss:$2 sm:$0xff]
        %s853 = scalar_lea.vmem [#allocation2], 49
        %v854 = vld [vmem:[%s853] ss:$2 sm:$0xff]
        %s855 = scalar_lea.vmem [#allocation2], 97
        %v856 = vld [vmem:[%s855] ss:$2 sm:$0xff]
        %s857 = scalar_lea.vmem [#allocation2], 145
        %v858 = vld [vmem:[%s857] ss:$2 sm:$0xff]
        %s859 = scalar_lea.vmem [#allocation2], 193
        %v860 = vld [vmem:[%s859] ss:$2 sm:$0xff]
        %s861 = scalar_lea.vmem [#allocation2], 241
        %v862 = vld [vmem:[%s861] ss:$2 sm:$0xff]
        %s863 = scalar_lea.vmem [#allocation2], 289
        %v864 = vld [vmem:[%s863] ss:$2 sm:$0xff]
        %s865 = scalar_lea.vmem [#allocation2], 337
        %v866 = vld [vmem:[%s865] ss:$2 sm:$0xff]
        %s867 = scalar_lea.vmem [#allocation2], 385
        %v868 = vld [vmem:[%s867] ss:$2 sm:$0xff]
        %v869 = vpack.c.bf16 %v852, %v852
        %v870 = vpack.c.bf16 %v854, %v854
        %v871 = vpack.c.bf16 %v856, %v856
        %v872 = vpack.c.bf16 %v858, %v858
        %v873 = vpack.c.bf16 %v860, %v860
        %v874 = vpack.c.bf16 %v862, %v862
        %v875 = vpack.c.bf16 %v864, %v864
        %v876 = vpack.c.bf16 %v866, %v866
        %v877 = vpack.c.bf16 %v868, %v868
        %v878 = vld [vmem:[%s769] ss:$2 sm:$0xff]
        %s879 = scalar_lea.vmem %s769, 16 [#allocation2]
        %v880 = vld [vmem:[%s879] ss:$2 sm:$0x1]
        %s881 = scalar_lea.vmem %s769, 48 [#allocation2]
        %v882 = vld [vmem:[%s881] ss:$2 sm:$0xff]
        %s883 = scalar_lea.vmem %s769, 64 [#allocation2]
        %v884 = vld [vmem:[%s883] ss:$2 sm:$0x1]
        %s885 = scalar_lea.vmem %s769, 96 [#allocation2]
        %v886 = vld [vmem:[%s885] ss:$2 sm:$0xff]
        %s887 = scalar_lea.vmem %s769, 112 [#allocation2]
        %v888 = vld [vmem:[%s887] ss:$2 sm:$0x1]
        %s889 = scalar_lea.vmem %s769, 144 [#allocation2]
        %v890 = vld [vmem:[%s889] ss:$2 sm:$0xff]
        %s891 = scalar_lea.vmem %s769, 160 [#allocation2]
        %v892 = vld [vmem:[%s891] ss:$2 sm:$0x1]
        %s893 = scalar_lea.vmem %s769, 192 [#allocation2]
        %v894 = vld [vmem:[%s893] ss:$2 sm:$0xff]
        %s895 = scalar_lea.vmem %s769, 208 [#allocation2]
        %v896 = vld [vmem:[%s895] ss:$2 sm:$0x1]
        %s897 = scalar_lea.vmem %s769, 240 [#allocation2]
        %v898 = vld [vmem:[%s897] ss:$2 sm:$0xff]
        %s899 = scalar_lea.vmem %s769, 256 [#allocation2]
        %v900 = vld [vmem:[%s899] ss:$2 sm:$0x1]
        %s901 = scalar_lea.vmem %s769, 288 [#allocation2]
        %v902 = vld [vmem:[%s901] ss:$2 sm:$0xff]
        %s903 = scalar_lea.vmem %s769, 304 [#allocation2]
        %v904 = vld [vmem:[%s903] ss:$2 sm:$0x1]
        %s905 = scalar_lea.vmem %s769, 336 [#allocation2]
        %v906 = vld [vmem:[%s905] ss:$2 sm:$0xff]
        %s907 = scalar_lea.vmem %s769, 352 [#allocation2]
        %v908 = vld [vmem:[%s907] ss:$2 sm:$0x1]
        %v909 = vpack.c.bf16 %v880, %v878
        %v910 = vpack.c.bf16 %v884, %v882
        %v911 = vpack.c.bf16 %v888, %v886
        %v912 = vpack.c.bf16 %v892, %v890
        %v913 = vpack.c.bf16 %v896, %v894
        %v914 = vpack.c.bf16 %v900, %v898
        %v915 = vpack.c.bf16 %v904, %v902
        %v916 = vpack.c.bf16 %v908, %v906
        %s917 = scalar_lea.vmem %s769, 1 [#allocation2]
        %v918 = vld [vmem:[%s917] ss:$2 sm:$0xff]
        %s919 = scalar_lea.vmem %s769, 49 [#allocation2]
        %v920 = vld [vmem:[%s919] ss:$2 sm:$0xff]
        %s921 = scalar_lea.vmem %s769, 97 [#allocation2]
        %v922 = vld [vmem:[%s921] ss:$2 sm:$0xff]
        %s923 = scalar_lea.vmem %s769, 145 [#allocation2]
        %v924 = vld [vmem:[%s923] ss:$2 sm:$0xff]
        %s925 = scalar_lea.vmem %s769, 193 [#allocation2]
        %v926 = vld [vmem:[%s925] ss:$2 sm:$0xff]
        %s927 = scalar_lea.vmem %s769, 241 [#allocation2]
        %v928 = vld [vmem:[%s927] ss:$2 sm:$0xff]
        %s929 = scalar_lea.vmem %s769, 289 [#allocation2]
        %v930 = vld [vmem:[%s929] ss:$2 sm:$0xff]
        %s931 = scalar_lea.vmem %s769, 337 [#allocation2]
        %v932 = vld [vmem:[%s931] ss:$2 sm:$0xff]
        %v933 = vpack.c.bf16 %v918, %v918
        %v934 = vpack.c.bf16 %v920, %v920
        %v935 = vpack.c.bf16 %v922, %v922
        %v936 = vpack.c.bf16 %v924, %v924
        %v937 = vpack.c.bf16 %v926, %v926
        %v938 = vpack.c.bf16 %v928, %v928
        %v939 = vpack.c.bf16 %v930, %v930
        %v940 = vpack.c.bf16 %v932, %v932
        %949 = vrot.lane.b32.xlu0 %v869, 4
        %v950 = vpop.permute.xlu0 %949
        %951 = vrot.lane.b32.xlu0 %v870, 4
        %v952 = vpop.permute.xlu0 %951
        %953 = vrot.lane.b32.xlu0 %v871, 4
        %v954 = vpop.permute.xlu0 %953
        %955 = vrot.lane.b32.xlu0 %v872, 4
        %v956 = vpop.permute.xlu0 %955
        %957 = vrot.lane.b32.xlu0 %v873, 4
        %v958 = vpop.permute.xlu0 %957
        %959 = vrot.lane.b32.xlu0 %v874, 4
        %v960 = vpop.permute.xlu0 %959
        %961 = vrot.lane.b32.xlu0 %v875, 4
        %v962 = vpop.permute.xlu0 %961
        %963 = vrot.lane.b32.xlu0 %v876, 4
        %v964 = vpop.permute.xlu0 %963
        %v966 = vshrl.u32 %v842, 16
        %v968 = vshll.u32 %v842, 16
        %v970 = vrot.slane %v968, 1
        %v971 = vor.u32 %v966, %v970
        %v973 = vshrl.u32 %v843, 16
        %v975 = vshll.u32 %v843, 16
        %v977 = vrot.slane %v975, 1
        %v978 = vor.u32 %v973, %v977
        %v980 = vshrl.u32 %v844, 16
        %v982 = vshll.u32 %v844, 16
        %v984 = vrot.slane %v982, 1
        %v985 = vor.u32 %v980, %v984
        %v987 = vshrl.u32 %v845, 16
        %v989 = vshll.u32 %v845, 16
        %v991 = vrot.slane %v989, 1
        %v992 = vor.u32 %v987, %v991
        %v994 = vshrl.u32 %v846, 16
        %v996 = vshll.u32 %v846, 16
        %v998 = vrot.slane %v996, 1
        %v999 = vor.u32 %v994, %v998
        %v1001 = vshrl.u32 %v847, 16
        %v1003 = vshll.u32 %v847, 16
        %v1005 = vrot.slane %v1003, 1
        %v1006 = vor.u32 %v1001, %v1005
        %v1008 = vshrl.u32 %v848, 16
        %v1010 = vshll.u32 %v848, 16
        %v1012 = vrot.slane %v1010, 1
        %v1013 = vor.u32 %v1008, %v1012
        %v1015 = vshrl.u32 %v849, 16
        %v1017 = vshll.u32 %v849, 16
        %v1019 = vrot.slane %v1017, 1
        %v1020 = vor.u32 %v1015, %v1019
        %1021 = vrot.lane.b32.xlu0 %v971, 8
        %v1022 = vpop.permute.xlu0 %1021
        %1023 = vrot.lane.b32.xlu0 %v978, 8
        %v1024 = vpop.permute.xlu0 %1023
        %1025 = vrot.lane.b32.xlu0 %v985, 8
        %v1026 = vpop.permute.xlu0 %1025
        %1027 = vrot.lane.b32.xlu0 %v992, 8
        %v1028 = vpop.permute.xlu0 %1027
        %1029 = vrot.lane.b32.xlu0 %v999, 8
        %v1030 = vpop.permute.xlu0 %1029
        %1031 = vrot.lane.b32.xlu0 %v1006, 8
        %v1032 = vpop.permute.xlu0 %1031
        %1033 = vrot.lane.b32.xlu0 %v1013, 8
        %v1034 = vpop.permute.xlu0 %1033
        %1035 = vrot.lane.b32.xlu0 %v1020, 8
        %v1036 = vpop.permute.xlu0 %1035
        %1045 = vrot.lane.b32.xlu0 %v909, 12
        %v1046 = vpop.permute.xlu0 %1045
        %1047 = vrot.lane.b32.xlu0 %v910, 12
        %v1048 = vpop.permute.xlu0 %1047
        %1049 = vrot.lane.b32.xlu0 %v911, 12
        %v1050 = vpop.permute.xlu0 %1049
        %1051 = vrot.lane.b32.xlu0 %v912, 12
        %v1052 = vpop.permute.xlu0 %1051
        %1053 = vrot.lane.b32.xlu0 %v913, 12
        %v1054 = vpop.permute.xlu0 %1053
        %1055 = vrot.lane.b32.xlu0 %v914, 12
        %v1056 = vpop.permute.xlu0 %1055
        %1057 = vrot.lane.b32.xlu0 %v915, 12
        %v1058 = vpop.permute.xlu0 %1057
        %1059 = vrot.lane.b32.xlu0 %v916, 12
        %v1060 = vpop.permute.xlu0 %1059
        %1069 = vrot.lane.b32.xlu0 %v933, 16
        %v1070 = vpop.permute.xlu0 %1069
        %1071 = vrot.lane.b32.xlu0 %v934, 16
        %v1072 = vpop.permute.xlu0 %1071
        %1073 = vrot.lane.b32.xlu0 %v935, 16
        %v1074 = vpop.permute.xlu0 %1073
        %1075 = vrot.lane.b32.xlu0 %v936, 16
        %v1076 = vpop.permute.xlu0 %1075
        %1077 = vrot.lane.b32.xlu0 %v937, 16
        %v1078 = vpop.permute.xlu0 %1077
        %1079 = vrot.lane.b32.xlu0 %v938, 16
        %v1080 = vpop.permute.xlu0 %1079
        %1081 = vrot.lane.b32.xlu0 %v939, 16
        %v1082 = vpop.permute.xlu0 %1081
        %1083 = vrot.lane.b32.xlu0 %v940, 16
        %v1084 = vpop.permute.xlu0 %1083
        %v1086 = vshrl.u32 %v909, 16
        %v1088 = vshll.u32 %v909, 16
        %v1090 = vrot.slane %v1088, 1
        %v1091 = vor.u32 %v1086, %v1090
        %v1093 = vshrl.u32 %v910, 16
        %v1095 = vshll.u32 %v910, 16
        %v1097 = vrot.slane %v1095, 1
        %v1098 = vor.u32 %v1093, %v1097
        %v1100 = vshrl.u32 %v911, 16
        %v1102 = vshll.u32 %v911, 16
        %v1104 = vrot.slane %v1102, 1
        %v1105 = vor.u32 %v1100, %v1104
        %v1107 = vshrl.u32 %v912, 16
        %v1109 = vshll.u32 %v912, 16
        %v1111 = vrot.slane %v1109, 1
        %v1112 = vor.u32 %v1107, %v1111
        %v1114 = vshrl.u32 %v913, 16
        %v1116 = vshll.u32 %v913, 16
        %v1118 = vrot.slane %v1116, 1
        %v1119 = vor.u32 %v1114, %v1118
        %v1121 = vshrl.u32 %v914, 16
        %v1123 = vshll.u32 %v914, 16
        %v1125 = vrot.slane %v1123, 1
        %v1126 = vor.u32 %v1121, %v1125
        %v1128 = vshrl.u32 %v915, 16
        %v1130 = vshll.u32 %v915, 16
        %v1132 = vrot.slane %v1130, 1
        %v1133 = vor.u32 %v1128, %v1132
        %v1135 = vshrl.u32 %v916, 16
        %v1137 = vshll.u32 %v916, 16
        %v1139 = vrot.slane %v1137, 1
        %v1140 = vor.u32 %v1135, %v1139
        %1141 = vrot.lane.b32.xlu0 %v1091, 20
        %v1142 = vpop.permute.xlu0 %1141
        %1143 = vrot.lane.b32.xlu0 %v1098, 20
        %v1144 = vpop.permute.xlu0 %1143
        %1145 = vrot.lane.b32.xlu0 %v1105, 20
        %v1146 = vpop.permute.xlu0 %1145
        %1147 = vrot.lane.b32.xlu0 %v1112, 20
        %v1148 = vpop.permute.xlu0 %1147
        %1149 = vrot.lane.b32.xlu0 %v1119, 20
        %v1150 = vpop.permute.xlu0 %1149
        %1151 = vrot.lane.b32.xlu0 %v1126, 20
        %v1152 = vpop.permute.xlu0 %1151
        %1153 = vrot.lane.b32.xlu0 %v1133, 20
        %v1154 = vpop.permute.xlu0 %1153
        %1155 = vrot.lane.b32.xlu0 %v1140, 20
        %v1156 = vpop.permute.xlu0 %1155
        %1165 = vrot.lane.b32.xlu0 %v843, 24
        %v1166 = vpop.permute.xlu0 %1165
        %1167 = vrot.lane.b32.xlu0 %v844, 24
        %v1168 = vpop.permute.xlu0 %1167
        %1169 = vrot.lane.b32.xlu0 %v845, 24
        %v1170 = vpop.permute.xlu0 %1169
        %1171 = vrot.lane.b32.xlu0 %v846, 24
        %v1172 = vpop.permute.xlu0 %1171
        %1173 = vrot.lane.b32.xlu0 %v847, 24
        %v1174 = vpop.permute.xlu0 %1173
        %1175 = vrot.lane.b32.xlu0 %v848, 24
        %v1176 = vpop.permute.xlu0 %1175
        %1177 = vrot.lane.b32.xlu0 %v849, 24
        %v1178 = vpop.permute.xlu0 %1177
        %1179 = vrot.lane.b32.xlu0 %v850, 24
        %v1180 = vpop.permute.xlu0 %1179
        %1182 = vrot.lane.b32.xlu0 %v870, 28
        %v1183 = vpop.permute.xlu0 %1182
        %1184 = vrot.lane.b32.xlu0 %v871, 28
        %v1185 = vpop.permute.xlu0 %1184
        %1186 = vrot.lane.b32.xlu0 %v872, 28
        %v1187 = vpop.permute.xlu0 %1186
        %1188 = vrot.lane.b32.xlu0 %v873, 28
        %v1189 = vpop.permute.xlu0 %1188
        %1190 = vrot.lane.b32.xlu0 %v874, 28
        %v1191 = vpop.permute.xlu0 %1190
        %1192 = vrot.lane.b32.xlu0 %v875, 28
        %v1193 = vpop.permute.xlu0 %1192
        %1194 = vrot.lane.b32.xlu0 %v876, 28
        %v1195 = vpop.permute.xlu0 %1194
        %1196 = vrot.lane.b32.xlu0 %v877, 28
        %v1197 = vpop.permute.xlu0 %1196
        %v1199 = vshrl.u32 %v850, 16
        %v1201 = vshll.u32 %v850, 16
        %v1203 = vrot.slane %v1201, 1
        %v1204 = vor.u32 %v1199, %v1203
        %1205 = vrot.lane.b32.xlu0 %v978, 32
        %v1206 = vpop.permute.xlu0 %1205
        %1207 = vrot.lane.b32.xlu0 %v985, 32
        %v1208 = vpop.permute.xlu0 %1207
        %1209 = vrot.lane.b32.xlu0 %v992, 32
        %v1210 = vpop.permute.xlu0 %1209
        %1211 = vrot.lane.b32.xlu0 %v999, 32
        %v1212 = vpop.permute.xlu0 %1211
        %1213 = vrot.lane.b32.xlu0 %v1006, 32
        %v1214 = vpop.permute.xlu0 %1213
        %1215 = vrot.lane.b32.xlu0 %v1013, 32
        %v1216 = vpop.permute.xlu0 %1215
        %1217 = vrot.lane.b32.xlu0 %v1020, 32
        %v1218 = vpop.permute.xlu0 %1217
        %1219 = vrot.lane.b32.xlu0 %v1204, 32
        %v1220 = vpop.permute.xlu0 %1219
        %v1222 = vsel %vm416, %v842, %v950
        %v1224 = vsel %vm416, %v843, %v952
        %v1226 = vsel %vm416, %v844, %v954
        %v1228 = vsel %vm416, %v845, %v956
        %v1230 = vsel %vm416, %v846, %v958
        %v1232 = vsel %vm416, %v847, %v960
        %v1234 = vsel %vm416, %v848, %v962
        %v1236 = vsel %vm416, %v849, %v964
        %vm1237 = vcmask 64512
        %v1239 = vsel %vm1237, %v1222, %v1022
        %v1241 = vsel %vm1237, %v1224, %v1024
        %v1243 = vsel %vm1237, %v1226, %v1026
        %v1245 = vsel %vm1237, %v1228, %v1028
        %v1247 = vsel %vm1237, %v1230, %v1030
        %v1249 = vsel %vm1237, %v1232, %v1032
        %v1251 = vsel %vm1237, %v1234, %v1034
        %v1253 = vsel %vm1237, %v1236, %v1036
        %vm1254 = vcmask 97280
        %v1256 = vsel %vm1254, %v1239, %v1046
        %v1258 = vsel %vm1254, %v1241, %v1048
        %v1260 = vsel %vm1254, %v1243, %v1050
        %v1262 = vsel %vm1254, %v1245, %v1052
        %v1264 = vsel %vm1254, %v1247, %v1054
        %v1266 = vsel %vm1254, %v1249, %v1056
        %v1268 = vsel %vm1254, %v1251, %v1058
        %v1270 = vsel %vm1254, %v1253, %v1060
        %vm1271 = vcmask 130048
        %v1273 = vsel %vm1271, %v1256, %v1070
        %v1275 = vsel %vm1271, %v1258, %v1072
        %v1277 = vsel %vm1271, %v1260, %v1074
        %v1279 = vsel %vm1271, %v1262, %v1076
        %v1281 = vsel %vm1271, %v1264, %v1078
        %v1283 = vsel %vm1271, %v1266, %v1080
        %v1285 = vsel %vm1271, %v1268, %v1082
        %v1287 = vsel %vm1271, %v1270, %v1084
        %vm1288 = vcmask 162816
        %v1290 = vsel %vm1288, %v1273, %v1142
        %v1292 = vsel %vm1288, %v1275, %v1144
        %v1294 = vsel %vm1288, %v1277, %v1146
        %v1296 = vsel %vm1288, %v1279, %v1148
        %v1298 = vsel %vm1288, %v1281, %v1150
        %v1300 = vsel %vm1288, %v1283, %v1152
        %v1302 = vsel %vm1288, %v1285, %v1154
        %v1304 = vsel %vm1288, %v1287, %v1156
        %vm1305 = vcmask 195584
        %v1307 = vsel %vm1305, %v1290, %v1166
        %v1309 = vsel %vm1305, %v1292, %v1168
        %v1311 = vsel %vm1305, %v1294, %v1170
        %v1313 = vsel %vm1305, %v1296, %v1172
        %v1315 = vsel %vm1305, %v1298, %v1174
        %v1317 = vsel %vm1305, %v1300, %v1176
        %v1319 = vsel %vm1305, %v1302, %v1178
        %v1321 = vsel %vm1305, %v1304, %v1180
        %vm1322 = vcmask 228352
        %v1324 = vsel %vm1322, %v1307, %v1183
        %v1326 = vsel %vm1322, %v1309, %v1185
        %v1328 = vsel %vm1322, %v1311, %v1187
        %v1330 = vsel %vm1322, %v1313, %v1189
        %v1332 = vsel %vm1322, %v1315, %v1191
        %v1334 = vsel %vm1322, %v1317, %v1193
        %v1336 = vsel %vm1322, %v1319, %v1195
        %v1338 = vsel %vm1322, %v1321, %v1197
        %vm1339 = vcmask 261120
        %v1341 = vsel %vm1339, %v1324, %v1206
        %v1343 = vsel %vm1339, %v1326, %v1208
        %v1345 = vsel %vm1339, %v1328, %v1210
        %v1347 = vsel %vm1339, %v1330, %v1212
        %v1349 = vsel %vm1339, %v1332, %v1214
        %v1351 = vsel %vm1339, %v1334, %v1216
        %v1353 = vsel %vm1339, %v1336, %v1218
        %v1355 = vsel %vm1339, %v1338, %v1220
        %v1364 = vunpack.c.l.b16 %v1341
        %v1365 = vunpack.c.l.b16 %v1343
        %v1366 = vunpack.c.l.b16 %v1345
        %v1367 = vunpack.c.l.b16 %v1347
        %v1368 = vunpack.c.l.b16 %v1349
        %v1369 = vunpack.c.l.b16 %v1351
        %v1370 = vunpack.c.l.b16 %v1353
        %v1371 = vunpack.c.l.b16 %v1355
        %v1372 = vpack.c.b16 %v1365, %v1364
        %v1373 = vpack.c.b16 %v1367, %v1366
        %v1374 = vpack.c.b16 %v1369, %v1368
        %v1375 = vpack.c.b16 %v1371, %v1370
        %v1381 = vunpack.c.l.b16 %v802
        %v1382 = vunpack.c.l.b16 %v803
        %v1383 = vunpack.c.l.b16 %v804
        %v1384 = vunpack.c.l.b16 %v805
        %v1385 = vunpack.c.l.b16 %v806
        %v1386 = vpack.c.b16 %v1382, %v1381
        %v1387 = vpack.c.b16 %v1384, %v1383
        %v1388 = vpack.c.b16 %v1385, %v1385
        %vm1391 = vcmask 293888
        %v1393 = vsel %vm1391, %v1372, 0
        %v1396 = vsel %vm1391, %v1373, 0
        %v1399 = vsel %vm1391, %v1374, 0
        %v1402 = vsel %vm1391, %v1375, 0
        %v1405 = vsel %vm575, %v1388, 0
        %1407 = vmatprep.subr.bf16.mxu0 0
        %1408 = vmatpush1.bf16.msra.mxu0 %v1386
        %1409 = vmatprep.subr.bf16.mxu0 0
        %1410 = vmatpush1.bf16.msra.mxu0 %v1387
        %1411 = vmatprep.subr.bf16.mxu0 0
        %1412 = vmatpush1.bf16.msra.mxu0 %v1405
        %1413 = vmatprep.subr.bf16.mxu0 0
        %1414 = vmatpush1.bf16.msra.mxu0 0
        %1415 = vmatprep.subr.bf16.mxu0 0
        %1416 = vmatpush1.bf16.msra.mxu0 0
        %1417 = vmatprep.subr.bf16.mxu0 0
        %1418 = vmatpush1.bf16.msra.mxu0 0
        %1419 = vmatprep.subr.bf16.mxu0 0
        %1420 = vmatpush1.bf16.msra.mxu0 0
        %1421 = vmatprep.subr.bf16.mxu0 0
        %1422 = vmatpush1.bf16.msra.mxu0 0
        %1423 = vmatprep.subr.bf16.mxu0 0
        %1424 = vmatpush1.bf16.msra.mxu0 0
        %1425 = vmatprep.subr.bf16.mxu0 0
        %1426 = vmatpush1.bf16.msra.mxu0 0
        %1427 = vmatprep.subr.bf16.mxu0 0
        %1428 = vmatpush1.bf16.msra.mxu0 0
        %1429 = vmatprep.subr.bf16.mxu0 0
        %1430 = vmatpush1.bf16.msra.mxu0 0
        %1431 = vmatprep.subr.bf16.mxu0 0
        %1432 = vmatpush1.bf16.msra.mxu0 0
        %1433 = vmatprep.subr.bf16.mxu0 0
        %1434 = vmatpush1.bf16.msra.mxu0 0
        %1435 = vmatprep.subr.bf16.mxu0 0
        %1436 = vmatpush1.bf16.msra.mxu0 0
        %1437 = vmatprep.subr.bf16.mxu0 0
        %1438 = vmatpush1.bf16.msra.mxu0 0
        %1439 = vmatprep.mubr.bf16.mxu0 0
        %1440 = vmatmul.mubr.bf16.gmra.mrb[0].mxu0 %v1393
        %v1441 = vpop.f32.mrb[0].mxu0
        %v1442 = vadd.f32 0.0, %v1441
        %v1443 = vpop.f32.mrb[0].mxu0
        %v1444 = vpop.f32.mrb[0].mxu0
        %v1445 = vadd.f32 0.0, %v1444
        %v1446 = vpop.f32.mrb[0].mxu0
        %1447 = vmatprep.mubr.bf16.mxu0 0
        %1448 = vmatmul.mubr.bf16.gmra.mrb[0].mxu0 %v1396
        %v1449 = vpop.f32.mrb[0].mxu0
        %v1450 = vadd.f32 0.0, %v1449
        %v1451 = vpop.f32.mrb[0].mxu0
        %v1452 = vpop.f32.mrb[0].mxu0
        %v1453 = vadd.f32 0.0, %v1452
        %v1454 = vpop.f32.mrb[0].mxu0
        %1455 = vmatprep.mubr.bf16.mxu0 0
        %1456 = vmatmul.mubr.bf16.gmra.mrb[0].mxu0 %v1399
        %v1457 = vpop.f32.mrb[0].mxu0
        %v1458 = vadd.f32 0.0, %v1457
        %v1459 = vpop.f32.mrb[0].mxu0
        %v1460 = vpop.f32.mrb[0].mxu0
        %v1461 = vadd.f32 0.0, %v1460
        %v1462 = vpop.f32.mrb[0].mxu0
        %1463 = vmatprep.mubr.bf16.mxu0 0
        %1464 = vmatmul.mubr.bf16.gmra.mrb[0].mxu0 %v1402
        %v1465 = vpop.f32.mrb[0].mxu0
        %v1466 = vadd.f32 0.0, %v1465
        %v1467 = vpop.f32.mrb[0].mxu0
        %v1468 = vpop.f32.mrb[0].mxu0
        %v1469 = vadd.f32 0.0, %v1468
        %v1470 = vpop.f32.mrb[0].mxu0
        %1471 = vdwg.mxu0
        %v1472 = vld [vmem:[%s4] sm:$0x1]
        %v1474 = vlaneseq
        %v1475 = vshrl.u32 %v1474, 7
        %v1476 = vsub.s32 0, %v1475
        %v1477 = vrot.slane %v1472, %v1476
        %v1479 = vadd.f32 %v1442, %v1477
        %v1480 = vadd.f32 %v1445, %v1477
        %v1481 = vadd.f32 %v1450, %v1477
        %v1482 = vadd.f32 %v1453, %v1477
        %v1483 = vadd.f32 %v1458, %v1477
        %v1484 = vadd.f32 %v1461, %v1477
        %v1485 = vadd.f32 %v1466, %v1477
        %v1486 = vadd.f32 %v1469, %v1477
        %v1487 = vmax.f32 %v1479, 0.0
        %v1488 = vmax.f32 %v1480, 0.0
        %v1489 = vmax.f32 %v1481, 0.0
        %v1490 = vmax.f32 %v1482, 0.0
        %v1491 = vmax.f32 %v1483, 0.0
        %v1492 = vmax.f32 %v1484, 0.0
        %v1493 = vmax.f32 %v1485, 0.0
        %v1494 = vmax.f32 %v1486, 0.0
        %v1495 = vpack.c.bf16 %v1487, %v1487
        %v1496 = vpack.c.bf16 %v1488, %v1488
        %v1497 = vpack.c.bf16 %v1489, %v1489
        %v1498 = vpack.c.bf16 %v1490, %v1490
        %v1499 = vpack.c.bf16 %v1491, %v1491
        %v1500 = vpack.c.bf16 %v1492, %v1492
        %v1501 = vpack.c.bf16 %v1493, %v1493
        %v1502 = vpack.c.bf16 %v1494, %v1494
        %v1511 = vunpack.c.l.b16 %v1495
        %v1512 = vunpack.c.l.b16 %v1496
        %v1513 = vunpack.c.l.b16 %v1497
        %v1514 = vunpack.c.l.b16 %v1498
        %v1515 = vunpack.c.l.b16 %v1499
        %v1516 = vunpack.c.l.b16 %v1500
        %v1517 = vunpack.c.l.b16 %v1501
        %v1518 = vunpack.c.l.b16 %v1502
        %v1519 = vpack.c.b16 %v1511, %v1511
        %v1520 = vpack.c.b16 %v1512, %v1512
        %v1521 = vpack.c.b16 %v1513, %v1513
        %v1522 = vpack.c.b16 %v1514, %v1514
        %v1523 = vpack.c.b16 %v1515, %v1515
        %v1524 = vpack.c.b16 %v1516, %v1516
        %v1525 = vpack.c.b16 %v1517, %v1517
        %v1526 = vpack.c.b16 %v1518, %v1518
        %v1528 = vshrl.u32 %v1519, 16
        %v1530 = vrot.slane %v1528, 7
        %v1531 = vshll.u32 %v1519, 16
        %v1533 = vor.u32 %v1530, %v1531
        %v1534 = vrot.slane %v1530, 4
        %v1536 = vshrl.u32 %v1520, 16
        %v1538 = vrot.slane %v1536, 7
        %v1539 = vshll.u32 %v1520, 16
        %v1541 = vor.u32 %v1538, %v1539
        %v1542 = vrot.slane %v1538, 4
        %v1544 = vshrl.u32 %v1521, 16
        %v1546 = vrot.slane %v1544, 7
        %v1547 = vshll.u32 %v1521, 16
        %v1549 = vor.u32 %v1546, %v1547
        %v1550 = vrot.slane %v1546, 4
        %v1552 = vshrl.u32 %v1522, 16
        %v1554 = vrot.slane %v1552, 7
        %v1555 = vshll.u32 %v1522, 16
        %v1557 = vor.u32 %v1554, %v1555
        %v1558 = vrot.slane %v1554, 4
        %v1560 = vshrl.u32 %v1523, 16
        %v1562 = vrot.slane %v1560, 7
        %v1563 = vshll.u32 %v1523, 16
        %v1565 = vor.u32 %v1562, %v1563
        %v1566 = vrot.slane %v1562, 4
        %v1568 = vshrl.u32 %v1524, 16
        %v1570 = vrot.slane %v1568, 7
        %v1571 = vshll.u32 %v1524, 16
        %v1573 = vor.u32 %v1570, %v1571
        %v1574 = vrot.slane %v1570, 4
        %v1576 = vshrl.u32 %v1525, 16
        %v1578 = vrot.slane %v1576, 7
        %v1579 = vshll.u32 %v1525, 16
        %v1581 = vor.u32 %v1578, %v1579
        %v1582 = vrot.slane %v1578, 4
        %v1584 = vshrl.u32 %v1526, 16
        %v1586 = vrot.slane %v1584, 7
        %v1587 = vshll.u32 %v1526, 16
        %v1589 = vor.u32 %v1586, %v1587
        %v1590 = vrot.slane %v1586, 4
        %s1607 = scalar_lea.vmem [#allocation3], 8
        %vm1608 = vcmask 60416
        %vm1609 = vmand %vm1608, %vm502
        %v1610 = vld [vmem:[%s1607] sm:$0xf]
        %v1611 = vsel %vm1609, %v1533, %v1610
        %1612 = vst [vmem:[%s1607] sm:$0xf] %v1611
        %v1613 = vld [vmem:[%s1607 + $0x4] sm:$0x1]
        %v1614 = vsel %vm471, %v1534, %v1613
        %1615 = vst [vmem:[%s1607 + $0x4] sm:$0x1] %v1614
        %v1616 = vld [vmem:[%s1607 + $0x8] sm:$0xf]
        %v1617 = vsel %vm1609, %v1541, %v1616
        %1618 = vst [vmem:[%s1607 + $0x8] sm:$0xf] %v1617
        %v1619 = vld [vmem:[%s1607 + $0xc] sm:$0x1]
        %v1620 = vsel %vm471, %v1542, %v1619
        %1621 = vst [vmem:[%s1607 + $0xc] sm:$0x1] %v1620
        %v1622 = vld [vmem:[%s1607 + $0x10] sm:$0xf]
        %v1623 = vsel %vm1609, %v1549, %v1622
        %1624 = vst [vmem:[%s1607 + $0x10] sm:$0xf] %v1623
        %v1625 = vld [vmem:[%s1607 + $0x14] sm:$0x1]
        %v1626 = vsel %vm471, %v1550, %v1625
        %1627 = vst [vmem:[%s1607 + $0x14] sm:$0x1] %v1626
        %v1628 = vld [vmem:[%s1607 + $0x18] sm:$0xf]
        %v1629 = vsel %vm1609, %v1557, %v1628
        %1630 = vst [vmem:[%s1607 + $0x18] sm:$0xf] %v1629
        %v1631 = vld [vmem:[%s1607 + $0x1c] sm:$0x1]
        %v1632 = vsel %vm471, %v1558, %v1631
        %1633 = vst [vmem:[%s1607 + $0x1c] sm:$0x1] %v1632
        %v1634 = vld [vmem:[%s1607 + $0x20] sm:$0xf]
        %v1635 = vsel %vm1609, %v1565, %v1634
        %1636 = vst [vmem:[%s1607 + $0x20] sm:$0xf] %v1635
        %v1637 = vld [vmem:[%s1607 + $0x24] sm:$0x1]
        %v1638 = vsel %vm471, %v1566, %v1637
        %1639 = vst [vmem:[%s1607 + $0x24] sm:$0x1] %v1638
        %v1640 = vld [vmem:[%s1607 + $0x28] sm:$0xf]
        %v1641 = vsel %vm1609, %v1573, %v1640
        %1642 = vst [vmem:[%s1607 + $0x28] sm:$0xf] %v1641
        %v1643 = vld [vmem:[%s1607 + $0x2c] sm:$0x1]
        %v1644 = vsel %vm471, %v1574, %v1643
        %1645 = vst [vmem:[%s1607 + $0x2c] sm:$0x1] %v1644
        %v1646 = vld [vmem:[%s1607 + $0x30] sm:$0xf]
        %v1647 = vsel %vm1609, %v1581, %v1646
        %1648 = vst [vmem:[%s1607 + $0x30] sm:$0xf] %v1647
        %v1649 = vld [vmem:[%s1607 + $0x34] sm:$0x1]
        %v1650 = vsel %vm471, %v1582, %v1649
        %1651 = vst [vmem:[%s1607 + $0x34] sm:$0x1] %v1650
        %v1652 = vld [vmem:[%s1607 + $0x38] sm:$0xf]
        %v1653 = vsel %vm1609, %v1589, %v1652
        %1654 = vst [vmem:[%s1607 + $0x38] sm:$0xf] %v1653
        %v1655 = vld [vmem:[%s1607 + $0x3c] sm:$0x1]
        %v1656 = vsel %vm471, %v1590, %v1655
        %1657 = vst [vmem:[%s1607 + $0x3c] sm:$0x1] %v1656
        %v1658 = vld [vmem:[%s5] sm:$0xf]
        %v1659 = vld [vmem:[%s5 + $0x4] sm:$0xf]
        %v1660 = vld [vmem:[%s5 + $0x8] sm:$0xf]
        %v1661 = vld [vmem:[%s5 + $0xc] sm:$0xf]
        %v1662 = vld [vmem:[%s5 + $0x10] sm:$0xf]
        %v1663 = vld [vmem:[%s5 + $0x14] sm:$0xf]
        %v1664 = vld [vmem:[%s5 + $0x18] sm:$0xf]
        %v1665 = vld [vmem:[%s5 + $0x1c] sm:$0xf]
        %v1666 = vld [vmem:[%s5 + $0x20] sm:$0xf]
        %v1667 = vld [vmem:[#allocation3] sm:$0xf]
        %v1668 = vld [vmem:[#allocation3 + $0x8] sm:$0xf]
        %v1669 = vld [vmem:[#allocation3 + $0x10] sm:$0xf]
        %v1670 = vld [vmem:[#allocation3 + $0x18] sm:$0xf]
        %v1671 = vld [vmem:[#allocation3 + $0x20] sm:$0xf]
        %v1672 = vld [vmem:[#allocation3 + $0x28] sm:$0xf]
        %v1673 = vld [vmem:[#allocation3 + $0x30] sm:$0xf]
        %v1674 = vld [vmem:[#allocation3 + $0x38] sm:$0xf]
        %v1675 = vld [vmem:[#allocation3 + $0x4] sm:$0x1]
        %v1676 = vld [vmem:[#allocation3 + $0xc] sm:$0x1]
        %v1677 = vld [vmem:[#allocation3 + $0x14] sm:$0x1]
        %v1678 = vld [vmem:[#allocation3 + $0x1c] sm:$0x1]
        %v1679 = vld [vmem:[#allocation3 + $0x24] sm:$0x1]
        %v1680 = vld [vmem:[#allocation3 + $0x2c] sm:$0x1]
        %v1681 = vld [vmem:[#allocation3 + $0x34] sm:$0x1]
        %v1682 = vld [vmem:[#allocation3 + $0x3c] sm:$0x1]
        %v1683 = vld [vmem:[#allocation3] sm:$0xe]
        %v1684 = vld [vmem:[#allocation3 + $0x8] sm:$0xe]
        %v1685 = vld [vmem:[#allocation3 + $0x10] sm:$0xe]
        %v1686 = vld [vmem:[#allocation3 + $0x18] sm:$0xe]
        %v1687 = vld [vmem:[#allocation3 + $0x20] sm:$0xe]
        %v1688 = vld [vmem:[#allocation3 + $0x28] sm:$0xe]
        %v1689 = vld [vmem:[#allocation3 + $0x30] sm:$0xe]
        %v1690 = vld [vmem:[#allocation3 + $0x38] sm:$0xe]
        %v1691 = vld [vmem:[%s1607] sm:$0xf]
        %v1692 = vld [vmem:[%s1607 + $0x8] sm:$0xf]
        %v1693 = vld [vmem:[%s1607 + $0x10] sm:$0xf]
        %v1694 = vld [vmem:[%s1607 + $0x18] sm:$0xf]
        %v1695 = vld [vmem:[%s1607 + $0x20] sm:$0xf]
        %v1696 = vld [vmem:[%s1607 + $0x28] sm:$0xf]
        %v1697 = vld [vmem:[%s1607 + $0x30] sm:$0xf]
        %v1698 = vld [vmem:[%s1607 + $0x38] sm:$0xf]
        %v1699 = vld [vmem:[%s1607 + $0x4] sm:$0x1]
        %v1700 = vld [vmem:[%s1607 + $0xc] sm:$0x1]
        %v1701 = vld [vmem:[%s1607 + $0x14] sm:$0x1]
        %v1702 = vld [vmem:[%s1607 + $0x1c] sm:$0x1]
        %v1703 = vld [vmem:[%s1607 + $0x24] sm:$0x1]
        %v1704 = vld [vmem:[%s1607 + $0x2c] sm:$0x1]
        %v1705 = vld [vmem:[%s1607 + $0x34] sm:$0x1]
        %v1706 = vld [vmem:[%s1607 + $0x3c] sm:$0x1]
        %v1707 = vld [vmem:[%s1607] sm:$0xe]
        %v1708 = vld [vmem:[%s1607 + $0x8] sm:$0xe]
        %v1709 = vld [vmem:[%s1607 + $0x10] sm:$0xe]
        %v1710 = vld [vmem:[%s1607 + $0x18] sm:$0xe]
        %v1711 = vld [vmem:[%s1607 + $0x20] sm:$0xe]
        %v1712 = vld [vmem:[%s1607 + $0x28] sm:$0xe]
        %v1713 = vld [vmem:[%s1607 + $0x30] sm:$0xe]
        %v1714 = vld [vmem:[%s1607 + $0x38] sm:$0xe]
        %s1715 = scalar_lea.vmem [#allocation3], 16
        %v1716 = vld [vmem:[%s1715] sm:$0xf]
        %v1717 = vld [vmem:[%s1715 + $0x8] sm:$0xf]
        %v1718 = vld [vmem:[%s1715 + $0x10] sm:$0xf]
        %v1719 = vld [vmem:[%s1715 + $0x18] sm:$0xf]
        %v1720 = vld [vmem:[%s1715 + $0x20] sm:$0xf]
        %v1721 = vld [vmem:[%s1715 + $0x28] sm:$0xf]
        %v1722 = vld [vmem:[%s1715 + $0x30] sm:$0xf]
        %v1723 = vld [vmem:[%s1715 + $0x38] sm:$0xf]
        %v1724 = vld [vmem:[%s1715 + $0x4] sm:$0x1]
        %v1725 = vld [vmem:[%s1715 + $0xc] sm:$0x1]
        %v1726 = vld [vmem:[%s1715 + $0x14] sm:$0x1]
        %v1727 = vld [vmem:[%s1715 + $0x1c] sm:$0x1]
        %v1728 = vld [vmem:[%s1715 + $0x24] sm:$0x1]
        %v1729 = vld [vmem:[%s1715 + $0x2c] sm:$0x1]
        %v1730 = vld [vmem:[%s1715 + $0x34] sm:$0x1]
        %v1731 = vld [vmem:[%s1715 + $0x3c] sm:$0x1]
        %v1732 = vld [vmem:[%s1715] sm:$0xe]
        %v1733 = vld [vmem:[%s1715 + $0x8] sm:$0xe]
        %v1734 = vld [vmem:[%s1715 + $0x10] sm:$0xe]
        %v1735 = vld [vmem:[%s1715 + $0x18] sm:$0xe]
        %v1736 = vld [vmem:[%s1715 + $0x20] sm:$0xe]
        %v1737 = vld [vmem:[%s1715 + $0x28] sm:$0xe]
        %v1738 = vld [vmem:[%s1715 + $0x30] sm:$0xe]
        %v1739 = vld [vmem:[%s1715 + $0x38] sm:$0xe]
        %v1756 = vunpack.c.l.b16 %v1667
        %v1757 = vunpack.c.l.b16 %v1675
        %v1758 = vunpack.c.l.b16 %v1668
        %v1759 = vunpack.c.l.b16 %v1676
        %v1760 = vunpack.c.l.b16 %v1669
        %v1761 = vunpack.c.l.b16 %v1677
        %v1762 = vunpack.c.l.b16 %v1670
        %v1763 = vunpack.c.l.b16 %v1678
        %v1764 = vunpack.c.l.b16 %v1671
        %v1765 = vunpack.c.l.b16 %v1679
        %v1766 = vunpack.c.l.b16 %v1672
        %v1767 = vunpack.c.l.b16 %v1680
        %v1768 = vunpack.c.l.b16 %v1673
        %v1769 = vunpack.c.l.b16 %v1681
        %v1770 = vunpack.c.l.b16 %v1674
        %v1771 = vunpack.c.l.b16 %v1682
        %v1772 = vpack.c.b16 %v1757, %v1756
        %v1773 = vpack.c.b16 %v1759, %v1758
        %v1774 = vpack.c.b16 %v1761, %v1760
        %v1775 = vpack.c.b16 %v1763, %v1762
        %v1776 = vpack.c.b16 %v1765, %v1764
        %v1777 = vpack.c.b16 %v1767, %v1766
        %v1778 = vpack.c.b16 %v1769, %v1768
        %v1779 = vpack.c.b16 %v1771, %v1770
        %v1781 = vshrl.u32 %v1772, 16
        %v1783 = vshll.u32 %v1772, 16
        %v1785 = vrot.slane %v1783, 1
        %v1786 = vor.u32 %v1781, %v1785
        %v1788 = vshrl.u32 %v1773, 16
        %v1790 = vshll.u32 %v1773, 16
        %v1792 = vrot.slane %v1790, 1
        %v1793 = vor.u32 %v1788, %v1792
        %v1795 = vshrl.u32 %v1774, 16
        %v1797 = vshll.u32 %v1774, 16
        %v1799 = vrot.slane %v1797, 1
        %v1800 = vor.u32 %v1795, %v1799
        %v1802 = vshrl.u32 %v1775, 16
        %v1804 = vshll.u32 %v1775, 16
        %v1806 = vrot.slane %v1804, 1
        %v1807 = vor.u32 %v1802, %v1806
        %v1809 = vshrl.u32 %v1776, 16
        %v1811 = vshll.u32 %v1776, 16
        %v1813 = vrot.slane %v1811, 1
        %v1814 = vor.u32 %v1809, %v1813
        %v1816 = vshrl.u32 %v1777, 16
        %v1818 = vshll.u32 %v1777, 16
        %v1820 = vrot.slane %v1818, 1
        %v1821 = vor.u32 %v1816, %v1820
        %v1823 = vshrl.u32 %v1778, 16
        %v1825 = vshll.u32 %v1778, 16
        %v1827 = vrot.slane %v1825, 1
        %v1828 = vor.u32 %v1823, %v1827
        %v1830 = vshrl.u32 %v1779, 16
        %v1832 = vshll.u32 %v1779, 16
        %v1834 = vrot.slane %v1832, 1
        %v1835 = vor.u32 %v1830, %v1834
        %1836 = vrot.lane.b32.xlu0 %v1786, 8
        %v1837 = vpop.permute.xlu0 %1836
        %1838 = vrot.lane.b32.xlu0 %v1793, 8
        %v1839 = vpop.permute.xlu0 %1838
        %1840 = vrot.lane.b32.xlu0 %v1800, 8
        %v1841 = vpop.permute.xlu0 %1840
        %1842 = vrot.lane.b32.xlu0 %v1807, 8
        %v1843 = vpop.permute.xlu0 %1842
        %1844 = vrot.lane.b32.xlu0 %v1814, 8
        %v1845 = vpop.permute.xlu0 %1844
        %1846 = vrot.lane.b32.xlu0 %v1821, 8
        %v1847 = vpop.permute.xlu0 %1846
        %1848 = vrot.lane.b32.xlu0 %v1828, 8
        %v1849 = vpop.permute.xlu0 %1848
        %1850 = vrot.lane.b32.xlu0 %v1835, 8
        %v1851 = vpop.permute.xlu0 %1850
        %v1860 = vunpack.c.l.b16 %v1683
        %v1861 = vunpack.c.l.b16 %v1684
        %v1862 = vunpack.c.l.b16 %v1685
        %v1863 = vunpack.c.l.b16 %v1686
        %v1864 = vunpack.c.l.b16 %v1687
        %v1865 = vunpack.c.l.b16 %v1688
        %v1866 = vunpack.c.l.b16 %v1689
        %v1867 = vunpack.c.l.b16 %v1690
        %v1868 = vpack.c.b16 %v1757, %v1860
        %v1869 = vpack.c.b16 %v1759, %v1861
        %v1870 = vpack.c.b16 %v1761, %v1862
        %v1871 = vpack.c.b16 %v1763, %v1863
        %v1872 = vpack.c.b16 %v1765, %v1864
        %v1873 = vpack.c.b16 %v1767, %v1865
        %v1874 = vpack.c.b16 %v1769, %v1866
        %v1875 = vpack.c.b16 %v1771, %v1867
        %v1876 = vrot.slane %v1868, 1
        %v1877 = vrot.slane %v1869, 1
        %v1878 = vrot.slane %v1870, 1
        %v1879 = vrot.slane %v1871, 1
        %v1880 = vrot.slane %v1872, 1
        %v1881 = vrot.slane %v1873, 1
        %v1882 = vrot.slane %v1874, 1
        %v1883 = vrot.slane %v1875, 1
        %1884 = vrot.lane.b32.xlu0 %v1876, 16
        %v1885 = vpop.permute.xlu0 %1884
        %1886 = vrot.lane.b32.xlu0 %v1877, 16
        %v1887 = vpop.permute.xlu0 %1886
        %1888 = vrot.lane.b32.xlu0 %v1878, 16
        %v1889 = vpop.permute.xlu0 %1888
        %1890 = vrot.lane.b32.xlu0 %v1879, 16
        %v1891 = vpop.permute.xlu0 %1890
        %1892 = vrot.lane.b32.xlu0 %v1880, 16
        %v1893 = vpop.permute.xlu0 %1892
        %1894 = vrot.lane.b32.xlu0 %v1881, 16
        %v1895 = vpop.permute.xlu0 %1894
        %1896 = vrot.lane.b32.xlu0 %v1882, 16
        %v1897 = vpop.permute.xlu0 %1896
        %1898 = vrot.lane.b32.xlu0 %v1883, 16
        %v1899 = vpop.permute.xlu0 %1898
        %v1908 = vunpack.c.l.b16 %v1691
        %v1909 = vunpack.c.l.b16 %v1692
        %v1910 = vunpack.c.l.b16 %v1693
        %v1911 = vunpack.c.l.b16 %v1694
        %v1912 = vunpack.c.l.b16 %v1695
        %v1913 = vunpack.c.l.b16 %v1696
        %v1914 = vunpack.c.l.b16 %v1697
        %v1915 = vunpack.c.l.b16 %v1698
        %v1916 = vpack.c.b16 %v1908, %v1908
        %v1917 = vpack.c.b16 %v1909, %v1909
        %v1918 = vpack.c.b16 %v1910, %v1910
        %v1919 = vpack.c.b16 %v1911, %v1911
        %v1920 = vpack.c.b16 %v1912, %v1912
        %v1921 = vpack.c.b16 %v1913, %v1913
        %v1922 = vpack.c.b16 %v1914, %v1914
        %v1923 = vpack.c.b16 %v1915, %v1915
        %1924 = vrot.lane.b32.xlu0 %v1916, 24
        %v1925 = vpop.permute.xlu0 %1924
        %1926 = vrot.lane.b32.xlu0 %v1917, 24
        %v1927 = vpop.permute.xlu0 %1926
        %1928 = vrot.lane.b32.xlu0 %v1918, 24
        %v1929 = vpop.permute.xlu0 %1928
        %1930 = vrot.lane.b32.xlu0 %v1919, 24
        %v1931 = vpop.permute.xlu0 %1930
        %1932 = vrot.lane.b32.xlu0 %v1920, 24
        %v1933 = vpop.permute.xlu0 %1932
        %1934 = vrot.lane.b32.xlu0 %v1921, 24
        %v1935 = vpop.permute.xlu0 %1934
        %1936 = vrot.lane.b32.xlu0 %v1922, 24
        %v1937 = vpop.permute.xlu0 %1936
        %1938 = vrot.lane.b32.xlu0 %v1923, 24
        %v1939 = vpop.permute.xlu0 %1938
        %v1948 = vunpack.c.l.b16 %v1699
        %v1949 = vunpack.c.l.b16 %v1700
        %v1950 = vunpack.c.l.b16 %v1701
        %v1951 = vunpack.c.l.b16 %v1702
        %v1952 = vunpack.c.l.b16 %v1703
        %v1953 = vunpack.c.l.b16 %v1704
        %v1954 = vunpack.c.l.b16 %v1705
        %v1955 = vunpack.c.l.b16 %v1706
        %v1956 = vpack.c.b16 %v1948, %v1908
        %v1957 = vpack.c.b16 %v1949, %v1909
        %v1958 = vpack.c.b16 %v1950, %v1910
        %v1959 = vpack.c.b16 %v1951, %v1911
        %v1960 = vpack.c.b16 %v1952, %v1912
        %v1961 = vpack.c.b16 %v1953, %v1913
        %v1962 = vpack.c.b16 %v1954, %v1914
        %v1963 = vpack.c.b16 %v1955, %v1915
        %v1965 = vshrl.u32 %v1956, 16
        %v1967 = vshll.u32 %v1956, 16
        %v1969 = vrot.slane %v1967, 1
        %v1970 = vor.u32 %v1965, %v1969
        %v1972 = vshrl.u32 %v1957, 16
        %v1974 = vshll.u32 %v1957, 16
        %v1976 = vrot.slane %v1974, 1
        %v1977 = vor.u32 %v1972, %v1976
        %v1979 = vshrl.u32 %v1958, 16
        %v1981 = vshll.u32 %v1958, 16
        %v1983 = vrot.slane %v1981, 1
        %v1984 = vor.u32 %v1979, %v1983
        %v1986 = vshrl.u32 %v1959, 16
        %v1988 = vshll.u32 %v1959, 16
        %v1990 = vrot.slane %v1988, 1
        %v1991 = vor.u32 %v1986, %v1990
        %v1993 = vshrl.u32 %v1960, 16
        %v1995 = vshll.u32 %v1960, 16
        %v1997 = vrot.slane %v1995, 1
        %v1998 = vor.u32 %v1993, %v1997
        %v2000 = vshrl.u32 %v1961, 16
        %v2002 = vshll.u32 %v1961, 16
        %v2004 = vrot.slane %v2002, 1
        %v2005 = vor.u32 %v2000, %v2004
        %v2007 = vshrl.u32 %v1962, 16
        %v2009 = vshll.u32 %v1962, 16
        %v2011 = vrot.slane %v2009, 1
        %v2012 = vor.u32 %v2007, %v2011
        %v2014 = vshrl.u32 %v1963, 16
        %v2016 = vshll.u32 %v1963, 16
        %v2018 = vrot.slane %v2016, 1
        %v2019 = vor.u32 %v2014, %v2018
        %2020 = vrot.lane.b32.xlu0 %v1970, 32
        %v2021 = vpop.permute.xlu0 %2020
        %2022 = vrot.lane.b32.xlu0 %v1977, 32
        %v2023 = vpop.permute.xlu0 %2022
        %2024 = vrot.lane.b32.xlu0 %v1984, 32
        %v2025 = vpop.permute.xlu0 %2024
        %2026 = vrot.lane.b32.xlu0 %v1991, 32
        %v2027 = vpop.permute.xlu0 %2026
        %2028 = vrot.lane.b32.xlu0 %v1998, 32
        %v2029 = vpop.permute.xlu0 %2028
        %2030 = vrot.lane.b32.xlu0 %v2005, 32
        %v2031 = vpop.permute.xlu0 %2030
        %2032 = vrot.lane.b32.xlu0 %v2012, 32
        %v2033 = vpop.permute.xlu0 %2032
        %2034 = vrot.lane.b32.xlu0 %v2019, 32
        %v2035 = vpop.permute.xlu0 %2034
        %v2044 = vunpack.c.l.b16 %v1707
        %v2045 = vunpack.c.l.b16 %v1708
        %v2046 = vunpack.c.l.b16 %v1709
        %v2047 = vunpack.c.l.b16 %v1710
        %v2048 = vunpack.c.l.b16 %v1711
        %v2049 = vunpack.c.l.b16 %v1712
        %v2050 = vunpack.c.l.b16 %v1713
        %v2051 = vunpack.c.l.b16 %v1714
        %v2052 = vpack.c.b16 %v1948, %v2044
        %v2053 = vpack.c.b16 %v1949, %v2045
        %v2054 = vpack.c.b16 %v1950, %v2046
        %v2055 = vpack.c.b16 %v1951, %v2047
        %v2056 = vpack.c.b16 %v1952, %v2048
        %v2057 = vpack.c.b16 %v1953, %v2049
        %v2058 = vpack.c.b16 %v1954, %v2050
        %v2059 = vpack.c.b16 %v1955, %v2051
        %v2060 = vrot.slane %v2052, 1
        %v2061 = vrot.slane %v2053, 1
        %v2062 = vrot.slane %v2054, 1
        %v2063 = vrot.slane %v2055, 1
        %v2064 = vrot.slane %v2056, 1
        %v2065 = vrot.slane %v2057, 1
        %v2066 = vrot.slane %v2058, 1
        %v2067 = vrot.slane %v2059, 1
        %2068 = vrot.lane.b32.xlu0 %v2060, 40
        %v2069 = vpop.permute.xlu0 %2068
        %2070 = vrot.lane.b32.xlu0 %v2061, 40
        %v2071 = vpop.permute.xlu0 %2070
        %2072 = vrot.lane.b32.xlu0 %v2062, 40
        %v2073 = vpop.permute.xlu0 %2072
        %2074 = vrot.lane.b32.xlu0 %v2063, 40
        %v2075 = vpop.permute.xlu0 %2074
        %2076 = vrot.lane.b32.xlu0 %v2064, 40
        %v2077 = vpop.permute.xlu0 %2076
        %2078 = vrot.lane.b32.xlu0 %v2065, 40
        %v2079 = vpop.permute.xlu0 %2078
        %2080 = vrot.lane.b32.xlu0 %v2066, 40
        %v2081 = vpop.permute.xlu0 %2080
        %2082 = vrot.lane.b32.xlu0 %v2067, 40
        %v2083 = vpop.permute.xlu0 %2082
        %v2092 = vunpack.c.l.b16 %v1716
        %v2093 = vunpack.c.l.b16 %v1717
        %v2094 = vunpack.c.l.b16 %v1718
        %v2095 = vunpack.c.l.b16 %v1719
        %v2096 = vunpack.c.l.b16 %v1720
        %v2097 = vunpack.c.l.b16 %v1721
        %v2098 = vunpack.c.l.b16 %v1722
        %v2099 = vunpack.c.l.b16 %v1723
        %v2100 = vpack.c.b16 %v2092, %v2092
        %v2101 = vpack.c.b16 %v2093, %v2093
        %v2102 = vpack.c.b16 %v2094, %v2094
        %v2103 = vpack.c.b16 %v2095, %v2095
        %v2104 = vpack.c.b16 %v2096, %v2096
        %v2105 = vpack.c.b16 %v2097, %v2097
        %v2106 = vpack.c.b16 %v2098, %v2098
        %v2107 = vpack.c.b16 %v2099, %v2099
        %2108 = vrot.lane.b32.xlu0 %v2100, 48
        %v2109 = vpop.permute.xlu0 %2108
        %2110 = vrot.lane.b32.xlu0 %v2101, 48
        %v2111 = vpop.permute.xlu0 %2110
        %2112 = vrot.lane.b32.xlu0 %v2102, 48
        %v2113 = vpop.permute.xlu0 %2112
        %2114 = vrot.lane.b32.xlu0 %v2103, 48
        %v2115 = vpop.permute.xlu0 %2114
        %2116 = vrot.lane.b32.xlu0 %v2104, 48
        %v2117 = vpop.permute.xlu0 %2116
        %2118 = vrot.lane.b32.xlu0 %v2105, 48
        %v2119 = vpop.permute.xlu0 %2118
        %2120 = vrot.lane.b32.xlu0 %v2106, 48
        %v2121 = vpop.permute.xlu0 %2120
        %2122 = vrot.lane.b32.xlu0 %v2107, 48
        %v2123 = vpop.permute.xlu0 %2122
        %v2132 = vunpack.c.l.b16 %v1724
        %v2133 = vunpack.c.l.b16 %v1725
        %v2134 = vunpack.c.l.b16 %v1726
        %v2135 = vunpack.c.l.b16 %v1727
        %v2136 = vunpack.c.l.b16 %v1728
        %v2137 = vunpack.c.l.b16 %v1729
        %v2138 = vunpack.c.l.b16 %v1730
        %v2139 = vunpack.c.l.b16 %v1731
        %v2140 = vpack.c.b16 %v2132, %v2092
        %v2141 = vpack.c.b16 %v2133, %v2093
        %v2142 = vpack.c.b16 %v2134, %v2094
        %v2143 = vpack.c.b16 %v2135, %v2095
        %v2144 = vpack.c.b16 %v2136, %v2096
        %v2145 = vpack.c.b16 %v2137, %v2097
        %v2146 = vpack.c.b16 %v2138, %v2098
        %v2147 = vpack.c.b16 %v2139, %v2099
        %v2149 = vshrl.u32 %v2140, 16
        %v2151 = vshll.u32 %v2140, 16
        %v2153 = vrot.slane %v2151, 1
        %v2154 = vor.u32 %v2149, %v2153
        %v2156 = vshrl.u32 %v2141, 16
        %v2158 = vshll.u32 %v2141, 16
        %v2160 = vrot.slane %v2158, 1
        %v2161 = vor.u32 %v2156, %v2160
        %v2163 = vshrl.u32 %v2142, 16
        %v2165 = vshll.u32 %v2142, 16
        %v2167 = vrot.slane %v2165, 1
        %v2168 = vor.u32 %v2163, %v2167
        %v2170 = vshrl.u32 %v2143, 16
        %v2172 = vshll.u32 %v2143, 16
        %v2174 = vrot.slane %v2172, 1
        %v2175 = vor.u32 %v2170, %v2174
        %v2177 = vshrl.u32 %v2144, 16
        %v2179 = vshll.u32 %v2144, 16
        %v2181 = vrot.slane %v2179, 1
        %v2182 = vor.u32 %v2177, %v2181
        %v2184 = vshrl.u32 %v2145, 16
        %v2186 = vshll.u32 %v2145, 16
        %v2188 = vrot.slane %v2186, 1
        %v2189 = vor.u32 %v2184, %v2188
        %v2191 = vshrl.u32 %v2146, 16
        %v2193 = vshll.u32 %v2146, 16
        %v2195 = vrot.slane %v2193, 1
        %v2196 = vor.u32 %v2191, %v2195
        %v2198 = vshrl.u32 %v2147, 16
        %v2200 = vshll.u32 %v2147, 16
        %v2202 = vrot.slane %v2200, 1
        %v2203 = vor.u32 %v2198, %v2202
        %2204 = vrot.lane.b32.xlu0 %v2154, 56
        %v2205 = vpop.permute.xlu0 %2204
        %2206 = vrot.lane.b32.xlu0 %v2161, 56
        %v2207 = vpop.permute.xlu0 %2206
        %2208 = vrot.lane.b32.xlu0 %v2168, 56
        %v2209 = vpop.permute.xlu0 %2208
        %2210 = vrot.lane.b32.xlu0 %v2175, 56
        %v2211 = vpop.permute.xlu0 %2210
        %2212 = vrot.lane.b32.xlu0 %v2182, 56
        %v2213 = vpop.permute.xlu0 %2212
        %2214 = vrot.lane.b32.xlu0 %v2189, 56
        %v2215 = vpop.permute.xlu0 %2214
        %2216 = vrot.lane.b32.xlu0 %v2196, 56
        %v2217 = vpop.permute.xlu0 %2216
        %2218 = vrot.lane.b32.xlu0 %v2203, 56
        %v2219 = vpop.permute.xlu0 %2218
        %v2228 = vunpack.c.l.b16 %v1732
        %v2229 = vunpack.c.l.b16 %v1733
        %v2230 = vunpack.c.l.b16 %v1734
        %v2231 = vunpack.c.l.b16 %v1735
        %v2232 = vunpack.c.l.b16 %v1736
        %v2233 = vunpack.c.l.b16 %v1737
        %v2234 = vunpack.c.l.b16 %v1738
        %v2235 = vunpack.c.l.b16 %v1739
        %v2236 = vpack.c.b16 %v2132, %v2228
        %v2237 = vpack.c.b16 %v2133, %v2229
        %v2238 = vpack.c.b16 %v2134, %v2230
        %v2239 = vpack.c.b16 %v2135, %v2231
        %v2240 = vpack.c.b16 %v2136, %v2232
        %v2241 = vpack.c.b16 %v2137, %v2233
        %v2242 = vpack.c.b16 %v2138, %v2234
        %v2243 = vpack.c.b16 %v2139, %v2235
        %v2244 = vrot.slane %v2236, 1
        %v2245 = vrot.slane %v2237, 1
        %v2246 = vrot.slane %v2238, 1
        %v2247 = vrot.slane %v2239, 1
        %v2248 = vrot.slane %v2240, 1
        %v2249 = vrot.slane %v2241, 1
        %v2250 = vrot.slane %v2242, 1
        %v2251 = vrot.slane %v2243, 1
        %2252 = vrot.lane.b32.xlu0 %v2244, 64
        %v2253 = vpop.permute.xlu0 %2252
        %2254 = vrot.lane.b32.xlu0 %v2245, 64
        %v2255 = vpop.permute.xlu0 %2254
        %2256 = vrot.lane.b32.xlu0 %v2246, 64
        %v2257 = vpop.permute.xlu0 %2256
        %2258 = vrot.lane.b32.xlu0 %v2247, 64
        %v2259 = vpop.permute.xlu0 %2258
        %2260 = vrot.lane.b32.xlu0 %v2248, 64
        %v2261 = vpop.permute.xlu0 %2260
        %2262 = vrot.lane.b32.xlu0 %v2249, 64
        %v2263 = vpop.permute.xlu0 %2262
        %2264 = vrot.lane.b32.xlu0 %v2250, 64
        %v2265 = vpop.permute.xlu0 %2264
        %2266 = vrot.lane.b32.xlu0 %v2251, 64
        %v2267 = vpop.permute.xlu0 %2266
        %v2270 = vsel %vm1237, %v1667, %v1837
        %v2273 = vsel %vm1237, %v1668, %v1839
        %v2276 = vsel %vm1237, %v1669, %v1841
        %v2279 = vsel %vm1237, %v1670, %v1843
        %v2282 = vsel %vm1237, %v1671, %v1845
        %v2285 = vsel %vm1237, %v1672, %v1847
        %v2288 = vsel %vm1237, %v1673, %v1849
        %v2291 = vsel %vm1237, %v1674, %v1851
        %v2293 = vsel %vm1271, %v2270, %v1885
        %v2295 = vsel %vm1271, %v2273, %v1887
        %v2297 = vsel %vm1271, %v2276, %v1889
        %v2299 = vsel %vm1271, %v2279, %v1891
        %v2301 = vsel %vm1271, %v2282, %v1893
        %v2303 = vsel %vm1271, %v2285, %v1895
        %v2305 = vsel %vm1271, %v2288, %v1897
        %v2307 = vsel %vm1271, %v2291, %v1899
        %v2309 = vsel %vm1305, %v2293, %v1925
        %v2311 = vsel %vm1305, %v2295, %v1927
        %v2313 = vsel %vm1305, %v2297, %v1929
        %v2315 = vsel %vm1305, %v2299, %v1931
        %v2317 = vsel %vm1305, %v2301, %v1933
        %v2319 = vsel %vm1305, %v2303, %v1935
        %v2321 = vsel %vm1305, %v2305, %v1937
        %v2323 = vsel %vm1305, %v2307, %v1939
        %v2325 = vsel %vm1339, %v2309, %v2021
        %v2327 = vsel %vm1339, %v2311, %v2023
        %v2329 = vsel %vm1339, %v2313, %v2025
        %v2331 = vsel %vm1339, %v2315, %v2027
        %v2333 = vsel %vm1339, %v2317, %v2029
        %v2335 = vsel %vm1339, %v2319, %v2031
        %v2337 = vsel %vm1339, %v2321, %v2033
        %v2339 = vsel %vm1339, %v2323, %v2035
        %vm2340 = vcmask 326656
        %v2342 = vsel %vm2340, %v2325, %v2069
        %v2344 = vsel %vm2340, %v2327, %v2071
        %v2346 = vsel %vm2340, %v2329, %v2073
        %v2348 = vsel %vm2340, %v2331, %v2075
        %v2350 = vsel %vm2340, %v2333, %v2077
        %v2352 = vsel %vm2340, %v2335, %v2079
        %v2354 = vsel %vm2340, %v2337, %v2081
        %v2356 = vsel %vm2340, %v2339, %v2083
        %vm2357 = vcmask 392192
        %v2359 = vsel %vm2357, %v2342, %v2109
        %v2361 = vsel %vm2357, %v2344, %v2111
        %v2363 = vsel %vm2357, %v2346, %v2113
        %v2365 = vsel %vm2357, %v2348, %v2115
        %v2367 = vsel %vm2357, %v2350, %v2117
        %v2369 = vsel %vm2357, %v2352, %v2119
        %v2371 = vsel %vm2357, %v2354, %v2121
        %v2373 = vsel %vm2357, %v2356, %v2123
        %vm2374 = vcmask 457728
        %v2376 = vsel %vm2374, %v2359, %v2205
        %v2378 = vsel %vm2374, %v2361, %v2207
        %v2380 = vsel %vm2374, %v2363, %v2209
        %v2382 = vsel %vm2374, %v2365, %v2211
        %v2384 = vsel %vm2374, %v2367, %v2213
        %v2386 = vsel %vm2374, %v2369, %v2215
        %v2388 = vsel %vm2374, %v2371, %v2217
        %v2390 = vsel %vm2374, %v2373, %v2219
        %vm2391 = vcmask 523264
        %v2393 = vsel %vm2391, %v2376, %v2253
        %v2395 = vsel %vm2391, %v2378, %v2255
        %v2397 = vsel %vm2391, %v2380, %v2257
        %v2399 = vsel %vm2391, %v2382, %v2259
        %v2401 = vsel %vm2391, %v2384, %v2261
        %v2403 = vsel %vm2391, %v2386, %v2263
        %v2405 = vsel %vm2391, %v2388, %v2265
        %v2407 = vsel %vm2391, %v2390, %v2267
        %v2416 = vunpack.c.l.b16 %v2393
        %v2417 = vunpack.c.l.b16 %v2395
        %v2418 = vunpack.c.l.b16 %v2397
        %v2419 = vunpack.c.l.b16 %v2399
        %v2420 = vunpack.c.l.b16 %v2401
        %v2421 = vunpack.c.l.b16 %v2403
        %v2422 = vunpack.c.l.b16 %v2405
        %v2423 = vunpack.c.l.b16 %v2407
        %v2424 = vpack.c.b16 %v2417, %v2416
        %v2425 = vpack.c.b16 %v2419, %v2418
        %v2426 = vpack.c.b16 %v2421, %v2420
        %v2427 = vpack.c.b16 %v2423, %v2422
        %v2437 = vunpack.c.l.b16 %v1658
        %v2438 = vunpack.c.l.b16 %v1659
        %v2439 = vunpack.c.l.b16 %v1660
        %v2440 = vunpack.c.l.b16 %v1661
        %v2441 = vunpack.c.l.b16 %v1662
        %v2442 = vunpack.c.l.b16 %v1663
        %v2443 = vunpack.c.l.b16 %v1664
        %v2444 = vunpack.c.l.b16 %v1665
        %v2445 = vunpack.c.l.b16 %v1666
        %v2446 = vpack.c.b16 %v2438, %v2437
        %v2447 = vpack.c.b16 %v2440, %v2439
        %v2448 = vpack.c.b16 %v2442, %v2441
        %v2449 = vpack.c.b16 %v2444, %v2443
        %v2450 = vpack.c.b16 %v2445, %v2445
        %vm2455 = vcmask 588800
        %v2457 = vsel %vm2455, %v2424, 0
        %v2460 = vsel %vm2455, %v2425, 0
        %v2463 = vsel %vm2455, %v2426, 0
        %v2466 = vsel %vm2455, %v2427, 0
        %vm2468 = vcmask 1043456
        %v2470 = vsel %vm2468, %v2450, 0
        %2472 = vmatprep.subr.bf16.mxu0 0
        %2473 = vmatpush1.bf16.msra.mxu0 %v2446
        %2474 = vmatprep.subr.bf16.mxu0 0
        %2475 = vmatpush1.bf16.msra.mxu0 %v2447
        %2476 = vmatprep.subr.bf16.mxu0 0
        %2477 = vmatpush1.bf16.msra.mxu0 %v2448
        %2478 = vmatprep.subr.bf16.mxu0 0
        %2479 = vmatpush1.bf16.msra.mxu0 %v2449
        %2480 = vmatprep.subr.bf16.mxu0 0
        %2481 = vmatpush1.bf16.msra.mxu0 %v2470
        %2482 = vmatprep.subr.bf16.mxu0 0
        %2483 = vmatpush1.bf16.msra.mxu0 0
        %2484 = vmatprep.subr.bf16.mxu0 0
        %2485 = vmatpush1.bf16.msra.mxu0 0
        %2486 = vmatprep.subr.bf16.mxu0 0
        %2487 = vmatpush1.bf16.msra.mxu0 0
        %2488 = vmatprep.subr.bf16.mxu0 0
        %2489 = vmatpush1.bf16.msra.mxu0 0
        %2490 = vmatprep.subr.bf16.mxu0 0
        %2491 = vmatpush1.bf16.msra.mxu0 0
        %2492 = vmatprep.subr.bf16.mxu0 0
        %2493 = vmatpush1.bf16.msra.mxu0 0
        %2494 = vmatprep.subr.bf16.mxu0 0
        %2495 = vmatpush1.bf16.msra.mxu0 0
        %2496 = vmatprep.subr.bf16.mxu0 0
        %2497 = vmatpush1.bf16.msra.mxu0 0
        %2498 = vmatprep.subr.bf16.mxu0 0
        %2499 = vmatpush1.bf16.msra.mxu0 0
        %2500 = vmatprep.subr.bf16.mxu0 0
        %2501 = vmatpush1.bf16.msra.mxu0 0
        %2502 = vmatprep.subr.bf16.mxu0 0
        %2503 = vmatpush1.bf16.msra.mxu0 0
        %2504 = vmatprep.mubr.bf16.mxu0 0
        %2505 = vmatmul.mubr.bf16.gmra.mrb[0].mxu0 %v2457
        %v2506 = vpop.f32.mrb[0].mxu0
        %v2507 = vadd.f32 0.0, %v2506
        %v2508 = vpop.f32.mrb[0].mxu0
        %v2509 = vpop.f32.mrb[0].mxu0
        %v2510 = vadd.f32 0.0, %v2509
        %v2511 = vpop.f32.mrb[0].mxu0
        %2512 = vmatprep.mubr.bf16.mxu0 0
        %2513 = vmatmul.mubr.bf16.gmra.mrb[0].mxu0 %v2460
        %v2514 = vpop.f32.mrb[0].mxu0
        %v2515 = vadd.f32 0.0, %v2514
        %v2516 = vpop.f32.mrb[0].mxu0
        %v2517 = vpop.f32.mrb[0].mxu0
        %v2518 = vadd.f32 0.0, %v2517
        %v2519 = vpop.f32.mrb[0].mxu0
        %2520 = vmatprep.mubr.bf16.mxu0 0
        %2521 = vmatmul.mubr.bf16.gmra.mrb[0].mxu0 %v2463
        %v2522 = vpop.f32.mrb[0].mxu0
        %v2523 = vadd.f32 0.0, %v2522
        %v2524 = vpop.f32.mrb[0].mxu0
        %v2525 = vpop.f32.mrb[0].mxu0
        %v2526 = vadd.f32 0.0, %v2525
        %v2527 = vpop.f32.mrb[0].mxu0
        %2528 = vmatprep.mubr.bf16.mxu0 0
        %2529 = vmatmul.mubr.bf16.gmra.mrb[0].mxu0 %v2466
        %v2530 = vpop.f32.mrb[0].mxu0
        %v2531 = vadd.f32 0.0, %v2530
        %v2532 = vpop.f32.mrb[0].mxu0
        %v2533 = vpop.f32.mrb[0].mxu0
        %v2534 = vadd.f32 0.0, %v2533
        %v2535 = vpop.f32.mrb[0].mxu0
        %2536 = vdwg.mxu0
        %v2537 = vadd.f32 %v651, %v2507
        %v2538 = vadd.f32 %v652, %v2510
        %v2539 = vadd.f32 %v653, %v2515
        %v2540 = vadd.f32 %v654, %v2518
        %v2541 = vadd.f32 %v655, %v2523
        %v2542 = vadd.f32 %v656, %v2526
        %v2543 = vadd.f32 %v657, %v2531
        %v2544 = vadd.f32 %v658, %v2534
        %s2545 = scalar_lea.vmem %s1, 1
        %v2546 = vld [vmem:[%s2545] sm:$0x1]
        %v2548 = vlaneseq
        %v2549 = vshrl.u32 %v2548, 7
        %v2550 = vsub.s32 0, %v2549
        %v2551 = vrot.slane %v2546, %v2550
        %v2553 = vmul.f32 %v384, %v2551
        %v2554 = vmul.f32 %v385, %v2551
        %v2555 = vmul.f32 %v386, %v2551
        %v2556 = vmul.f32 %v387, %v2551
        %v2557 = vmul.f32 %v388, %v2551
        %v2558 = vmul.f32 %v389, %v2551
        %v2559 = vmul.f32 %v390, %v2551
        %v2560 = vmul.f32 %v391, %v2551
        %v2561 = vmul.f32 %v392, %v2551
        %v2562 = vmul.f32 %v393, %v2551
        %v2563 = vmul.f32 %v394, %v2551
        %v2564 = vmul.f32 %v395, %v2551
        %v2565 = vmul.f32 %v396, %v2551
        %v2566 = vmul.f32 %v397, %v2551
        %v2567 = vmul.f32 %v398, %v2551
        %v2568 = vmul.f32 %v399, %v2551
        %v2569 = vmul.f32 %v400, %v2551
        %v2570 = vmul.f32 %v401, %v2551
        %v2571 = vmul.f32 %v402, %v2551
        %v2572 = vmul.f32 %v403, %v2551
        %v2573 = vmul.f32 %v404, %v2551
        %v2574 = vmul.f32 %v405, %v2551
        %v2575 = vmul.f32 %v406, %v2551
        %v2576 = vmul.f32 %v407, %v2551
        %v2577 = vmul.f32 %v408, %v2551
        %v2578 = vmul.f32 %v409, %v2551
        %v2579 = vmul.f32 %v410, %v2551
        %v2580 = vmul.f32 %v411, %v2551
        %v2581 = vmul.f32 %v412, %v2551
        %v2582 = vmul.f32 %v413, %v2551
        %v2583 = vmul.f32 %v414, %v2551
        %v2584 = vmul.f32 %v415, %v2551
        %s2585 = scalar_lea.vmem %s2, 1
        %v2586 = vld [vmem:[%s2585] sm:$0x1]
        %v2588 = vlaneseq
        %v2589 = vshrl.u32 %v2588, 7
        %v2590 = vsub.s32 0, %v2589
        %v2591 = vrot.slane %v2586, %v2590
        %v2593 = vadd.f32 %v2553, %v2591
        %v2594 = vadd.f32 %v2554, %v2591
        %v2595 = vadd.f32 %v2555, %v2591
        %v2596 = vadd.f32 %v2556, %v2591
        %v2597 = vadd.f32 %v2557, %v2591
        %v2598 = vadd.f32 %v2558, %v2591
        %v2599 = vadd.f32 %v2559, %v2591
        %v2600 = vadd.f32 %v2560, %v2591
        %v2601 = vadd.f32 %v2561, %v2591
        %v2602 = vadd.f32 %v2562, %v2591
        %v2603 = vadd.f32 %v2563, %v2591
        %v2604 = vadd.f32 %v2564, %v2591
        %v2605 = vadd.f32 %v2565, %v2591
        %v2606 = vadd.f32 %v2566, %v2591
        %v2607 = vadd.f32 %v2567, %v2591
        %v2608 = vadd.f32 %v2568, %v2591
        %v2609 = vadd.f32 %v2569, %v2591
        %v2610 = vadd.f32 %v2570, %v2591
        %v2611 = vadd.f32 %v2571, %v2591
        %v2612 = vadd.f32 %v2572, %v2591
        %v2613 = vadd.f32 %v2573, %v2591
        %v2614 = vadd.f32 %v2574, %v2591
        %v2615 = vadd.f32 %v2575, %v2591
        %v2616 = vadd.f32 %v2576, %v2591
        %v2617 = vadd.f32 %v2577, %v2591
        %v2618 = vadd.f32 %v2578, %v2591
        %v2619 = vadd.f32 %v2579, %v2591
        %v2620 = vadd.f32 %v2580, %v2591
        %v2621 = vadd.f32 %v2581, %v2591
        %v2622 = vadd.f32 %v2582, %v2591
        %v2623 = vadd.f32 %v2583, %v2591
        %v2624 = vadd.f32 %v2584, %v2591
        %v2625 = vmax.f32 %v2593, 0.0
        %v2626 = vmax.f32 %v2594, 0.0
        %v2627 = vmax.f32 %v2595, 0.0
        %v2628 = vmax.f32 %v2596, 0.0
        %v2629 = vmax.f32 %v2597, 0.0
        %v2630 = vmax.f32 %v2598, 0.0
        %v2631 = vmax.f32 %v2599, 0.0
        %v2632 = vmax.f32 %v2600, 0.0
        %v2633 = vmax.f32 %v2601, 0.0
        %v2634 = vmax.f32 %v2602, 0.0
        %v2635 = vmax.f32 %v2603, 0.0
        %v2636 = vmax.f32 %v2604, 0.0
        %v2637 = vmax.f32 %v2605, 0.0
        %v2638 = vmax.f32 %v2606, 0.0
        %v2639 = vmax.f32 %v2607, 0.0
        %v2640 = vmax.f32 %v2608, 0.0
        %v2641 = vmax.f32 %v2609, 0.0
        %v2642 = vmax.f32 %v2610, 0.0
        %v2643 = vmax.f32 %v2611, 0.0
        %v2644 = vmax.f32 %v2612, 0.0
        %v2645 = vmax.f32 %v2613, 0.0
        %v2646 = vmax.f32 %v2614, 0.0
        %v2647 = vmax.f32 %v2615, 0.0
        %v2648 = vmax.f32 %v2616, 0.0
        %v2649 = vmax.f32 %v2617, 0.0
        %v2650 = vmax.f32 %v2618, 0.0
        %v2651 = vmax.f32 %v2619, 0.0
        %v2652 = vmax.f32 %v2620, 0.0
        %v2653 = vmax.f32 %v2621, 0.0
        %v2654 = vmax.f32 %v2622, 0.0
        %v2655 = vmax.f32 %v2623, 0.0
        %v2656 = vmax.f32 %v2624, 0.0
        %2657 = vst.msk [vmem:[%s769 + $0x1] sm:$0xff] %vm416, %v2625
        %2658 = vst.msk [vmem:[%s769 + $0x9] sm:$0xff] %vm416, %v2626
        %2659 = vst.msk [vmem:[%s769 + $0x19] sm:$0xff] %vm416, %v2627
        %2660 = vst.msk [vmem:[%s769 + $0x21] sm:$0xff] %vm416, %v2628
        %2661 = vst.msk [vmem:[%s769 + $0x31] sm:$0xff] %vm416, %v2629
        %2662 = vst.msk [vmem:[%s769 + $0x39] sm:$0xff] %vm416, %v2630
        %2663 = vst.msk [vmem:[%s769 + $0x49] sm:$0xff] %vm416, %v2631
        %2664 = vst.msk [vmem:[%s769 + $0x51] sm:$0xff] %vm416, %v2632
        %2665 = vst.msk [vmem:[%s769 + $0x61] sm:$0xff] %vm416, %v2633
        %2666 = vst.msk [vmem:[%s769 + $0x69] sm:$0xff] %vm416, %v2634
        %2667 = vst.msk [vmem:[%s769 + $0x79] sm:$0xff] %vm416, %v2635
        %2668 = vst.msk [vmem:[%s769 + $0x81] sm:$0xff] %vm416, %v2636
        %2669 = vst.msk [vmem:[%s769 + $0x91] sm:$0xff] %vm416, %v2637
        %2670 = vst.msk [vmem:[%s769 + $0x99] sm:$0xff] %vm416, %v2638
        %2671 = vst.msk [vmem:[%s769 + $0xa9] sm:$0xff] %vm416, %v2639
        %2672 = vst.msk [vmem:[%s769 + $0xb1] sm:$0xff] %vm416, %v2640
        %2673 = vst.msk [vmem:[%s769 + $0xc1] sm:$0xff] %vm416, %v2641
        %2674 = vst.msk [vmem:[%s769 + $0xc9] sm:$0xff] %vm416, %v2642
        %2675 = vst.msk [vmem:[%s769 + $0xd9] sm:$0xff] %vm416, %v2643
        %2676 = vst.msk [vmem:[%s769 + $0xe1] sm:$0xff] %vm416, %v2644
        %2677 = vst.msk [vmem:[%s769 + $0xf1] sm:$0xff] %vm416, %v2645
        %2678 = vst.msk [vmem:[%s769 + $0xf9] sm:$0xff] %vm416, %v2646
        %2679 = vst.msk [vmem:[%s769 + $0x109] sm:$0xff] %vm416, %v2647
        %2680 = vst.msk [vmem:[%s769 + $0x111] sm:$0xff] %vm416, %v2648
        %2681 = vst.msk [vmem:[%s769 + $0x121] sm:$0xff] %vm416, %v2649
        %2682 = vst.msk [vmem:[%s769 + $0x129] sm:$0xff] %vm416, %v2650
        %2683 = vst.msk [vmem:[%s769 + $0x139] sm:$0xff] %vm416, %v2651
        %2684 = vst.msk [vmem:[%s769 + $0x141] sm:$0xff] %vm416, %v2652
        %2685 = vst.msk [vmem:[%s769 + $0x151] sm:$0xff] %vm416, %v2653
        %2686 = vst.msk [vmem:[%s769 + $0x159] sm:$0xff] %vm416, %v2654
        %2687 = vst.msk [vmem:[%s769 + $0x169] sm:$0xff] %vm416, %v2655
        %2688 = vst.msk [vmem:[%s769 + $0x171] sm:$0xff] %vm416, %v2656
        %s2689 = scalar_lea.vmem %s3, 20
        %v2690 = vld [vmem:[%s2689] sm:$0xf]
        %v2691 = vld [vmem:[%s2689 + $0x4] sm:$0xf]
        %v2692 = vld [vmem:[%s2689 + $0x8] sm:$0xf]
        %v2693 = vld [vmem:[%s2689 + $0xc] sm:$0xf]
        %v2694 = vld [vmem:[%s2689 + $0x10] sm:$0x3]
        %v2695 = vld [vmem:[#allocation2] ss:$2 sm:$0xff]
        %v2696 = vld [vmem:[%s808] ss:$2 sm:$0x1]
        %v2697 = vld [vmem:[%s810] ss:$2 sm:$0xff]
        %v2698 = vld [vmem:[%s812] ss:$2 sm:$0x1]
        %v2699 = vld [vmem:[%s814] ss:$2 sm:$0xff]
        %v2700 = vld [vmem:[%s816] ss:$2 sm:$0x1]
        %v2701 = vld [vmem:[%s818] ss:$2 sm:$0xff]
        %v2702 = vld [vmem:[%s820] ss:$2 sm:$0x1]
        %v2703 = vld [vmem:[%s822] ss:$2 sm:$0xff]
        %v2704 = vld [vmem:[%s824] ss:$2 sm:$0x1]
        %v2705 = vld [vmem:[%s826] ss:$2 sm:$0xff]
        %v2706 = vld [vmem:[%s828] ss:$2 sm:$0x1]
        %v2707 = vld [vmem:[%s830] ss:$2 sm:$0xff]
        %v2708 = vld [vmem:[%s832] ss:$2 sm:$0x1]
        %v2709 = vld [vmem:[%s834] ss:$2 sm:$0xff]
        %v2710 = vld [vmem:[%s836] ss:$2 sm:$0x1]
        %v2711 = vld [vmem:[%s838] ss:$2 sm:$0xff]
        %v2712 = vld [vmem:[%s840] ss:$2 sm:$0x1]
        %v2713 = vpack.c.bf16 %v2696, %v2695
        %v2714 = vpack.c.bf16 %v2698, %v2697
        %v2715 = vpack.c.bf16 %v2700, %v2699
        %v2716 = vpack.c.bf16 %v2702, %v2701
        %v2717 = vpack.c.bf16 %v2704, %v2703
        %v2718 = vpack.c.bf16 %v2706, %v2705
        %v2719 = vpack.c.bf16 %v2708, %v2707
        %v2720 = vpack.c.bf16 %v2710, %v2709
        %v2721 = vpack.c.bf16 %v2712, %v2711
        %v2722 = vld [vmem:[%s851] ss:$2 sm:$0xff]
        %v2723 = vld [vmem:[%s853] ss:$2 sm:$0xff]
        %v2724 = vld [vmem:[%s855] ss:$2 sm:$0xff]
        %v2725 = vld [vmem:[%s857] ss:$2 sm:$0xff]
        %v2726 = vld [vmem:[%s859] ss:$2 sm:$0xff]
        %v2727 = vld [vmem:[%s861] ss:$2 sm:$0xff]
        %v2728 = vld [vmem:[%s863] ss:$2 sm:$0xff]
        %v2729 = vld [vmem:[%s865] ss:$2 sm:$0xff]
        %v2730 = vld [vmem:[%s867] ss:$2 sm:$0xff]
        %v2731 = vpack.c.bf16 %v2722, %v2722
        %v2732 = vpack.c.bf16 %v2723, %v2723
        %v2733 = vpack.c.bf16 %v2724, %v2724
        %v2734 = vpack.c.bf16 %v2725, %v2725
        %v2735 = vpack.c.bf16 %v2726, %v2726
        %v2736 = vpack.c.bf16 %v2727, %v2727
        %v2737 = vpack.c.bf16 %v2728, %v2728
        %v2738 = vpack.c.bf16 %v2729, %v2729
        %v2739 = vpack.c.bf16 %v2730, %v2730
        %v2740 = vld [vmem:[%s769] ss:$2 sm:$0xff]
        %v2741 = vld [vmem:[%s879] ss:$2 sm:$0x1]
        %v2742 = vld [vmem:[%s881] ss:$2 sm:$0xff]
        %v2743 = vld [vmem:[%s883] ss:$2 sm:$0x1]
        %v2744 = vld [vmem:[%s885] ss:$2 sm:$0xff]
        %v2745 = vld [vmem:[%s887] ss:$2 sm:$0x1]
        %v2746 = vld [vmem:[%s889] ss:$2 sm:$0xff]
        %v2747 = vld [vmem:[%s891] ss:$2 sm:$0x1]
        %v2748 = vld [vmem:[%s893] ss:$2 sm:$0xff]
        %v2749 = vld [vmem:[%s895] ss:$2 sm:$0x1]
        %v2750 = vld [vmem:[%s897] ss:$2 sm:$0xff]
        %v2751 = vld [vmem:[%s899] ss:$2 sm:$0x1]
        %v2752 = vld [vmem:[%s901] ss:$2 sm:$0xff]
        %v2753 = vld [vmem:[%s903] ss:$2 sm:$0x1]
        %v2754 = vld [vmem:[%s905] ss:$2 sm:$0xff]
        %v2755 = vld [vmem:[%s907] ss:$2 sm:$0x1]
        %v2756 = vpack.c.bf16 %v2741, %v2740
        %v2757 = vpack.c.bf16 %v2743, %v2742
        %v2758 = vpack.c.bf16 %v2745, %v2744
        %v2759 = vpack.c.bf16 %v2747, %v2746
        %v2760 = vpack.c.bf16 %v2749, %v2748
        %v2761 = vpack.c.bf16 %v2751, %v2750
        %v2762 = vpack.c.bf16 %v2753, %v2752
        %v2763 = vpack.c.bf16 %v2755, %v2754
        %v2764 = vld [vmem:[%s917] ss:$2 sm:$0xff]
        %v2765 = vld [vmem:[%s919] ss:$2 sm:$0xff]
        %v2766 = vld [vmem:[%s921] ss:$2 sm:$0xff]
        %v2767 = vld [vmem:[%s923] ss:$2 sm:$0xff]
        %v2768 = vld [vmem:[%s925] ss:$2 sm:$0xff]
        %v2769 = vld [vmem:[%s927] ss:$2 sm:$0xff]
        %v2770 = vld [vmem:[%s929] ss:$2 sm:$0xff]
        %v2771 = vld [vmem:[%s931] ss:$2 sm:$0xff]
        %v2772 = vpack.c.bf16 %v2764, %v2764
        %v2773 = vpack.c.bf16 %v2765, %v2765
        %v2774 = vpack.c.bf16 %v2766, %v2766
        %v2775 = vpack.c.bf16 %v2767, %v2767
        %v2776 = vpack.c.bf16 %v2768, %v2768
        %v2777 = vpack.c.bf16 %v2769, %v2769
        %v2778 = vpack.c.bf16 %v2770, %v2770
        %v2779 = vpack.c.bf16 %v2771, %v2771
        %2788 = vrot.lane.b32.xlu0 %v2731, 4
        %v2789 = vpop.permute.xlu0 %2788
        %2790 = vrot.lane.b32.xlu0 %v2732, 4
        %v2791 = vpop.permute.xlu0 %2790
        %2792 = vrot.lane.b32.xlu0 %v2733, 4
        %v2793 = vpop.permute.xlu0 %2792
        %2794 = vrot.lane.b32.xlu0 %v2734, 4
        %v2795 = vpop.permute.xlu0 %2794
        %2796 = vrot.lane.b32.xlu0 %v2735, 4
        %v2797 = vpop.permute.xlu0 %2796
        %2798 = vrot.lane.b32.xlu0 %v2736, 4
        %v2799 = vpop.permute.xlu0 %2798
        %2800 = vrot.lane.b32.xlu0 %v2737, 4
        %v2801 = vpop.permute.xlu0 %2800
        %2802 = vrot.lane.b32.xlu0 %v2738, 4
        %v2803 = vpop.permute.xlu0 %2802
        %v2805 = vshrl.u32 %v2713, 16
        %v2807 = vshll.u32 %v2713, 16
        %v2809 = vrot.slane %v2807, 1
        %v2810 = vor.u32 %v2805, %v2809
        %v2812 = vshrl.u32 %v2714, 16
        %v2814 = vshll.u32 %v2714, 16
        %v2816 = vrot.slane %v2814, 1
        %v2817 = vor.u32 %v2812, %v2816
        %v2819 = vshrl.u32 %v2715, 16
        %v2821 = vshll.u32 %v2715, 16
        %v2823 = vrot.slane %v2821, 1
        %v2824 = vor.u32 %v2819, %v2823
        %v2826 = vshrl.u32 %v2716, 16
        %v2828 = vshll.u32 %v2716, 16
        %v2830 = vrot.slane %v2828, 1
        %v2831 = vor.u32 %v2826, %v2830
        %v2833 = vshrl.u32 %v2717, 16
        %v2835 = vshll.u32 %v2717, 16
        %v2837 = vrot.slane %v2835, 1
        %v2838 = vor.u32 %v2833, %v2837
        %v2840 = vshrl.u32 %v2718, 16
        %v2842 = vshll.u32 %v2718, 16
        %v2844 = vrot.slane %v2842, 1
        %v2845 = vor.u32 %v2840, %v2844
        %v2847 = vshrl.u32 %v2719, 16
        %v2849 = vshll.u32 %v2719, 16
        %v2851 = vrot.slane %v2849, 1
        %v2852 = vor.u32 %v2847, %v2851
        %v2854 = vshrl.u32 %v2720, 16
        %v2856 = vshll.u32 %v2720, 16
        %v2858 = vrot.slane %v2856, 1
        %v2859 = vor.u32 %v2854, %v2858
        %2860 = vrot.lane.b32.xlu0 %v2810, 8
        %v2861 = vpop.permute.xlu0 %2860
        %2862 = vrot.lane.b32.xlu0 %v2817, 8
        %v2863 = vpop.permute.xlu0 %2862
        %2864 = vrot.lane.b32.xlu0 %v2824, 8
        %v2865 = vpop.permute.xlu0 %2864
        %2866 = vrot.lane.b32.xlu0 %v2831, 8
        %v2867 = vpop.permute.xlu0 %2866
        %2868 = vrot.lane.b32.xlu0 %v2838, 8
        %v2869 = vpop.permute.xlu0 %2868
        %2870 = vrot.lane.b32.xlu0 %v2845, 8
        %v2871 = vpop.permute.xlu0 %2870
        %2872 = vrot.lane.b32.xlu0 %v2852, 8
        %v2873 = vpop.permute.xlu0 %2872
        %2874 = vrot.lane.b32.xlu0 %v2859, 8
        %v2875 = vpop.permute.xlu0 %2874
        %2884 = vrot.lane.b32.xlu0 %v2756, 12
        %v2885 = vpop.permute.xlu0 %2884
        %2886 = vrot.lane.b32.xlu0 %v2757, 12
        %v2887 = vpop.permute.xlu0 %2886
        %2888 = vrot.lane.b32.xlu0 %v2758, 12
        %v2889 = vpop.permute.xlu0 %2888
        %2890 = vrot.lane.b32.xlu0 %v2759, 12
        %v2891 = vpop.permute.xlu0 %2890
        %2892 = vrot.lane.b32.xlu0 %v2760, 12
        %v2893 = vpop.permute.xlu0 %2892
        %2894 = vrot.lane.b32.xlu0 %v2761, 12
        %v2895 = vpop.permute.xlu0 %2894
        %2896 = vrot.lane.b32.xlu0 %v2762, 12
        %v2897 = vpop.permute.xlu0 %2896
        %2898 = vrot.lane.b32.xlu0 %v2763, 12
        %v2899 = vpop.permute.xlu0 %2898
        %2908 = vrot.lane.b32.xlu0 %v2772, 16
        %v2909 = vpop.permute.xlu0 %2908
        %2910 = vrot.lane.b32.xlu0 %v2773, 16
        %v2911 = vpop.permute.xlu0 %2910
        %2912 = vrot.lane.b32.xlu0 %v2774, 16
        %v2913 = vpop.permute.xlu0 %2912
        %2914 = vrot.lane.b32.xlu0 %v2775, 16
        %v2915 = vpop.permute.xlu0 %2914
        %2916 = vrot.lane.b32.xlu0 %v2776, 16
        %v2917 = vpop.permute.xlu0 %2916
        %2918 = vrot.lane.b32.xlu0 %v2777, 16
        %v2919 = vpop.permute.xlu0 %2918
        %2920 = vrot.lane.b32.xlu0 %v2778, 16
        %v2921 = vpop.permute.xlu0 %2920
        %2922 = vrot.lane.b32.xlu0 %v2779, 16
        %v2923 = vpop.permute.xlu0 %2922
        %v2925 = vshrl.u32 %v2756, 16
        %v2927 = vshll.u32 %v2756, 16
        %v2929 = vrot.slane %v2927, 1
        %v2930 = vor.u32 %v2925, %v2929
        %v2932 = vshrl.u32 %v2757, 16
        %v2934 = vshll.u32 %v2757, 16
        %v2936 = vrot.slane %v2934, 1
        %v2937 = vor.u32 %v2932, %v2936
        %v2939 = vshrl.u32 %v2758, 16
        %v2941 = vshll.u32 %v2758, 16
        %v2943 = vrot.slane %v2941, 1
        %v2944 = vor.u32 %v2939, %v2943
        %v2946 = vshrl.u32 %v2759, 16
        %v2948 = vshll.u32 %v2759, 16
        %v2950 = vrot.slane %v2948, 1
        %v2951 = vor.u32 %v2946, %v2950
        %v2953 = vshrl.u32 %v2760, 16
        %v2955 = vshll.u32 %v2760, 16
        %v2957 = vrot.slane %v2955, 1
        %v2958 = vor.u32 %v2953, %v2957
        %v2960 = vshrl.u32 %v2761, 16
        %v2962 = vshll.u32 %v2761, 16
        %v2964 = vrot.slane %v2962, 1
        %v2965 = vor.u32 %v2960, %v2964
        %v2967 = vshrl.u32 %v2762, 16
        %v2969 = vshll.u32 %v2762, 16
        %v2971 = vrot.slane %v2969, 1
        %v2972 = vor.u32 %v2967, %v2971
        %v2974 = vshrl.u32 %v2763, 16
        %v2976 = vshll.u32 %v2763, 16
        %v2978 = vrot.slane %v2976, 1
        %v2979 = vor.u32 %v2974, %v2978
        %2980 = vrot.lane.b32.xlu0 %v2930, 20
        %v2981 = vpop.permute.xlu0 %2980
        %2982 = vrot.lane.b32.xlu0 %v2937, 20
        %v2983 = vpop.permute.xlu0 %2982
        %2984 = vrot.lane.b32.xlu0 %v2944, 20
        %v2985 = vpop.permute.xlu0 %2984
        %2986 = vrot.lane.b32.xlu0 %v2951, 20
        %v2987 = vpop.permute.xlu0 %2986
        %2988 = vrot.lane.b32.xlu0 %v2958, 20
        %v2989 = vpop.permute.xlu0 %2988
        %2990 = vrot.lane.b32.xlu0 %v2965, 20
        %v2991 = vpop.permute.xlu0 %2990
        %2992 = vrot.lane.b32.xlu0 %v2972, 20
        %v2993 = vpop.permute.xlu0 %2992
        %2994 = vrot.lane.b32.xlu0 %v2979, 20
        %v2995 = vpop.permute.xlu0 %2994
        %3004 = vrot.lane.b32.xlu0 %v2714, 24
        %v3005 = vpop.permute.xlu0 %3004
        %3006 = vrot.lane.b32.xlu0 %v2715, 24
        %v3007 = vpop.permute.xlu0 %3006
        %3008 = vrot.lane.b32.xlu0 %v2716, 24
        %v3009 = vpop.permute.xlu0 %3008
        %3010 = vrot.lane.b32.xlu0 %v2717, 24
        %v3011 = vpop.permute.xlu0 %3010
        %3012 = vrot.lane.b32.xlu0 %v2718, 24
        %v3013 = vpop.permute.xlu0 %3012
        %3014 = vrot.lane.b32.xlu0 %v2719, 24
        %v3015 = vpop.permute.xlu0 %3014
        %3016 = vrot.lane.b32.xlu0 %v2720, 24
        %v3017 = vpop.permute.xlu0 %3016
        %3018 = vrot.lane.b32.xlu0 %v2721, 24
        %v3019 = vpop.permute.xlu0 %3018
        %3021 = vrot.lane.b32.xlu0 %v2732, 28
        %v3022 = vpop.permute.xlu0 %3021
        %3023 = vrot.lane.b32.xlu0 %v2733, 28
        %v3024 = vpop.permute.xlu0 %3023
        %3025 = vrot.lane.b32.xlu0 %v2734, 28
        %v3026 = vpop.permute.xlu0 %3025
        %3027 = vrot.lane.b32.xlu0 %v2735, 28
        %v3028 = vpop.permute.xlu0 %3027
        %3029 = vrot.lane.b32.xlu0 %v2736, 28
        %v3030 = vpop.permute.xlu0 %3029
        %3031 = vrot.lane.b32.xlu0 %v2737, 28
        %v3032 = vpop.permute.xlu0 %3031
        %3033 = vrot.lane.b32.xlu0 %v2738, 28
        %v3034 = vpop.permute.xlu0 %3033
        %3035 = vrot.lane.b32.xlu0 %v2739, 28
        %v3036 = vpop.permute.xlu0 %3035
        %v3038 = vshrl.u32 %v2721, 16
        %v3040 = vshll.u32 %v2721, 16
        %v3042 = vrot.slane %v3040, 1
        %v3043 = vor.u32 %v3038, %v3042
        %3044 = vrot.lane.b32.xlu0 %v2817, 32
        %v3045 = vpop.permute.xlu0 %3044
        %3046 = vrot.lane.b32.xlu0 %v2824, 32
        %v3047 = vpop.permute.xlu0 %3046
        %3048 = vrot.lane.b32.xlu0 %v2831, 32
        %v3049 = vpop.permute.xlu0 %3048
        %3050 = vrot.lane.b32.xlu0 %v2838, 32
        %v3051 = vpop.permute.xlu0 %3050
        %3052 = vrot.lane.b32.xlu0 %v2845, 32
        %v3053 = vpop.permute.xlu0 %3052
        %3054 = vrot.lane.b32.xlu0 %v2852, 32
        %v3055 = vpop.permute.xlu0 %3054
        %3056 = vrot.lane.b32.xlu0 %v2859, 32
        %v3057 = vpop.permute.xlu0 %3056
        %3058 = vrot.lane.b32.xlu0 %v3043, 32
        %v3059 = vpop.permute.xlu0 %3058
        %v3061 = vsel %vm416, %v2713, %v2789
        %v3063 = vsel %vm416, %v2714, %v2791
        %v3065 = vsel %vm416, %v2715, %v2793
        %v3067 = vsel %vm416, %v2716, %v2795
        %v3069 = vsel %vm416, %v2717, %v2797
        %v3071 = vsel %vm416, %v2718, %v2799
        %v3073 = vsel %vm416, %v2719, %v2801
        %v3075 = vsel %vm416, %v2720, %v2803
        %v3077 = vsel %vm1237, %v3061, %v2861
        %v3079 = vsel %vm1237, %v3063, %v2863
        %v3081 = vsel %vm1237, %v3065, %v2865
        %v3083 = vsel %vm1237, %v3067, %v2867
        %v3085 = vsel %vm1237, %v3069, %v2869
        %v3087 = vsel %vm1237, %v3071, %v2871
        %v3089 = vsel %vm1237, %v3073, %v2873
        %v3091 = vsel %vm1237, %v3075, %v2875
        %v3093 = vsel %vm1254, %v3077, %v2885
        %v3095 = vsel %vm1254, %v3079, %v2887
        %v3097 = vsel %vm1254, %v3081, %v2889
        %v3099 = vsel %vm1254, %v3083, %v2891
        %v3101 = vsel %vm1254, %v3085, %v2893
        %v3103 = vsel %vm1254, %v3087, %v2895
        %v3105 = vsel %vm1254, %v3089, %v2897
        %v3107 = vsel %vm1254, %v3091, %v2899
        %v3109 = vsel %vm1271, %v3093, %v2909
        %v3111 = vsel %vm1271, %v3095, %v2911
        %v3113 = vsel %vm1271, %v3097, %v2913
        %v3115 = vsel %vm1271, %v3099, %v2915
        %v3117 = vsel %vm1271, %v3101, %v2917
        %v3119 = vsel %vm1271, %v3103, %v2919
        %v3121 = vsel %vm1271, %v3105, %v2921
        %v3123 = vsel %vm1271, %v3107, %v2923
        %v3125 = vsel %vm1288, %v3109, %v2981
        %v3127 = vsel %vm1288, %v3111, %v2983
        %v3129 = vsel %vm1288, %v3113, %v2985
        %v3131 = vsel %vm1288, %v3115, %v2987
        %v3133 = vsel %vm1288, %v3117, %v2989
        %v3135 = vsel %vm1288, %v3119, %v2991
        %v3137 = vsel %vm1288, %v3121, %v2993
        %v3139 = vsel %vm1288, %v3123, %v2995
        %v3141 = vsel %vm1305, %v3125, %v3005
        %v3143 = vsel %vm1305, %v3127, %v3007
        %v3145 = vsel %vm1305, %v3129, %v3009
        %v3147 = vsel %vm1305, %v3131, %v3011
        %v3149 = vsel %vm1305, %v3133, %v3013
        %v3151 = vsel %vm1305, %v3135, %v3015
        %v3153 = vsel %vm1305, %v3137, %v3017
        %v3155 = vsel %vm1305, %v3139, %v3019
        %v3157 = vsel %vm1322, %v3141, %v3022
        %v3159 = vsel %vm1322, %v3143, %v3024
        %v3161 = vsel %vm1322, %v3145, %v3026
        %v3163 = vsel %vm1322, %v3147, %v3028
        %v3165 = vsel %vm1322, %v3149, %v3030
        %v3167 = vsel %vm1322, %v3151, %v3032
        %v3169 = vsel %vm1322, %v3153, %v3034
        %v3171 = vsel %vm1322, %v3155, %v3036
        %v3173 = vsel %vm1339, %v3157, %v3045
        %v3175 = vsel %vm1339, %v3159, %v3047
        %v3177 = vsel %vm1339, %v3161, %v3049
        %v3179 = vsel %vm1339, %v3163, %v3051
        %v3181 = vsel %vm1339, %v3165, %v3053
        %v3183 = vsel %vm1339, %v3167, %v3055
        %v3185 = vsel %vm1339, %v3169, %v3057
        %v3187 = vsel %vm1339, %v3171, %v3059
        %v3196 = vunpack.c.l.b16 %v3173
        %v3197 = vunpack.c.l.b16 %v3175
        %v3198 = vunpack.c.l.b16 %v3177
        %v3199 = vunpack.c.l.b16 %v3179
        %v3200 = vunpack.c.l.b16 %v3181
        %v3201 = vunpack.c.l.b16 %v3183
        %v3202 = vunpack.c.l.b16 %v3185
        %v3203 = vunpack.c.l.b16 %v3187
        %v3204 = vpack.c.b16 %v3197, %v3196
        %v3205 = vpack.c.b16 %v3199, %v3198
        %v3206 = vpack.c.b16 %v3201, %v3200
        %v3207 = vpack.c.b16 %v3203, %v3202
        %v3213 = vunpack.c.l.b16 %v2690
        %v3214 = vunpack.c.l.b16 %v2691
        %v3215 = vunpack.c.l.b16 %v2692
        %v3216 = vunpack.c.l.b16 %v2693
        %v3217 = vunpack.c.l.b16 %v2694
        %v3218 = vpack.c.b16 %v3214, %v3213
        %v3219 = vpack.c.b16 %v3216, %v3215
        %v3220 = vpack.c.b16 %v3217, %v3217
        %v3224 = vsel %vm1391, %v3204, 0
        %v3227 = vsel %vm1391, %v3205, 0
        %v3230 = vsel %vm1391, %v3206, 0
        %v3233 = vsel %vm1391, %v3207, 0
        %v3236 = vsel %vm575, %v3220, 0
        %3238 = vmatprep.subr.bf16.mxu0 0
        %3239 = vmatpush1.bf16.msra.mxu0 %v3218
        %3240 = vmatprep.subr.bf16.mxu0 0
        %3241 = vmatpush1.bf16.msra.mxu0 %v3219
        %3242 = vmatprep.subr.bf16.mxu0 0
        %3243 = vmatpush1.bf16.msra.mxu0 %v3236
        %3244 = vmatprep.subr.bf16.mxu0 0
        %3245 = vmatpush1.bf16.msra.mxu0 0
        %3246 = vmatprep.subr.bf16.mxu0 0
        %3247 = vmatpush1.bf16.msra.mxu0 0
        %3248 = vmatprep.subr.bf16.mxu0 0
        %3249 = vmatpush1.bf16.msra.mxu0 0
        %3250 = vmatprep.subr.bf16.mxu0 0
        %3251 = vmatpush1.bf16.msra.mxu0 0
        %3252 = vmatprep.subr.bf16.mxu0 0
        %3253 = vmatpush1.bf16.msra.mxu0 0
        %3254 = vmatprep.subr.bf16.mxu0 0
        %3255 = vmatpush1.bf16.msra.mxu0 0
        %3256 = vmatprep.subr.bf16.mxu0 0
        %3257 = vmatpush1.bf16.msra.mxu0 0
        %3258 = vmatprep.subr.bf16.mxu0 0
        %3259 = vmatpush1.bf16.msra.mxu0 0
        %3260 = vmatprep.subr.bf16.mxu0 0
        %3261 = vmatpush1.bf16.msra.mxu0 0
        %3262 = vmatprep.subr.bf16.mxu0 0
        %3263 = vmatpush1.bf16.msra.mxu0 0
        %3264 = vmatprep.subr.bf16.mxu0 0
        %3265 = vmatpush1.bf16.msra.mxu0 0
        %3266 = vmatprep.subr.bf16.mxu0 0
        %3267 = vmatpush1.bf16.msra.mxu0 0
        %3268 = vmatprep.subr.bf16.mxu0 0
        %3269 = vmatpush1.bf16.msra.mxu0 0
        %3270 = vmatprep.mubr.bf16.mxu0 0
        %3271 = vmatmul.mubr.bf16.gmra.mrb[0].mxu0 %v3224
        %v3272 = vpop.f32.mrb[0].mxu0
        %v3273 = vadd.f32 0.0, %v3272
        %v3274 = vpop.f32.mrb[0].mxu0
        %v3275 = vpop.f32.mrb[0].mxu0
        %v3276 = vadd.f32 0.0, %v3275
        %v3277 = vpop.f32.mrb[0].mxu0
        %3278 = vmatprep.mubr.bf16.mxu0 0
        %3279 = vmatmul.mubr.bf16.gmra.mrb[0].mxu0 %v3227
        %v3280 = vpop.f32.mrb[0].mxu0
        %v3281 = vadd.f32 0.0, %v3280
        %v3282 = vpop.f32.mrb[0].mxu0
        %v3283 = vpop.f32.mrb[0].mxu0
        %v3284 = vadd.f32 0.0, %v3283
        %v3285 = vpop.f32.mrb[0].mxu0
        %3286 = vmatprep.mubr.bf16.mxu0 0
        %3287 = vmatmul.mubr.bf16.gmra.mrb[0].mxu0 %v3230
        %v3288 = vpop.f32.mrb[0].mxu0
        %v3289 = vadd.f32 0.0, %v3288
        %v3290 = vpop.f32.mrb[0].mxu0
        %v3291 = vpop.f32.mrb[0].mxu0
        %v3292 = vadd.f32 0.0, %v3291
        %v3293 = vpop.f32.mrb[0].mxu0
        %3294 = vmatprep.mubr.bf16.mxu0 0
        %3295 = vmatmul.mubr.bf16.gmra.mrb[0].mxu0 %v3233
        %v3296 = vpop.f32.mrb[0].mxu0
        %v3297 = vadd.f32 0.0, %v3296
        %v3298 = vpop.f32.mrb[0].mxu0
        %v3299 = vpop.f32.mrb[0].mxu0
        %v3300 = vadd.f32 0.0, %v3299
        %v3301 = vpop.f32.mrb[0].mxu0
        %3302 = vdwg.mxu0
        %s3303 = scalar_lea.vmem %s4, 1
        %v3304 = vld [vmem:[%s3303] sm:$0x1]
        %v3306 = vlaneseq
        %v3307 = vshrl.u32 %v3306, 7
        %v3308 = vsub.s32 0, %v3307
        %v3309 = vrot.slane %v3304, %v3308
        %v3311 = vadd.f32 %v3273, %v3309
        %v3312 = vadd.f32 %v3276, %v3309
        %v3313 = vadd.f32 %v3281, %v3309
        %v3314 = vadd.f32 %v3284, %v3309
        %v3315 = vadd.f32 %v3289, %v3309
        %v3316 = vadd.f32 %v3292, %v3309
        %v3317 = vadd.f32 %v3297, %v3309
        %v3318 = vadd.f32 %v3300, %v3309
        %v3319 = vmax.f32 %v3311, 0.0
        %v3320 = vmax.f32 %v3312, 0.0
        %v3321 = vmax.f32 %v3313, 0.0
        %v3322 = vmax.f32 %v3314, 0.0
        %v3323 = vmax.f32 %v3315, 0.0
        %v3324 = vmax.f32 %v3316, 0.0
        %v3325 = vmax.f32 %v3317, 0.0
        %v3326 = vmax.f32 %v3318, 0.0
        %v3327 = vpack.c.bf16 %v3319, %v3319
        %v3328 = vpack.c.bf16 %v3320, %v3320
        %v3329 = vpack.c.bf16 %v3321, %v3321
        %v3330 = vpack.c.bf16 %v3322, %v3322
        %v3331 = vpack.c.bf16 %v3323, %v3323
        %v3332 = vpack.c.bf16 %v3324, %v3324
        %v3333 = vpack.c.bf16 %v3325, %v3325
        %v3334 = vpack.c.bf16 %v3326, %v3326
        %v3343 = vunpack.c.l.b16 %v3327
        %v3344 = vunpack.c.l.b16 %v3328
        %v3345 = vunpack.c.l.b16 %v3329
        %v3346 = vunpack.c.l.b16 %v3330
        %v3347 = vunpack.c.l.b16 %v3331
        %v3348 = vunpack.c.l.b16 %v3332
        %v3349 = vunpack.c.l.b16 %v3333
        %v3350 = vunpack.c.l.b16 %v3334
        %v3351 = vpack.c.b16 %v3343, %v3343
        %v3352 = vpack.c.b16 %v3344, %v3344
        %v3353 = vpack.c.b16 %v3345, %v3345
        %v3354 = vpack.c.b16 %v3346, %v3346
        %v3355 = vpack.c.b16 %v3347, %v3347
        %v3356 = vpack.c.b16 %v3348, %v3348
        %v3357 = vpack.c.b16 %v3349, %v3349
        %v3358 = vpack.c.b16 %v3350, %v3350
        %v3360 = vshrl.u32 %v3351, 16
        %v3362 = vrot.slane %v3360, 7
        %v3363 = vshll.u32 %v3351, 16
        %v3365 = vor.u32 %v3362, %v3363
        %v3366 = vrot.slane %v3362, 4
        %v3368 = vshrl.u32 %v3352, 16
        %v3370 = vrot.slane %v3368, 7
        %v3371 = vshll.u32 %v3352, 16
        %v3373 = vor.u32 %v3370, %v3371
        %v3374 = vrot.slane %v3370, 4
        %v3376 = vshrl.u32 %v3353, 16
        %v3378 = vrot.slane %v3376, 7
        %v3379 = vshll.u32 %v3353, 16
        %v3381 = vor.u32 %v3378, %v3379
        %v3382 = vrot.slane %v3378, 4
        %v3384 = vshrl.u32 %v3354, 16
        %v3386 = vrot.slane %v3384, 7
        %v3387 = vshll.u32 %v3354, 16
        %v3389 = vor.u32 %v3386, %v3387
        %v3390 = vrot.slane %v3386, 4
        %v3392 = vshrl.u32 %v3355, 16
        %v3394 = vrot.slane %v3392, 7
        %v3395 = vshll.u32 %v3355, 16
        %v3397 = vor.u32 %v3394, %v3395
        %v3398 = vrot.slane %v3394, 4
        %v3400 = vshrl.u32 %v3356, 16
        %v3402 = vrot.slane %v3400, 7
        %v3403 = vshll.u32 %v3356, 16
        %v3405 = vor.u32 %v3402, %v3403
        %v3406 = vrot.slane %v3402, 4
        %v3408 = vshrl.u32 %v3357, 16
        %v3410 = vrot.slane %v3408, 7
        %v3411 = vshll.u32 %v3357, 16
        %v3413 = vor.u32 %v3410, %v3411
        %v3414 = vrot.slane %v3410, 4
        %v3416 = vshrl.u32 %v3358, 16
        %v3418 = vrot.slane %v3416, 7
        %v3419 = vshll.u32 %v3358, 16
        %v3421 = vor.u32 %v3418, %v3419
        %v3422 = vrot.slane %v3418, 4
        %v3439 = vld [vmem:[%s1607] sm:$0xf]
        %v3440 = vsel %vm1609, %v3365, %v3439
        %3441 = vst [vmem:[%s1607] sm:$0xf] %v3440
        %v3442 = vld [vmem:[%s1607 + $0x4] sm:$0x1]
        %v3443 = vsel %vm471, %v3366, %v3442
        %3444 = vst [vmem:[%s1607 + $0x4] sm:$0x1] %v3443
        %v3445 = vld [vmem:[%s1607 + $0x8] sm:$0xf]
        %v3446 = vsel %vm1609, %v3373, %v3445
        %3447 = vst [vmem:[%s1607 + $0x8] sm:$0xf] %v3446
        %v3448 = vld [vmem:[%s1607 + $0xc] sm:$0x1]
        %v3449 = vsel %vm471, %v3374, %v3448
        %3450 = vst [vmem:[%s1607 + $0xc] sm:$0x1] %v3449
        %v3451 = vld [vmem:[%s1607 + $0x10] sm:$0xf]
        %v3452 = vsel %vm1609, %v3381, %v3451
        %3453 = vst [vmem:[%s1607 + $0x10] sm:$0xf] %v3452
        %v3454 = vld [vmem:[%s1607 + $0x14] sm:$0x1]
        %v3455 = vsel %vm471, %v3382, %v3454
        %3456 = vst [vmem:[%s1607 + $0x14] sm:$0x1] %v3455
        %v3457 = vld [vmem:[%s1607 + $0x18] sm:$0xf]
        %v3458 = vsel %vm1609, %v3389, %v3457
        %3459 = vst [vmem:[%s1607 + $0x18] sm:$0xf] %v3458
        %v3460 = vld [vmem:[%s1607 + $0x1c] sm:$0x1]
        %v3461 = vsel %vm471, %v3390, %v3460
        %3462 = vst [vmem:[%s1607 + $0x1c] sm:$0x1] %v3461
        %v3463 = vld [vmem:[%s1607 + $0x20] sm:$0xf]
        %v3464 = vsel %vm1609, %v3397, %v3463
        %3465 = vst [vmem:[%s1607 + $0x20] sm:$0xf] %v3464
        %v3466 = vld [vmem:[%s1607 + $0x24] sm:$0x1]
        %v3467 = vsel %vm471, %v3398, %v3466
        %3468 = vst [vmem:[%s1607 + $0x24] sm:$0x1] %v3467
        %v3469 = vld [vmem:[%s1607 + $0x28] sm:$0xf]
        %v3470 = vsel %vm1609, %v3405, %v3469
        %3471 = vst [vmem:[%s1607 + $0x28] sm:$0xf] %v3470
        %v3472 = vld [vmem:[%s1607 + $0x2c] sm:$0x1]
        %v3473 = vsel %vm471, %v3406, %v3472
        %3474 = vst [vmem:[%s1607 + $0x2c] sm:$0x1] %v3473
        %v3475 = vld [vmem:[%s1607 + $0x30] sm:$0xf]
        %v3476 = vsel %vm1609, %v3413, %v3475
        %3477 = vst [vmem:[%s1607 + $0x30] sm:$0xf] %v3476
        %v3478 = vld [vmem:[%s1607 + $0x34] sm:$0x1]
        %v3479 = vsel %vm471, %v3414, %v3478
        %3480 = vst [vmem:[%s1607 + $0x34] sm:$0x1] %v3479
        %v3481 = vld [vmem:[%s1607 + $0x38] sm:$0xf]
        %v3482 = vsel %vm1609, %v3421, %v3481
        %3483 = vst [vmem:[%s1607 + $0x38] sm:$0xf] %v3482
        %v3484 = vld [vmem:[%s1607 + $0x3c] sm:$0x1]
        %v3485 = vsel %vm471, %v3422, %v3484
        %3486 = vst [vmem:[%s1607 + $0x3c] sm:$0x1] %v3485
        %s3487 = scalar_lea.vmem %s5, 36
        %v3488 = vld [vmem:[%s3487] sm:$0xf]
        %v3489 = vld [vmem:[%s3487 + $0x4] sm:$0xf]
        %v3490 = vld [vmem:[%s3487 + $0x8] sm:$0xf]
        %v3491 = vld [vmem:[%s3487 + $0xc] sm:$0xf]
        %v3492 = vld [vmem:[%s3487 + $0x10] sm:$0xf]
        %v3493 = vld [vmem:[%s3487 + $0x14] sm:$0xf]
        %v3494 = vld [vmem:[%s3487 + $0x18] sm:$0xf]
        %v3495 = vld [vmem:[%s3487 + $0x1c] sm:$0xf]
        %v3496 = vld [vmem:[%s3487 + $0x20] sm:$0xf]
        %v3497 = vld [vmem:[#allocation3] sm:$0xf]
        %v3498 = vld [vmem:[#allocation3 + $0x8] sm:$0xf]
        %v3499 = vld [vmem:[#allocation3 + $0x10] sm:$0xf]
        %v3500 = vld [vmem:[#allocation3 + $0x18] sm:$0xf]
        %v3501 = vld [vmem:[#allocation3 + $0x20] sm:$0xf]
        %v3502 = vld [vmem:[#allocation3 + $0x28] sm:$0xf]
        %v3503 = vld [vmem:[#allocation3 + $0x30] sm:$0xf]
        %v3504 = vld [vmem:[#allocation3 + $0x38] sm:$0xf]
        %v3505 = vld [vmem:[#allocation3 + $0x4] sm:$0x1]
        %v3506 = vld [vmem:[#allocation3 + $0xc] sm:$0x1]
        %v3507 = vld [vmem:[#allocation3 + $0x14] sm:$0x1]
        %v3508 = vld [vmem:[#allocation3 + $0x1c] sm:$0x1]
        %v3509 = vld [vmem:[#allocation3 + $0x24] sm:$0x1]
        %v3510 = vld [vmem:[#allocation3 + $0x2c] sm:$0x1]
        %v3511 = vld [vmem:[#allocation3 + $0x34] sm:$0x1]
        %v3512 = vld [vmem:[#allocation3 + $0x3c] sm:$0x1]
        %v3513 = vld [vmem:[#allocation3] sm:$0xe]
        %v3514 = vld [vmem:[#allocation3 + $0x8] sm:$0xe]
        %v3515 = vld [vmem:[#allocation3 + $0x10] sm:$0xe]
        %v3516 = vld [vmem:[#allocation3 + $0x18] sm:$0xe]
        %v3517 = vld [vmem:[#allocation3 + $0x20] sm:$0xe]
        %v3518 = vld [vmem:[#allocation3 + $0x28] sm:$0xe]
        %v3519 = vld [vmem:[#allocation3 + $0x30] sm:$0xe]
        %v3520 = vld [vmem:[#allocation3 + $0x38] sm:$0xe]
        %v3521 = vld [vmem:[%s1607] sm:$0xf]
        %v3522 = vld [vmem:[%s1607 + $0x8] sm:$0xf]
        %v3523 = vld [vmem:[%s1607 + $0x10] sm:$0xf]
        %v3524 = vld [vmem:[%s1607 + $0x18] sm:$0xf]
        %v3525 = vld [vmem:[%s1607 + $0x20] sm:$0xf]
        %v3526 = vld [vmem:[%s1607 + $0x28] sm:$0xf]
        %v3527 = vld [vmem:[%s1607 + $0x30] sm:$0xf]
        %v3528 = vld [vmem:[%s1607 + $0x38] sm:$0xf]
        %v3529 = vld [vmem:[%s1607 + $0x4] sm:$0x1]
        %v3530 = vld [vmem:[%s1607 + $0xc] sm:$0x1]
        %v3531 = vld [vmem:[%s1607 + $0x14] sm:$0x1]
        %v3532 = vld [vmem:[%s1607 + $0x1c] sm:$0x1]
        %v3533 = vld [vmem:[%s1607 + $0x24] sm:$0x1]
        %v3534 = vld [vmem:[%s1607 + $0x2c] sm:$0x1]
        %v3535 = vld [vmem:[%s1607 + $0x34] sm:$0x1]
        %v3536 = vld [vmem:[%s1607 + $0x3c] sm:$0x1]
        %v3537 = vld [vmem:[%s1607] sm:$0xe]
        %v3538 = vld [vmem:[%s1607 + $0x8] sm:$0xe]
        %v3539 = vld [vmem:[%s1607 + $0x10] sm:$0xe]
        %v3540 = vld [vmem:[%s1607 + $0x18] sm:$0xe]
        %v3541 = vld [vmem:[%s1607 + $0x20] sm:$0xe]
        %v3542 = vld [vmem:[%s1607 + $0x28] sm:$0xe]
        %v3543 = vld [vmem:[%s1607 + $0x30] sm:$0xe]
        %v3544 = vld [vmem:[%s1607 + $0x38] sm:$0xe]
        %v3545 = vld [vmem:[%s1715] sm:$0xf]
        %v3546 = vld [vmem:[%s1715 + $0x8] sm:$0xf]
        %v3547 = vld [vmem:[%s1715 + $0x10] sm:$0xf]
        %v3548 = vld [vmem:[%s1715 + $0x18] sm:$0xf]
        %v3549 = vld [vmem:[%s1715 + $0x20] sm:$0xf]
        %v3550 = vld [vmem:[%s1715 + $0x28] sm:$0xf]
        %v3551 = vld [vmem:[%s1715 + $0x30] sm:$0xf]
        %v3552 = vld [vmem:[%s1715 + $0x38] sm:$0xf]
        %v3553 = vld [vmem:[%s1715 + $0x4] sm:$0x1]
        %v3554 = vld [vmem:[%s1715 + $0xc] sm:$0x1]
        %v3555 = vld [vmem:[%s1715 + $0x14] sm:$0x1]
        %v3556 = vld [vmem:[%s1715 + $0x1c] sm:$0x1]
        %v3557 = vld [vmem:[%s1715 + $0x24] sm:$0x1]
        %v3558 = vld [vmem:[%s1715 + $0x2c] sm:$0x1]
        %v3559 = vld [vmem:[%s1715 + $0x34] sm:$0x1]
        %v3560 = vld [vmem:[%s1715 + $0x3c] sm:$0x1]
        %v3561 = vld [vmem:[%s1715] sm:$0xe]
        %v3562 = vld [vmem:[%s1715 + $0x8] sm:$0xe]
        %v3563 = vld [vmem:[%s1715 + $0x10] sm:$0xe]
        %v3564 = vld [vmem:[%s1715 + $0x18] sm:$0xe]
        %v3565 = vld [vmem:[%s1715 + $0x20] sm:$0xe]
        %v3566 = vld [vmem:[%s1715 + $0x28] sm:$0xe]
        %v3567 = vld [vmem:[%s1715 + $0x30] sm:$0xe]
        %v3568 = vld [vmem:[%s1715 + $0x38] sm:$0xe]
        %v3585 = vunpack.c.l.b16 %v3497
        %v3586 = vunpack.c.l.b16 %v3505
        %v3587 = vunpack.c.l.b16 %v3498
        %v3588 = vunpack.c.l.b16 %v3506
        %v3589 = vunpack.c.l.b16 %v3499
        %v3590 = vunpack.c.l.b16 %v3507
        %v3591 = vunpack.c.l.b16 %v3500
        %v3592 = vunpack.c.l.b16 %v3508
        %v3593 = vunpack.c.l.b16 %v3501
        %v3594 = vunpack.c.l.b16 %v3509
        %v3595 = vunpack.c.l.b16 %v3502
        %v3596 = vunpack.c.l.b16 %v3510
        %v3597 = vunpack.c.l.b16 %v3503
        %v3598 = vunpack.c.l.b16 %v3511
        %v3599 = vunpack.c.l.b16 %v3504
        %v3600 = vunpack.c.l.b16 %v3512
        %v3601 = vpack.c.b16 %v3586, %v3585
        %v3602 = vpack.c.b16 %v3588, %v3587
        %v3603 = vpack.c.b16 %v3590, %v3589
        %v3604 = vpack.c.b16 %v3592, %v3591
        %v3605 = vpack.c.b16 %v3594, %v3593
        %v3606 = vpack.c.b16 %v3596, %v3595
        %v3607 = vpack.c.b16 %v3598, %v3597
        %v3608 = vpack.c.b16 %v3600, %v3599
        %v3610 = vshrl.u32 %v3601, 16
        %v3612 = vshll.u32 %v3601, 16
        %v3614 = vrot.slane %v3612, 1
        %v3615 = vor.u32 %v3610, %v3614
        %v3617 = vshrl.u32 %v3602, 16
        %v3619 = vshll.u32 %v3602, 16
        %v3621 = vrot.slane %v3619, 1
        %v3622 = vor.u32 %v3617, %v3621
        %v3624 = vshrl.u32 %v3603, 16
        %v3626 = vshll.u32 %v3603, 16
        %v3628 = vrot.slane %v3626, 1
        %v3629 = vor.u32 %v3624, %v3628
        %v3631 = vshrl.u32 %v3604, 16
        %v3633 = vshll.u32 %v3604, 16
        %v3635 = vrot.slane %v3633, 1
        %v3636 = vor.u32 %v3631, %v3635
        %v3638 = vshrl.u32 %v3605, 16
        %v3640 = vshll.u32 %v3605, 16
        %v3642 = vrot.slane %v3640, 1
        %v3643 = vor.u32 %v3638, %v3642
        %v3645 = vshrl.u32 %v3606, 16
        %v3647 = vshll.u32 %v3606, 16
        %v3649 = vrot.slane %v3647, 1
        %v3650 = vor.u32 %v3645, %v3649
        %v3652 = vshrl.u32 %v3607, 16
        %v3654 = vshll.u32 %v3607, 16
        %v3656 = vrot.slane %v3654, 1
        %v3657 = vor.u32 %v3652, %v3656
        %v3659 = vshrl.u32 %v3608, 16
        %v3661 = vshll.u32 %v3608, 16
        %v3663 = vrot.slane %v3661, 1
        %v3664 = vor.u32 %v3659, %v3663
        %3665 = vrot.lane.b32.xlu0 %v3615, 8
        %v3666 = vpop.permute.xlu0 %3665
        %3667 = vrot.lane.b32.xlu0 %v3622, 8
        %v3668 = vpop.permute.xlu0 %3667
        %3669 = vrot.lane.b32.xlu0 %v3629, 8
        %v3670 = vpop.permute.xlu0 %3669
        %3671 = vrot.lane.b32.xlu0 %v3636, 8
        %v3672 = vpop.permute.xlu0 %3671
        %3673 = vrot.lane.b32.xlu0 %v3643, 8
        %v3674 = vpop.permute.xlu0 %3673
        %3675 = vrot.lane.b32.xlu0 %v3650, 8
        %v3676 = vpop.permute.xlu0 %3675
        %3677 = vrot.lane.b32.xlu0 %v3657, 8
        %v3678 = vpop.permute.xlu0 %3677
        %3679 = vrot.lane.b32.xlu0 %v3664, 8
        %v3680 = vpop.permute.xlu0 %3679
        %v3689 = vunpack.c.l.b16 %v3513
        %v3690 = vunpack.c.l.b16 %v3514
        %v3691 = vunpack.c.l.b16 %v3515
        %v3692 = vunpack.c.l.b16 %v3516
        %v3693 = vunpack.c.l.b16 %v3517
        %v3694 = vunpack.c.l.b16 %v3518
        %v3695 = vunpack.c.l.b16 %v3519
        %v3696 = vunpack.c.l.b16 %v3520
        %v3697 = vpack.c.b16 %v3586, %v3689
        %v3698 = vpack.c.b16 %v3588, %v3690
        %v3699 = vpack.c.b16 %v3590, %v3691
        %v3700 = vpack.c.b16 %v3592, %v3692
        %v3701 = vpack.c.b16 %v3594, %v3693
        %v3702 = vpack.c.b16 %v3596, %v3694
        %v3703 = vpack.c.b16 %v3598, %v3695
        %v3704 = vpack.c.b16 %v3600, %v3696
        %v3705 = vrot.slane %v3697, 1
        %v3706 = vrot.slane %v3698, 1
        %v3707 = vrot.slane %v3699, 1
        %v3708 = vrot.slane %v3700, 1
        %v3709 = vrot.slane %v3701, 1
        %v3710 = vrot.slane %v3702, 1
        %v3711 = vrot.slane %v3703, 1
        %v3712 = vrot.slane %v3704, 1
        %3713 = vrot.lane.b32.xlu0 %v3705, 16
        %v3714 = vpop.permute.xlu0 %3713
        %3715 = vrot.lane.b32.xlu0 %v3706, 16
        %v3716 = vpop.permute.xlu0 %3715
        %3717 = vrot.lane.b32.xlu0 %v3707, 16
        %v3718 = vpop.permute.xlu0 %3717
        %3719 = vrot.lane.b32.xlu0 %v3708, 16
        %v3720 = vpop.permute.xlu0 %3719
        %3721 = vrot.lane.b32.xlu0 %v3709, 16
        %v3722 = vpop.permute.xlu0 %3721
        %3723 = vrot.lane.b32.xlu0 %v3710, 16
        %v3724 = vpop.permute.xlu0 %3723
        %3725 = vrot.lane.b32.xlu0 %v3711, 16
        %v3726 = vpop.permute.xlu0 %3725
        %3727 = vrot.lane.b32.xlu0 %v3712, 16
        %v3728 = vpop.permute.xlu0 %3727
        %v3737 = vunpack.c.l.b16 %v3521
        %v3738 = vunpack.c.l.b16 %v3522
        %v3739 = vunpack.c.l.b16 %v3523
        %v3740 = vunpack.c.l.b16 %v3524
        %v3741 = vunpack.c.l.b16 %v3525
        %v3742 = vunpack.c.l.b16 %v3526
        %v3743 = vunpack.c.l.b16 %v3527
        %v3744 = vunpack.c.l.b16 %v3528
        %v3745 = vpack.c.b16 %v3737, %v3737
        %v3746 = vpack.c.b16 %v3738, %v3738
        %v3747 = vpack.c.b16 %v3739, %v3739
        %v3748 = vpack.c.b16 %v3740, %v3740
        %v3749 = vpack.c.b16 %v3741, %v3741
        %v3750 = vpack.c.b16 %v3742, %v3742
        %v3751 = vpack.c.b16 %v3743, %v3743
        %v3752 = vpack.c.b16 %v3744, %v3744
        %3753 = vrot.lane.b32.xlu0 %v3745, 24
        %v3754 = vpop.permute.xlu0 %3753
        %3755 = vrot.lane.b32.xlu0 %v3746, 24
        %v3756 = vpop.permute.xlu0 %3755
        %3757 = vrot.lane.b32.xlu0 %v3747, 24
        %v3758 = vpop.permute.xlu0 %3757
        %3759 = vrot.lane.b32.xlu0 %v3748, 24
        %v3760 = vpop.permute.xlu0 %3759
        %3761 = vrot.lane.b32.xlu0 %v3749, 24
        %v3762 = vpop.permute.xlu0 %3761
        %3763 = vrot.lane.b32.xlu0 %v3750, 24
        %v3764 = vpop.permute.xlu0 %3763
        %3765 = vrot.lane.b32.xlu0 %v3751, 24
        %v3766 = vpop.permute.xlu0 %3765
        %3767 = vrot.lane.b32.xlu0 %v3752, 24
        %v3768 = vpop.permute.xlu0 %3767
        %v3777 = vunpack.c.l.b16 %v3529
        %v3778 = vunpack.c.l.b16 %v3530
        %v3779 = vunpack.c.l.b16 %v3531
        %v3780 = vunpack.c.l.b16 %v3532
        %v3781 = vunpack.c.l.b16 %v3533
        %v3782 = vunpack.c.l.b16 %v3534
        %v3783 = vunpack.c.l.b16 %v3535
        %v3784 = vunpack.c.l.b16 %v3536
        %v3785 = vpack.c.b16 %v3777, %v3737
        %v3786 = vpack.c.b16 %v3778, %v3738
        %v3787 = vpack.c.b16 %v3779, %v3739
        %v3788 = vpack.c.b16 %v3780, %v3740
        %v3789 = vpack.c.b16 %v3781, %v3741
        %v3790 = vpack.c.b16 %v3782, %v3742
        %v3791 = vpack.c.b16 %v3783, %v3743
        %v3792 = vpack.c.b16 %v3784, %v3744
        %v3794 = vshrl.u32 %v3785, 16
        %v3796 = vshll.u32 %v3785, 16
        %v3798 = vrot.slane %v3796, 1
        %v3799 = vor.u32 %v3794, %v3798
        %v3801 = vshrl.u32 %v3786, 16
        %v3803 = vshll.u32 %v3786, 16
        %v3805 = vrot.slane %v3803, 1
        %v3806 = vor.u32 %v3801, %v3805
        %v3808 = vshrl.u32 %v3787, 16
        %v3810 = vshll.u32 %v3787, 16
        %v3812 = vrot.slane %v3810, 1
        %v3813 = vor.u32 %v3808, %v3812
        %v3815 = vshrl.u32 %v3788, 16
        %v3817 = vshll.u32 %v3788, 16
        %v3819 = vrot.slane %v3817, 1
        %v3820 = vor.u32 %v3815, %v3819
        %v3822 = vshrl.u32 %v3789, 16
        %v3824 = vshll.u32 %v3789, 16
        %v3826 = vrot.slane %v3824, 1
        %v3827 = vor.u32 %v3822, %v3826
        %v3829 = vshrl.u32 %v3790, 16
        %v3831 = vshll.u32 %v3790, 16
        %v3833 = vrot.slane %v3831, 1
        %v3834 = vor.u32 %v3829, %v3833
        %v3836 = vshrl.u32 %v3791, 16
        %v3838 = vshll.u32 %v3791, 16
        %v3840 = vrot.slane %v3838, 1
        %v3841 = vor.u32 %v3836, %v3840
        %v3843 = vshrl.u32 %v3792, 16
        %v3845 = vshll.u32 %v3792, 16
        %v3847 = vrot.slane %v3845, 1
        %v3848 = vor.u32 %v3843, %v3847
        %3849 = vrot.lane.b32.xlu0 %v3799, 32
        %v3850 = vpop.permute.xlu0 %3849
        %3851 = vrot.lane.b32.xlu0 %v3806, 32
        %v3852 = vpop.permute.xlu0 %3851
        %3853 = vrot.lane.b32.xlu0 %v3813, 32
        %v3854 = vpop.permute.xlu0 %3853
        %3855 = vrot.lane.b32.xlu0 %v3820, 32
        %v3856 = vpop.permute.xlu0 %3855
        %3857 = vrot.lane.b32.xlu0 %v3827, 32
        %v3858 = vpop.permute.xlu0 %3857
        %3859 = vrot.lane.b32.xlu0 %v3834, 32
        %v3860 = vpop.permute.xlu0 %3859
        %3861 = vrot.lane.b32.xlu0 %v3841, 32
        %v3862 = vpop.permute.xlu0 %3861
        %3863 = vrot.lane.b32.xlu0 %v3848, 32
        %v3864 = vpop.permute.xlu0 %3863
        %v3873 = vunpack.c.l.b16 %v3537
        %v3874 = vunpack.c.l.b16 %v3538
        %v3875 = vunpack.c.l.b16 %v3539
        %v3876 = vunpack.c.l.b16 %v3540
        %v3877 = vunpack.c.l.b16 %v3541
        %v3878 = vunpack.c.l.b16 %v3542
        %v3879 = vunpack.c.l.b16 %v3543
        %v3880 = vunpack.c.l.b16 %v3544
        %v3881 = vpack.c.b16 %v3777, %v3873
        %v3882 = vpack.c.b16 %v3778, %v3874
        %v3883 = vpack.c.b16 %v3779, %v3875
        %v3884 = vpack.c.b16 %v3780, %v3876
        %v3885 = vpack.c.b16 %v3781, %v3877
        %v3886 = vpack.c.b16 %v3782, %v3878
        %v3887 = vpack.c.b16 %v3783, %v3879
        %v3888 = vpack.c.b16 %v3784, %v3880
        %v3889 = vrot.slane %v3881, 1
        %v3890 = vrot.slane %v3882, 1
        %v3891 = vrot.slane %v3883, 1
        %v3892 = vrot.slane %v3884, 1
        %v3893 = vrot.slane %v3885, 1
        %v3894 = vrot.slane %v3886, 1
        %v3895 = vrot.slane %v3887, 1
        %v3896 = vrot.slane %v3888, 1
        %3897 = vrot.lane.b32.xlu0 %v3889, 40
        %v3898 = vpop.permute.xlu0 %3897
        %3899 = vrot.lane.b32.xlu0 %v3890, 40
        %v3900 = vpop.permute.xlu0 %3899
        %3901 = vrot.lane.b32.xlu0 %v3891, 40
        %v3902 = vpop.permute.xlu0 %3901
        %3903 = vrot.lane.b32.xlu0 %v3892, 40
        %v3904 = vpop.permute.xlu0 %3903
        %3905 = vrot.lane.b32.xlu0 %v3893, 40
        %v3906 = vpop.permute.xlu0 %3905
        %3907 = vrot.lane.b32.xlu0 %v3894, 40
        %v3908 = vpop.permute.xlu0 %3907
        %3909 = vrot.lane.b32.xlu0 %v3895, 40
        %v3910 = vpop.permute.xlu0 %3909
        %3911 = vrot.lane.b32.xlu0 %v3896, 40
        %v3912 = vpop.permute.xlu0 %3911
        %v3921 = vunpack.c.l.b16 %v3545
        %v3922 = vunpack.c.l.b16 %v3546
        %v3923 = vunpack.c.l.b16 %v3547
        %v3924 = vunpack.c.l.b16 %v3548
        %v3925 = vunpack.c.l.b16 %v3549
        %v3926 = vunpack.c.l.b16 %v3550
        %v3927 = vunpack.c.l.b16 %v3551
        %v3928 = vunpack.c.l.b16 %v3552
        %v3929 = vpack.c.b16 %v3921, %v3921
        %v3930 = vpack.c.b16 %v3922, %v3922
        %v3931 = vpack.c.b16 %v3923, %v3923
        %v3932 = vpack.c.b16 %v3924, %v3924
        %v3933 = vpack.c.b16 %v3925, %v3925
        %v3934 = vpack.c.b16 %v3926, %v3926
        %v3935 = vpack.c.b16 %v3927, %v3927
        %v3936 = vpack.c.b16 %v3928, %v3928
        %3937 = vrot.lane.b32.xlu0 %v3929, 48
        %v3938 = vpop.permute.xlu0 %3937
        %3939 = vrot.lane.b32.xlu0 %v3930, 48
        %v3940 = vpop.permute.xlu0 %3939
        %3941 = vrot.lane.b32.xlu0 %v3931, 48
        %v3942 = vpop.permute.xlu0 %3941
        %3943 = vrot.lane.b32.xlu0 %v3932, 48
        %v3944 = vpop.permute.xlu0 %3943
        %3945 = vrot.lane.b32.xlu0 %v3933, 48
        %v3946 = vpop.permute.xlu0 %3945
        %3947 = vrot.lane.b32.xlu0 %v3934, 48
        %v3948 = vpop.permute.xlu0 %3947
        %3949 = vrot.lane.b32.xlu0 %v3935, 48
        %v3950 = vpop.permute.xlu0 %3949
        %3951 = vrot.lane.b32.xlu0 %v3936, 48
        %v3952 = vpop.permute.xlu0 %3951
        %v3961 = vunpack.c.l.b16 %v3553
        %v3962 = vunpack.c.l.b16 %v3554
        %v3963 = vunpack.c.l.b16 %v3555
        %v3964 = vunpack.c.l.b16 %v3556
        %v3965 = vunpack.c.l.b16 %v3557
        %v3966 = vunpack.c.l.b16 %v3558
        %v3967 = vunpack.c.l.b16 %v3559
        %v3968 = vunpack.c.l.b16 %v3560
        %v3969 = vpack.c.b16 %v3961, %v3921
        %v3970 = vpack.c.b16 %v3962, %v3922
        %v3971 = vpack.c.b16 %v3963, %v3923
        %v3972 = vpack.c.b16 %v3964, %v3924
        %v3973 = vpack.c.b16 %v3965, %v3925
        %v3974 = vpack.c.b16 %v3966, %v3926
        %v3975 = vpack.c.b16 %v3967, %v3927
        %v3976 = vpack.c.b16 %v3968, %v3928
        %v3978 = vshrl.u32 %v3969, 16
        %v3980 = vshll.u32 %v3969, 16
        %v3982 = vrot.slane %v3980, 1
        %v3983 = vor.u32 %v3978, %v3982
        %v3985 = vshrl.u32 %v3970, 16
        %v3987 = vshll.u32 %v3970, 16
        %v3989 = vrot.slane %v3987, 1
        %v3990 = vor.u32 %v3985, %v3989
        %v3992 = vshrl.u32 %v3971, 16
        %v3994 = vshll.u32 %v3971, 16
        %v3996 = vrot.slane %v3994, 1
        %v3997 = vor.u32 %v3992, %v3996
        %v3999 = vshrl.u32 %v3972, 16
        %v4001 = vshll.u32 %v3972, 16
        %v4003 = vrot.slane %v4001, 1
        %v4004 = vor.u32 %v3999, %v4003
        %v4006 = vshrl.u32 %v3973, 16
        %v4008 = vshll.u32 %v3973, 16
        %v4010 = vrot.slane %v4008, 1
        %v4011 = vor.u32 %v4006, %v4010
        %v4013 = vshrl.u32 %v3974, 16
        %v4015 = vshll.u32 %v3974, 16
        %v4017 = vrot.slane %v4015, 1
        %v4018 = vor.u32 %v4013, %v4017
        %v4020 = vshrl.u32 %v3975, 16
        %v4022 = vshll.u32 %v3975, 16
        %v4024 = vrot.slane %v4022, 1
        %v4025 = vor.u32 %v4020, %v4024
        %v4027 = vshrl.u32 %v3976, 16
        %v4029 = vshll.u32 %v3976, 16
        %v4031 = vrot.slane %v4029, 1
        %v4032 = vor.u32 %v4027, %v4031
        %4033 = vrot.lane.b32.xlu0 %v3983, 56
        %v4034 = vpop.permute.xlu0 %4033
        %4035 = vrot.lane.b32.xlu0 %v3990, 56
        %v4036 = vpop.permute.xlu0 %4035
        %4037 = vrot.lane.b32.xlu0 %v3997, 56
        %v4038 = vpop.permute.xlu0 %4037
        %4039 = vrot.lane.b32.xlu0 %v4004, 56
        %v4040 = vpop.permute.xlu0 %4039
        %4041 = vrot.lane.b32.xlu0 %v4011, 56
        %v4042 = vpop.permute.xlu0 %4041
        %4043 = vrot.lane.b32.xlu0 %v4018, 56
        %v4044 = vpop.permute.xlu0 %4043
        %4045 = vrot.lane.b32.xlu0 %v4025, 56
        %v4046 = vpop.permute.xlu0 %4045
        %4047 = vrot.lane.b32.xlu0 %v4032, 56
        %v4048 = vpop.permute.xlu0 %4047
        %v4057 = vunpack.c.l.b16 %v3561
        %v4058 = vunpack.c.l.b16 %v3562
        %v4059 = vunpack.c.l.b16 %v3563
        %v4060 = vunpack.c.l.b16 %v3564
        %v4061 = vunpack.c.l.b16 %v3565
        %v4062 = vunpack.c.l.b16 %v3566
        %v4063 = vunpack.c.l.b16 %v3567
        %v4064 = vunpack.c.l.b16 %v3568
        %v4065 = vpack.c.b16 %v3961, %v4057
        %v4066 = vpack.c.b16 %v3962, %v4058
        %v4067 = vpack.c.b16 %v3963, %v4059
        %v4068 = vpack.c.b16 %v3964, %v4060
        %v4069 = vpack.c.b16 %v3965, %v4061
        %v4070 = vpack.c.b16 %v3966, %v4062
        %v4071 = vpack.c.b16 %v3967, %v4063
        %v4072 = vpack.c.b16 %v3968, %v4064
        %v4073 = vrot.slane %v4065, 1
        %v4074 = vrot.slane %v4066, 1
        %v4075 = vrot.slane %v4067, 1
        %v4076 = vrot.slane %v4068, 1
        %v4077 = vrot.slane %v4069, 1
        %v4078 = vrot.slane %v4070, 1
        %v4079 = vrot.slane %v4071, 1
        %v4080 = vrot.slane %v4072, 1
        %4081 = vrot.lane.b32.xlu0 %v4073, 64
        %v4082 = vpop.permute.xlu0 %4081
        %4083 = vrot.lane.b32.xlu0 %v4074, 64
        %v4084 = vpop.permute.xlu0 %4083
        %4085 = vrot.lane.b32.xlu0 %v4075, 64
        %v4086 = vpop.permute.xlu0 %4085
        %4087 = vrot.lane.b32.xlu0 %v4076, 64
        %v4088 = vpop.permute.xlu0 %4087
        %4089 = vrot.lane.b32.xlu0 %v4077, 64
        %v4090 = vpop.permute.xlu0 %4089
        %4091 = vrot.lane.b32.xlu0 %v4078, 64
        %v4092 = vpop.permute.xlu0 %4091
        %4093 = vrot.lane.b32.xlu0 %v4079, 64
        %v4094 = vpop.permute.xlu0 %4093
        %4095 = vrot.lane.b32.xlu0 %v4080, 64
        %v4096 = vpop.permute.xlu0 %4095
        %v4099 = vsel %vm1237, %v3497, %v3666
        %v4102 = vsel %vm1237, %v3498, %v3668
        %v4105 = vsel %vm1237, %v3499, %v3670
        %v4108 = vsel %vm1237, %v3500, %v3672
        %v4111 = vsel %vm1237, %v3501, %v3674
        %v4114 = vsel %vm1237, %v3502, %v3676
        %v4117 = vsel %vm1237, %v3503, %v3678
        %v4120 = vsel %vm1237, %v3504, %v3680
        %v4122 = vsel %vm1271, %v4099, %v3714
        %v4124 = vsel %vm1271, %v4102, %v3716
        %v4126 = vsel %vm1271, %v4105, %v3718
        %v4128 = vsel %vm1271, %v4108, %v3720
        %v4130 = vsel %vm1271, %v4111, %v3722
        %v4132 = vsel %vm1271, %v4114, %v3724
        %v4134 = vsel %vm1271, %v4117, %v3726
        %v4136 = vsel %vm1271, %v4120, %v3728
        %v4138 = vsel %vm1305, %v4122, %v3754
        %v4140 = vsel %vm1305, %v4124, %v3756
        %v4142 = vsel %vm1305, %v4126, %v3758
        %v4144 = vsel %vm1305, %v4128, %v3760
        %v4146 = vsel %vm1305, %v4130, %v3762
        %v4148 = vsel %vm1305, %v4132, %v3764
        %v4150 = vsel %vm1305, %v4134, %v3766
        %v4152 = vsel %vm1305, %v4136, %v3768
        %v4154 = vsel %vm1339, %v4138, %v3850
        %v4156 = vsel %vm1339, %v4140, %v3852
        %v4158 = vsel %vm1339, %v4142, %v3854
        %v4160 = vsel %vm1339, %v4144, %v3856
        %v4162 = vsel %vm1339, %v4146, %v3858
        %v4164 = vsel %vm1339, %v4148, %v3860
        %v4166 = vsel %vm1339, %v4150, %v3862
        %v4168 = vsel %vm1339, %v4152, %v3864
        %v4170 = vsel %vm2340, %v4154, %v3898
        %v4172 = vsel %vm2340, %v4156, %v3900
        %v4174 = vsel %vm2340, %v4158, %v3902
        %v4176 = vsel %vm2340, %v4160, %v3904
        %v4178 = vsel %vm2340, %v4162, %v3906
        %v4180 = vsel %vm2340, %v4164, %v3908
        %v4182 = vsel %vm2340, %v4166, %v3910
        %v4184 = vsel %vm2340, %v4168, %v3912
        %v4186 = vsel %vm2357, %v4170, %v3938
        %v4188 = vsel %vm2357, %v4172, %v3940
        %v4190 = vsel %vm2357, %v4174, %v3942
        %v4192 = vsel %vm2357, %v4176, %v3944
        %v4194 = vsel %vm2357, %v4178, %v3946
        %v4196 = vsel %vm2357, %v4180, %v3948
        %v4198 = vsel %vm2357, %v4182, %v3950
        %v4200 = vsel %vm2357, %v4184, %v3952
        %v4202 = vsel %vm2374, %v4186, %v4034
        %v4204 = vsel %vm2374, %v4188, %v4036
        %v4206 = vsel %vm2374, %v4190, %v4038
        %v4208 = vsel %vm2374, %v4192, %v4040
        %v4210 = vsel %vm2374, %v4194, %v4042
        %v4212 = vsel %vm2374, %v4196, %v4044
        %v4214 = vsel %vm2374, %v4198, %v4046
        %v4216 = vsel %vm2374, %v4200, %v4048
        %v4218 = vsel %vm2391, %v4202, %v4082
        %v4220 = vsel %vm2391, %v4204, %v4084
        %v4222 = vsel %vm2391, %v4206, %v4086
        %v4224 = vsel %vm2391, %v4208, %v4088
        %v4226 = vsel %vm2391, %v4210, %v4090
        %v4228 = vsel %vm2391, %v4212, %v4092
        %v4230 = vsel %vm2391, %v4214, %v4094
        %v4232 = vsel %vm2391, %v4216, %v4096
        %v4241 = vunpack.c.l.b16 %v4218
        %v4242 = vunpack.c.l.b16 %v4220
        %v4243 = vunpack.c.l.b16 %v4222
        %v4244 = vunpack.c.l.b16 %v4224
        %v4245 = vunpack.c.l.b16 %v4226
        %v4246 = vunpack.c.l.b16 %v4228
        %v4247 = vunpack.c.l.b16 %v4230
        %v4248 = vunpack.c.l.b16 %v4232
        %v4249 = vpack.c.b16 %v4242, %v4241
        %v4250 = vpack.c.b16 %v4244, %v4243
        %v4251 = vpack.c.b16 %v4246, %v4245
        %v4252 = vpack.c.b16 %v4248, %v4247
        %v4262 = vunpack.c.l.b16 %v3488
        %v4263 = vunpack.c.l.b16 %v3489
        %v4264 = vunpack.c.l.b16 %v3490
        %v4265 = vunpack.c.l.b16 %v3491
        %v4266 = vunpack.c.l.b16 %v3492
        %v4267 = vunpack.c.l.b16 %v3493
        %v4268 = vunpack.c.l.b16 %v3494
        %v4269 = vunpack.c.l.b16 %v3495
        %v4270 = vunpack.c.l.b16 %v3496
        %v4271 = vpack.c.b16 %v4263, %v4262
        %v4272 = vpack.c.b16 %v4265, %v4264
        %v4273 = vpack.c.b16 %v4267, %v4266
        %v4274 = vpack.c.b16 %v4269, %v4268
        %v4275 = vpack.c.b16 %v4270, %v4270
        %v4281 = vsel %vm2455, %v4249, 0
        %v4284 = vsel %vm2455, %v4250, 0
        %v4287 = vsel %vm2455, %v4251, 0
        %v4290 = vsel %vm2455, %v4252, 0
        %v4293 = vsel %vm2468, %v4275, 0
        %4295 = vmatprep.subr.bf16.mxu0 0
        %4296 = vmatpush1.bf16.msra.mxu0 %v4271
        %4297 = vmatprep.subr.bf16.mxu0 0
        %4298 = vmatpush1.bf16.msra.mxu0 %v4272
        %4299 = vmatprep.subr.bf16.mxu0 0
        %4300 = vmatpush1.bf16.msra.mxu0 %v4273
        %4301 = vmatprep.subr.bf16.mxu0 0
        %4302 = vmatpush1.bf16.msra.mxu0 %v4274
        %4303 = vmatprep.subr.bf16.mxu0 0
        %4304 = vmatpush1.bf16.msra.mxu0 %v4293
        %4305 = vmatprep.subr.bf16.mxu0 0
        %4306 = vmatpush1.bf16.msra.mxu0 0
        %4307 = vmatprep.subr.bf16.mxu0 0
        %4308 = vmatpush1.bf16.msra.mxu0 0
        %4309 = vmatprep.subr.bf16.mxu0 0
        %4310 = vmatpush1.bf16.msra.mxu0 0
        %4311 = vmatprep.subr.bf16.mxu0 0
        %4312 = vmatpush1.bf16.msra.mxu0 0
        %4313 = vmatprep.subr.bf16.mxu0 0
        %4314 = vmatpush1.bf16.msra.mxu0 0
        %4315 = vmatprep.subr.bf16.mxu0 0
        %4316 = vmatpush1.bf16.msra.mxu0 0
        %4317 = vmatprep.subr.bf16.mxu0 0
        %4318 = vmatpush1.bf16.msra.mxu0 0
        %4319 = vmatprep.subr.bf16.mxu0 0
        %4320 = vmatpush1.bf16.msra.mxu0 0
        %4321 = vmatprep.subr.bf16.mxu0 0
        %4322 = vmatpush1.bf16.msra.mxu0 0
        %4323 = vmatprep.subr.bf16.mxu0 0
        %4324 = vmatpush1.bf16.msra.mxu0 0
        %4325 = vmatprep.subr.bf16.mxu0 0
        %4326 = vmatpush1.bf16.msra.mxu0 0
        %4327 = vmatprep.mubr.bf16.mxu0 0
        %4328 = vmatmul.mubr.bf16.gmra.mrb[0].mxu0 %v4281
        %v4329 = vpop.f32.mrb[0].mxu0
        %v4330 = vadd.f32 0.0, %v4329
        %v4331 = vpop.f32.mrb[0].mxu0
        %v4332 = vpop.f32.mrb[0].mxu0
        %v4333 = vadd.f32 0.0, %v4332
        %v4334 = vpop.f32.mrb[0].mxu0
        %4335 = vmatprep.mubr.bf16.mxu0 0
        %4336 = vmatmul.mubr.bf16.gmra.mrb[0].mxu0 %v4284
        %v4337 = vpop.f32.mrb[0].mxu0
        %v4338 = vadd.f32 0.0, %v4337
        %v4339 = vpop.f32.mrb[0].mxu0
        %v4340 = vpop.f32.mrb[0].mxu0
        %v4341 = vadd.f32 0.0, %v4340
        %v4342 = vpop.f32.mrb[0].mxu0
        %4343 = vmatprep.mubr.bf16.mxu0 0
        %4344 = vmatmul.mubr.bf16.gmra.mrb[0].mxu0 %v4287
        %v4345 = vpop.f32.mrb[0].mxu0
        %v4346 = vadd.f32 0.0, %v4345
        %v4347 = vpop.f32.mrb[0].mxu0
        %v4348 = vpop.f32.mrb[0].mxu0
        %v4349 = vadd.f32 0.0, %v4348
        %v4350 = vpop.f32.mrb[0].mxu0
        %4351 = vmatprep.mubr.bf16.mxu0 0
        %4352 = vmatmul.mubr.bf16.gmra.mrb[0].mxu0 %v4290
        %v4353 = vpop.f32.mrb[0].mxu0
        %v4354 = vadd.f32 0.0, %v4353
        %v4355 = vpop.f32.mrb[0].mxu0
        %v4356 = vpop.f32.mrb[0].mxu0
        %v4357 = vadd.f32 0.0, %v4356
        %v4358 = vpop.f32.mrb[0].mxu0
        %4359 = vdwg.mxu0
        %v4360 = vadd.f32 %v2537, %v4330
        %v4361 = vadd.f32 %v2538, %v4333
        %v4362 = vadd.f32 %v2539, %v4338
        %v4363 = vadd.f32 %v2540, %v4341
        %v4364 = vadd.f32 %v2541, %v4346
        %v4365 = vadd.f32 %v2542, %v4349
        %v4366 = vadd.f32 %v2543, %v4354
        %v4367 = vadd.f32 %v2544, %v4357
        %v4368 = vpack.c.bf16 %v4360, %v4360
        %v4369 = vpack.c.bf16 %v4361, %v4361
        %v4370 = vpack.c.bf16 %v4362, %v4362
        %v4371 = vpack.c.bf16 %v4363, %v4363
        %v4372 = vpack.c.bf16 %v4364, %v4364
        %v4373 = vpack.c.bf16 %v4365, %v4365
        %v4374 = vpack.c.bf16 %v4366, %v4366
        %v4375 = vpack.c.bf16 %v4367, %v4367
        %4376 = vst.msk [vmem:[%s340] sm:$0xf] %vm462, %v4368
        %4377 = vst.msk [vmem:[%s340 + $0x4] sm:$0xf] %vm462, %v4369
        %4378 = vst.msk [vmem:[%s340 + $0x8] sm:$0xf] %vm462, %v4370
        %4379 = vst.msk [vmem:[%s340 + $0xc] sm:$0xf] %vm462, %v4371
        %4380 = vst.msk [vmem:[%s340 + $0x10] sm:$0xf] %vm462, %v4372
        %4381 = vst.msk [vmem:[%s340 + $0x14] sm:$0xf] %vm462, %v4373
        %4382 = vst.msk [vmem:[%s340 + $0x18] sm:$0xf] %vm462, %v4374
        %4383 = vst.msk [vmem:[%s340 + $0x1c] sm:$0xf] %vm462, %v4375
        %s4384 = sand.u32 %s230, 1
        %s4385 = scalar_lea.sflag [#allocation5], %s4384
        %s4386 = sand.u32 %s230, 1
        %s4387 = smul.addr %s4386, 32
        %s4388 = scalar_lea.vmem [#allocation4], %s4387
        // Predicated region
        $region57: #{shake_basic_unit_forward_nhwc.1} parent=55 // pred_check
          %p4389 = pneg %p240
        $region58: #{shake_basic_unit_forward_nhwc.1} parent=55 // pred_check_branch
          %4391 = sbr.rel (%p4389) target = $region60
        $region59: #{shake_basic_unit_forward_nhwc.1} parent=55 // pred_region
          %s4393 = ssub.s32 512, 512
          %4394 = vsyncadd %s4385, %s4393
          %s4395 = smul.addr %s23, 8
          %s4396 = smul.addr %s4395, 64
          %s4397 = scalar_lea.hbm %s9, %s4396
          %s4398 = sshll.u32 %s4388, 4
          %s4399 = int_to_ptr.vmem [resolvable:$true] %s4398
          %4404 = dma.vmem_to_hbm [thread:$0]  %s4399, 512, %s4397, %s4385, 64, 64, 4
        $region60: #{shake_basic_unit_forward_nhwc.1} parent=55 // pred_fallthru
          _
      $region56: #{shake_basic_unit_forward_nhwc.1} parent=5 // pred_fallthru
        _
      %p4405 = scmp.le.s32.totalorder 2, %s18
      // Predicated region
      $region61: #{shake_basic_unit_forward_nhwc.1} parent=5 // pred_check
        %p4406 = pneg %p4405
      $region62: #{shake_basic_unit_forward_nhwc.1} parent=5 // pred_check_branch
        %4408 = sbr.rel (%p4406) target = $region64
      $region63: #{shake_basic_unit_forward_nhwc.1} parent=5 // pred_region
        %s4409 = ssub.s32 %s18, 2
        // Predicated region
        $region65: #{shake_basic_unit_forward_nhwc.1} parent=63 // pred_check
          %p4410 = pneg %p246
        $region66: #{shake_basic_unit_forward_nhwc.1} parent=63 // pred_check_branch
          %4412 = sbr.rel (%p4410) target = $region68
        $region67: #{shake_basic_unit_forward_nhwc.1} parent=63 // pred_region
          %s4413 = sand.u32 %s231, 1
          %s4414 = scalar_lea.sflag [#allocation5], %s4413
          %s4415 = sand.u32 %s231, 1
          %s4416 = smul.addr %s4415, 32
          %s4417 = scalar_lea.vmem [#allocation4], %s4416
          %4418 = dma.done %s4414, 512
        $region68: #{shake_basic_unit_forward_nhwc.1} parent=63 // pred_fallthru
          _
      $region64: #{shake_basic_unit_forward_nhwc.1} parent=5 // pred_fallthru
        _
    $region6: #{shake_basic_unit_forward_nhwc.1} parent=1 // loop_footer
      %s22 = sadd.s32 1, %s18
    $region7: #{shake_basic_unit_forward_nhwc.1} parent=1 // loop_footer_branch
      %17 = sbr.rel target = $region3
    $region8: #{shake_basic_unit_forward_nhwc.1} parent=1 // loop_exit
      _
    %4419 = vsyncpa [#allocation5], 1
    %s4420 = scalar_lea.sflag [#allocation5], 1
    %4421 = vsyncpa %s4420, 1

</llo_original>
